<compile_context>
chip_gen: v6e
topology: v6e:2x2x1
jax: 0.10.0
libtpu: 0.0.40
codegen_flags: <defaults>
</compile_context>

<pallas_src>
import functools
import math

import jax
import jax.numpy as jnp
from jax.experimental import pallas as pl
from jax.experimental.pallas import tpu as pltpu

ENCODING_DIM = 35
LANE = 128


def _round_up(x, m):
    return (x + m - 1) // m * m


def _leaky_relu(x, slope=0.01):
    return jnp.where(x > 0, x, slope * x)


def _mt_autoencoder_kernel(
    x_ref,
    we1_ref, be1_ref,
    we2_ref, be2_ref,
    we3_ref, be3_ref,        # encoder (we3/be3 zero-padded enc_dim -> 128)
    wd1_ref, bd1_ref,        # decoder L1 (rows zero-padded enc_dim -> 128)
    wd2_ref, bd2_ref,        # decoder L2 (64 -> 128, no K padding)
    wd3_ref, bd3_ref,        # decoder L3 (cols zero-padded input_dim -> out_pad)
    wp_ref, bp_ref,          # predictors lane-placed at cols input_dim / input_dim+1
    out_ref,                 # [TILE_B, out_pad] f32 merged slab
    *, input_dim,
):
    f32 = jnp.float32
    bf16 = jnp.bfloat16

    x = x_ref[...]  # bf16 [TILE_B, input_dim]

    # Encoder: input_dim -> 128 -> 64 -> enc_pad(128), LeakyReLU(0.01) each.
    h = _leaky_relu(jnp.dot(x, we1_ref[...], preferred_element_type=f32) + be1_ref[...])
    h = _leaky_relu(jnp.dot(h.astype(bf16), we2_ref[...], preferred_element_type=f32) + be2_ref[...])
    enc = _leaky_relu(jnp.dot(h.astype(bf16), we3_ref[...], preferred_element_type=f32) + be3_ref[...])
    # Padded enc lanes (>= encoding_dim) are exactly 0 (zero weights + zero bias).
    enc_b = enc.astype(bf16)

    # Predictors: one lane-dense matmul whose only non-zero output columns are
    # input_dim (pred1) and input_dim+1 (pred2); Linear, no activation.
    pred = jnp.dot(enc_b, wp_ref[...], preferred_element_type=f32) + bp_ref[...]

    # Decoder: enc_pad -> 64 -> 128 -> out_pad; LeakyReLU, LeakyReLU, Sigmoid.
    d = _leaky_relu(jnp.dot(enc_b, wd1_ref[...], preferred_element_type=f32) + bd1_ref[...])
    d = _leaky_relu(jnp.dot(d.astype(bf16), wd2_ref[...], preferred_element_type=f32) + bd2_ref[...])
    d = jnp.dot(d.astype(bf16), wd3_ref[...], preferred_element_type=f32) + bd3_ref[...]
    dec = jax.nn.sigmoid(d)  # TODO(synk): padded lanes also hit the EUP here (v5e micro-opt).

    # Merge: decoded in lanes [0, input_dim), predictors in lanes input_dim /
    # input_dim+1, zeros elsewhere.  Single lane-dense f32 store.
    lane = jax.lax.broadcasted_iota(jnp.int32, dec.shape, 1)
    out_ref[...] = jnp.where(lane < input_dim, dec, pred)


def make_params(key, input_dim, encoding_dim, dtype=jnp.float32):
    """Deterministic synthetic parameters (shapes match the PyTorch module)."""
    dims = {
        "we1": (input_dim, 128), "be1": (1, 128),
        "we2": (128, 64),        "be2": (1, 64),
        "we3": (64, encoding_dim), "be3": (1, encoding_dim),
        "wd1": (encoding_dim, 64), "bd1": (1, 64),
        "wd2": (64, 128),        "bd2": (1, 128),
        "wd3": (128, input_dim), "bd3": (1, input_dim),
        "wp1": (encoding_dim, 1), "bp1": (1, 1),
        "wp2": (encoding_dim, 1), "bp2": (1, 1),
    }
    params = {}
    keys = jax.random.split(key, len(dims))
    for k, (name, shape) in zip(keys, dims.items()):
        fan_in = shape[0] if name.startswith("w") else max(shape[1], 1)
        bound = 1.0 / jnp.sqrt(jnp.float32(fan_in))
        params[name] = jax.random.uniform(k, shape, dtype, -bound, bound)
    return params


def prepare_kernel_params(p, input_dim, encoding_dim):
    """Pad / place / cast the reference params into the layout the kernel expects."""
    enc_pad = LANE                              # 35 -> 128
    out_pad = _round_up(input_dim + 2, LANE)    # decoded lanes + 2 predictor lanes
    bf16, f32 = jnp.bfloat16, jnp.float32

    we1 = p["we1"].astype(bf16)
    be1 = p["be1"].astype(f32)
    we2 = p["we2"].astype(bf16)
    be2 = p["be2"].astype(f32)
    we3 = jnp.zeros((64, enc_pad), f32).at[:, :encoding_dim].set(p["we3"]).astype(bf16)
    be3 = jnp.zeros((1, enc_pad), f32).at[:, :encoding_dim].set(p["be3"])

    wd1 = jnp.zeros((enc_pad, 64), f32).at[:encoding_dim, :].set(p["wd1"]).astype(bf16)
    bd1 = p["bd1"].astype(f32)
    wd2 = p["wd2"].astype(bf16)                 # (64, 128), no K padding needed
    bd2 = p["bd2"].astype(f32)
    wd3 = jnp.zeros((128, out_pad), f32).at[:, :input_dim].set(p["wd3"]).astype(bf16)
    bd3 = jnp.zeros((1, out_pad), f32).at[:, :input_dim].set(p["bd3"])

    # Predictor weights lane-placed at columns input_dim / input_dim + 1.
    wp = jnp.zeros((enc_pad, out_pad), f32)
    wp = wp.at[:encoding_dim, input_dim:input_dim + 1].set(p["wp1"])
    wp = wp.at[:encoding_dim, input_dim + 1:input_dim + 2].set(p["wp2"])
    wp = wp.astype(bf16)
    bp = jnp.zeros((1, out_pad), f32)
    bp = bp.at[:, input_dim:input_dim + 1].set(p["bp1"])
    bp = bp.at[:, input_dim + 1:input_dim + 2].set(p["bp2"])

    return (we1, be1, we2, be2, we3, be3, wd1, bd1, wd2, bd2, wd3, bd3, wp, bp)


@functools.partial(jax.jit, static_argnames=("input_dim", "tile_b"))
def multitask_autoencoder(x, kernel_params, *, input_dim, tile_b=1024):
    batch = x.shape[0]
    out_pad = _round_up(input_dim + 2, LANE)

    # Small batches: pad only to a sublane multiple and run one grid step;
    # large batches: tile_b rows per step.
    b_pad8 = _round_up(batch, 8)
    if b_pad8 <= tile_b:
        tile, b_pad = b_pad8, b_pad8
    else:
        tile, b_pad = tile_b, _round_up(batch, tile_b)

    x_p = x if b_pad == batch else jnp.pad(x, ((0, b_pad - batch), (0, 0)))
    x_p = x_p.astype(jnp.bfloat16)

    grid = (b_pad // tile,)
    # Weights stay resident: same block index every grid step -> no re-DMA.
    weight_specs = [pl.BlockSpec(w.shape, lambda i: (0, 0)) for w in kernel_params]
    in_specs = [pl.BlockSpec((tile, input_dim), lambda i: (i, 0))] + weight_specs
    out_specs = pl.BlockSpec((tile, out_pad), lambda i: (i, 0))
    out_shape = jax.ShapeDtypeStruct((b_pad, out_pad), jnp.float32)

    flops = 2 * b_pad * (
        input_dim * 128 + 128 * 64 + 64 * LANE            # encoder
        + LANE * 64 + 64 * 128 + 128 * out_pad            # decoder
        + LANE * out_pad                                  # predictors
    )
    bytes_accessed = (
        b_pad * input_dim * 2
        + sum(math.prod(w.shape) * w.dtype.itemsize for w in kernel_params)
        + b_pad * out_pad * 4
    )
    cost = pl.CostEstimate(
        flops=flops, transcendentals=b_pad * out_pad, bytes_accessed=bytes_accessed
    )

    out_slab = pl.pallas_call(
        functools.partial(_mt_autoencoder_kernel, input_dim=input_dim),
        out_shape=out_shape,
        grid=grid,
        in_specs=in_specs,
        out_specs=out_specs,
        compiler_params=pltpu.CompilerParams(dimension_semantics=("parallel",)),
        cost_estimate=cost,
    )(x_p, *kernel_params)

    decoded = out_slab[:batch, :input_dim]
    pred1 = out_slab[:batch, input_dim:input_dim + 1]
    pred2 = out_slab[:batch, input_dim + 1:input_dim + 2]
    return decoded, pred1, pred2


def ref_forward(x, p):
    """Pure-JAX reference (bf16-rounded weights/input, f32 math) for checking."""
    b = lambda w: w.astype(jnp.bfloat16).astype(jnp.float32)
    lrelu = lambda v: jnp.where(v > 0, v, 0.01 * v)
    xr = x.astype(jnp.bfloat16).astype(jnp.float32)
    h = lrelu(xr @ b(p["we1"]) + p["be1"])
    h = lrelu(h @ b(p["we2"]) + p["be2"])
    enc = lrelu(h @ b(p["we3"]) + p["be3"])
    d = lrelu(enc @ b(p["wd1"]) + p["bd1"])
    d = lrelu(d @ b(p["wd2"]) + p["bd2"])
    dec = jax.nn.sigmoid(d @ b(p["wd3"]) + p["bd3"])
    return dec, enc @ b(p["wp1"]) + p["bp1"], enc @ b(p["wp2"]) + p["bp2"]


if __name__ == "__main__":
    batch = 300           # exercises the small-batch path (pad 300 -> 304, 1 step)
    input_dim = 32
    encoding_dim = ENCODING_DIM

    key = jax.random.PRNGKey(0)
    kx, kp = jax.random.split(key)
    x = jax.random.uniform(kx, (batch, input_dim), jnp.float32)

    params = make_params(kp, input_dim, encoding_dim)
    kernel_params = prepare_kernel_params(params, input_dim, encoding_dim)

    decoded, pred1, pred2 = multitask_autoencoder(
        x, kernel_params, input_dim=input_dim, tile_b=1024
    )
    jax.block_until_ready((decoded, pred1, pred2))

    assert decoded.shape == (batch, input_dim)
    assert pred1.shape == (batch, 1) and pred2.shape == (batch, 1)

    rdec, rp1, rp2 = ref_forward(x, params)
    # bf16 MXU operands -> loosened tolerance vs an f32 PyTorch reference.
    assert jnp.allclose(decoded, rdec, atol=2e-2, rtol=2e-2), "decoded mismatch"
    assert jnp.allclose(pred1, rp1, atol=2e-2, rtol=2e-2), "predicted1 mismatch"
    assert jnp.allclose(pred2, rp2, atol=2e-2, rtol=2e-2), "predicted2 mismatch"

    print("KERNEL_OK")
</pallas_src>

<mosaic_0001>
module attributes {stable_mosaic.version = 11 : i64} {
  func.func @_mt_autoencoder_kernel(%arg0: i32, %arg1: memref<304x32xbf16, #tpu.memory_space<vmem>>, %arg2: memref<32x128xbf16, #tpu.memory_space<vmem>>, %arg3: memref<1x128xf32, #tpu.memory_space<vmem>>, %arg4: memref<128x64xbf16, #tpu.memory_space<vmem>>, %arg5: memref<1x64xf32, #tpu.memory_space<vmem>>, %arg6: memref<64x128xbf16, #tpu.memory_space<vmem>>, %arg7: memref<1x128xf32, #tpu.memory_space<vmem>>, %arg8: memref<128x64xbf16, #tpu.memory_space<vmem>>, %arg9: memref<1x64xf32, #tpu.memory_space<vmem>>, %arg10: memref<64x128xbf16, #tpu.memory_space<vmem>>, %arg11: memref<1x128xf32, #tpu.memory_space<vmem>>, %arg12: memref<128x128xbf16, #tpu.memory_space<vmem>>, %arg13: memref<1x128xf32, #tpu.memory_space<vmem>>, %arg14: memref<128x128xbf16, #tpu.memory_space<vmem>>, %arg15: memref<1x128xf32, #tpu.memory_space<vmem>>, %arg16: memref<304x128xf32, #tpu.memory_space<vmem>>) attributes {dimension_semantics = [#tpu.dimension_semantics<parallel>], iteration_bounds = array<i64: 1>, scalar_prefetch = 0 : i64, scratch_operands = 0 : i64, tpu.core_type = #tpu.core_type<tc>, window_params = [{transform_indices = @transform_0, window_bounds = array<i64: 304, 32>}, {pipeline_mode = #tpu.pipeline_mode<synchronous>, transform_indices = @transform_1, window_bounds = array<i64: 32, 128>}, {pipeline_mode = #tpu.pipeline_mode<synchronous>, transform_indices = @transform_2, window_bounds = array<i64: 1, 128>}, {pipeline_mode = #tpu.pipeline_mode<synchronous>, transform_indices = @transform_3, window_bounds = array<i64: 128, 64>}, {pipeline_mode = #tpu.pipeline_mode<synchronous>, transform_indices = @transform_4, window_bounds = array<i64: 1, 64>}, {pipeline_mode = #tpu.pipeline_mode<synchronous>, transform_indices = @transform_5, window_bounds = array<i64: 64, 128>}, {pipeline_mode = #tpu.pipeline_mode<synchronous>, transform_indices = @transform_6, window_bounds = array<i64: 1, 128>}, {pipeline_mode = #tpu.pipeline_mode<synchronous>, transform_indices = @transform_7, window_bounds = array<i64: 128, 64>}, {pipeline_mode = #tpu.pipeline_mode<synchronous>, transform_indices = @transform_8, window_bounds = array<i64: 1, 64>}, {pipeline_mode = #tpu.pipeline_mode<synchronous>, transform_indices = @transform_9, window_bounds = array<i64: 64, 128>}, {pipeline_mode = #tpu.pipeline_mode<synchronous>, transform_indices = @transform_10, window_bounds = array<i64: 1, 128>}, {pipeline_mode = #tpu.pipeline_mode<synchronous>, transform_indices = @transform_11, window_bounds = array<i64: 128, 128>}, {pipeline_mode = #tpu.pipeline_mode<synchronous>, transform_indices = @transform_12, window_bounds = array<i64: 1, 128>}, {pipeline_mode = #tpu.pipeline_mode<synchronous>, transform_indices = @transform_13, window_bounds = array<i64: 128, 128>}, {pipeline_mode = #tpu.pipeline_mode<synchronous>, transform_indices = @transform_14, window_bounds = array<i64: 1, 128>}, {transform_indices = @transform_15, window_bounds = array<i64: 304, 128>}]} {
    %c0 = arith.constant 0 : index
    %c0_0 = arith.constant 0 : index
    %0 = vector.load %arg1[%c0, %c0_0] : memref<304x32xbf16, #tpu.memory_space<vmem>>, vector<304x32xbf16>
    %c0_1 = arith.constant 0 : index
    %c0_2 = arith.constant 0 : index
    %1 = vector.load %arg2[%c0_1, %c0_2] : memref<32x128xbf16, #tpu.memory_space<vmem>>, vector<32x128xbf16>
    %cst = arith.constant dense<0.000000e+00> : vector<304x128xf32>
    %2 = tpu.matmul %0, %1, %cst {dimension_numbers = #tpu.dot_dimension_numbers<[1], [0], [0], [1], [0, 0, 1, 1], [], []>} : vector<304x32xbf16>, vector<32x128xbf16>, vector<304x128xf32> -> vector<304x128xf32>
    %c0_3 = arith.constant 0 : index
    %c0_4 = arith.constant 0 : index
    %3 = vector.load %arg3[%c0_3, %c0_4] : memref<1x128xf32, #tpu.memory_space<vmem>>, vector<1x128xf32>
    %4 = vector.broadcast %3 : vector<1x128xf32> to vector<304x128xf32>
    %5 = arith.addf %2, %4 : vector<304x128xf32>
    %cst_5 = arith.constant 0.000000e+00 : f32
    %6 = vector.broadcast %cst_5 : f32 to vector<304x128xf32>
    %7 = arith.cmpf ogt, %5, %6 : vector<304x128xf32>
    %cst_6 = arith.constant 0.00999999977 : f32
    %8 = vector.broadcast %cst_6 : f32 to vector<304x128xf32>
    %9 = arith.mulf %8, %5 : vector<304x128xf32>
    %10 = arith.select %7, %5, %9 : vector<304x128xi1>, vector<304x128xf32>
    %11 = arith.truncf %10 : vector<304x128xf32> to vector<304x128xbf16>
    %c0_7 = arith.constant 0 : index
    %c0_8 = arith.constant 0 : index
    %12 = vector.load %arg4[%c0_7, %c0_8] : memref<128x64xbf16, #tpu.memory_space<vmem>>, vector<128x64xbf16>
    %cst_9 = arith.constant dense<0.000000e+00> : vector<304x64xf32>
    %13 = tpu.matmul %11, %12, %cst_9 {dimension_numbers = #tpu.dot_dimension_numbers<[1], [0], [0], [1], [0, 0, 1, 1], [], []>} : vector<304x128xbf16>, vector<128x64xbf16>, vector<304x64xf32> -> vector<304x64xf32>
    %c0_10 = arith.constant 0 : index
    %c0_11 = arith.constant 0 : index
    %14 = vector.load %arg5[%c0_10, %c0_11] : memref<1x64xf32, #tpu.memory_space<vmem>>, vector<1x64xf32>
    %15 = vector.broadcast %14 : vector<1x64xf32> to vector<304x64xf32>
    %16 = arith.addf %13, %15 : vector<304x64xf32>
    %cst_12 = arith.constant 0.000000e+00 : f32
    %17 = vector.broadcast %cst_12 : f32 to vector<304x64xf32>
    %18 = arith.cmpf ogt, %16, %17 : vector<304x64xf32>
    %cst_13 = arith.constant 0.00999999977 : f32
    %19 = vector.broadcast %cst_13 : f32 to vector<304x64xf32>
    %20 = arith.mulf %19, %16 : vector<304x64xf32>
    %21 = arith.select %18, %16, %20 : vector<304x64xi1>, vector<304x64xf32>
    %22 = arith.truncf %21 : vector<304x64xf32> to vector<304x64xbf16>
    %c0_14 = arith.constant 0 : index
    %c0_15 = arith.constant 0 : index
    %23 = vector.load %arg6[%c0_14, %c0_15] : memref<64x128xbf16, #tpu.memory_space<vmem>>, vector<64x128xbf16>
    %cst_16 = arith.constant dense<0.000000e+00> : vector<304x128xf32>
    %24 = tpu.matmul %22, %23, %cst_16 {dimension_numbers = #tpu.dot_dimension_numbers<[1], [0], [0], [1], [0, 0, 1, 1], [], []>} : vector<304x64xbf16>, vector<64x128xbf16>, vector<304x128xf32> -> vector<304x128xf32>
    %c0_17 = arith.constant 0 : index
    %c0_18 = arith.constant 0 : index
    %25 = vector.load %arg7[%c0_17, %c0_18] : memref<1x128xf32, #tpu.memory_space<vmem>>, vector<1x128xf32>
    %26 = vector.broadcast %25 : vector<1x128xf32> to vector<304x128xf32>
    %27 = arith.addf %24, %26 : vector<304x128xf32>
    %cst_19 = arith.constant 0.000000e+00 : f32
    %28 = vector.broadcast %cst_19 : f32 to vector<304x128xf32>
    %29 = arith.cmpf ogt, %27, %28 : vector<304x128xf32>
    %cst_20 = arith.constant 0.00999999977 : f32
    %30 = vector.broadcast %cst_20 : f32 to vector<304x128xf32>
    %31 = arith.mulf %30, %27 : vector<304x128xf32>
    %32 = arith.select %29, %27, %31 : vector<304x128xi1>, vector<304x128xf32>
    %33 = arith.truncf %32 : vector<304x128xf32> to vector<304x128xbf16>
    %c0_21 = arith.constant 0 : index
    %c0_22 = arith.constant 0 : index
    %34 = vector.load %arg14[%c0_21, %c0_22] : memref<128x128xbf16, #tpu.memory_space<vmem>>, vector<128x128xbf16>
    %cst_23 = arith.constant dense<0.000000e+00> : vector<304x128xf32>
    %35 = tpu.matmul %33, %34, %cst_23 {dimension_numbers = #tpu.dot_dimension_numbers<[1], [0], [0], [1], [0, 0, 1, 1], [], []>} : vector<304x128xbf16>, vector<128x128xbf16>, vector<304x128xf32> -> vector<304x128xf32>
    %c0_24 = arith.constant 0 : index
    %c0_25 = arith.constant 0 : index
    %36 = vector.load %arg15[%c0_24, %c0_25] : memref<1x128xf32, #tpu.memory_space<vmem>>, vector<1x128xf32>
    %37 = vector.broadcast %36 : vector<1x128xf32> to vector<304x128xf32>
    %38 = arith.addf %35, %37 : vector<304x128xf32>
    %c0_26 = arith.constant 0 : index
    %c0_27 = arith.constant 0 : index
    %39 = vector.load %arg8[%c0_26, %c0_27] : memref<128x64xbf16, #tpu.memory_space<vmem>>, vector<128x64xbf16>
    %cst_28 = arith.constant dense<0.000000e+00> : vector<304x64xf32>
    %40 = tpu.matmul %33, %39, %cst_28 {dimension_numbers = #tpu.dot_dimension_numbers<[1], [0], [0], [1], [0, 0, 1, 1], [], []>} : vector<304x128xbf16>, vector<128x64xbf16>, vector<304x64xf32> -> vector<304x64xf32>
    %c0_29 = arith.constant 0 : index
    %c0_30 = arith.constant 0 : index
    %41 = vector.load %arg9[%c0_29, %c0_30] : memref<1x64xf32, #tpu.memory_space<vmem>>, vector<1x64xf32>
    %42 = vector.broadcast %41 : vector<1x64xf32> to vector<304x64xf32>
    %43 = arith.addf %40, %42 : vector<304x64xf32>
    %cst_31 = arith.constant 0.000000e+00 : f32
    %44 = vector.broadcast %cst_31 : f32 to vector<304x64xf32>
    %45 = arith.cmpf ogt, %43, %44 : vector<304x64xf32>
    %cst_32 = arith.constant 0.00999999977 : f32
    %46 = vector.broadcast %cst_32 : f32 to vector<304x64xf32>
    %47 = arith.mulf %46, %43 : vector<304x64xf32>
    %48 = arith.select %45, %43, %47 : vector<304x64xi1>, vector<304x64xf32>
    %49 = arith.truncf %48 : vector<304x64xf32> to vector<304x64xbf16>
    %c0_33 = arith.constant 0 : index
    %c0_34 = arith.constant 0 : index
    %50 = vector.load %arg10[%c0_33, %c0_34] : memref<64x128xbf16, #tpu.memory_space<vmem>>, vector<64x128xbf16>
    %cst_35 = arith.constant dense<0.000000e+00> : vector<304x128xf32>
    %51 = tpu.matmul %49, %50, %cst_35 {dimension_numbers = #tpu.dot_dimension_numbers<[1], [0], [0], [1], [0, 0, 1, 1], [], []>} : vector<304x64xbf16>, vector<64x128xbf16>, vector<304x128xf32> -> vector<304x128xf32>
    %c0_36 = arith.constant 0 : index
    %c0_37 = arith.constant 0 : index
    %52 = vector.load %arg11[%c0_36, %c0_37] : memref<1x128xf32, #tpu.memory_space<vmem>>, vector<1x128xf32>
    %53 = vector.broadcast %52 : vector<1x128xf32> to vector<304x128xf32>
    %54 = arith.addf %51, %53 : vector<304x128xf32>
    %cst_38 = arith.constant 0.000000e+00 : f32
    %55 = vector.broadcast %cst_38 : f32 to vector<304x128xf32>
    %56 = arith.cmpf ogt, %54, %55 : vector<304x128xf32>
    %cst_39 = arith.constant 0.00999999977 : f32
    %57 = vector.broadcast %cst_39 : f32 to vector<304x128xf32>
    %58 = arith.mulf %57, %54 : vector<304x128xf32>
    %59 = arith.select %56, %54, %58 : vector<304x128xi1>, vector<304x128xf32>
    %60 = arith.truncf %59 : vector<304x128xf32> to vector<304x128xbf16>
    %c0_40 = arith.constant 0 : index
    %c0_41 = arith.constant 0 : index
    %61 = vector.load %arg12[%c0_40, %c0_41] : memref<128x128xbf16, #tpu.memory_space<vmem>>, vector<128x128xbf16>
    %cst_42 = arith.constant dense<0.000000e+00> : vector<304x128xf32>
    %62 = tpu.matmul %60, %61, %cst_42 {dimension_numbers = #tpu.dot_dimension_numbers<[1], [0], [0], [1], [0, 0, 1, 1], [], []>} : vector<304x128xbf16>, vector<128x128xbf16>, vector<304x128xf32> -> vector<304x128xf32>
    %c0_43 = arith.constant 0 : index
    %c0_44 = arith.constant 0 : index
    %63 = vector.load %arg13[%c0_43, %c0_44] : memref<1x128xf32, #tpu.memory_space<vmem>>, vector<1x128xf32>
    %64 = vector.broadcast %63 : vector<1x128xf32> to vector<304x128xf32>
    %65 = arith.addf %62, %64 : vector<304x128xf32>
    %66 = arith.negf %65 : vector<304x128xf32>
    %67 = math.exp %66 : vector<304x128xf32>
    %cst_45 = arith.constant 1.000000e+00 : f32
    %68 = vector.broadcast %cst_45 : f32 to vector<304x128xf32>
    %69 = arith.addf %68, %67 : vector<304x128xf32>
    %70 = arith.divf %68, %69 : vector<304x128xf32>
    %71 = tpu.iota {dimensions = array<i32: 1>} : vector<304x128xi32>
    %c32_i32 = arith.constant 32 : i32
    %72 = vector.broadcast %c32_i32 : i32 to vector<304x128xi32>
    %73 = arith.cmpi slt, %71, %72 : vector<304x128xi32>
    %74 = arith.select %73, %70, %38 : vector<304x128xi1>, vector<304x128xf32>
    %c0_46 = arith.constant 0 : index
    %c0_47 = arith.constant 0 : index
    %75 = vector.load %arg16[%c0_46, %c0_47] : memref<304x128xf32, #tpu.memory_space<vmem>>, vector<304x128xf32>
    tpu.vector_store %arg16[%c0_46, %c0_47], %74 {strides = array<i32>} : memref<304x128xf32, #tpu.memory_space<vmem>>, vector<304x128xf32>,
    return
  }
  func.func @transform_0(%arg0: i32) -> (i32, i32) {
    %c0_i32 = arith.constant 0 : i32
    %c0_i32_0 = arith.constant 0 : i32
    return %arg0, %c0_i32 : i32, i32
  }
  func.func @transform_1(%arg0: i32) -> (i32, i32) {
    %c0_i32 = arith.constant 0 : i32
    %c0_i32_0 = arith.constant 0 : i32
    %c0_i32_1 = arith.constant 0 : i32
    return %c0_i32, %c0_i32_0 : i32, i32
  }
  func.func @transform_2(%arg0: i32) -> (i32, i32) {
    %c0_i32 = arith.constant 0 : i32
    %c0_i32_0 = arith.constant 0 : i32
    %c0_i32_1 = arith.constant 0 : i32
    return %c0_i32, %c0_i32_0 : i32, i32
  }
  func.func @transform_3(%arg0: i32) -> (i32, i32) {
    %c0_i32 = arith.constant 0 : i32
    %c0_i32_0 = arith.constant 0 : i32
    %c0_i32_1 = arith.constant 0 : i32
    return %c0_i32, %c0_i32_0 : i32, i32
  }
  func.func @transform_4(%arg0: i32) -> (i32, i32) {
    %c0_i32 = arith.constant 0 : i32
    %c0_i32_0 = arith.constant 0 : i32
    %c0_i32_1 = arith.constant 0 : i32
    return %c0_i32, %c0_i32_0 : i32, i32
  }
  func.func @transform_5(%arg0: i32) -> (i32, i32) {
    %c0_i32 = arith.constant 0 : i32
    %c0_i32_0 = arith.constant 0 : i32
    %c0_i32_1 = arith.constant 0 : i32
    return %c0_i32, %c0_i32_0 : i32, i32
  }
  func.func @transform_6(%arg0: i32) -> (i32, i32) {
    %c0_i32 = arith.constant 0 : i32
    %c0_i32_0 = arith.constant 0 : i32
    %c0_i32_1 = arith.constant 0 : i32
    return %c0_i32, %c0_i32_0 : i32, i32
  }
  func.func @transform_7(%arg0: i32) -> (i32, i32) {
    %c0_i32 = arith.constant 0 : i32
    %c0_i32_0 = arith.constant 0 : i32
    %c0_i32_1 = arith.constant 0 : i32
    return %c0_i32, %c0_i32_0 : i32, i32
  }
  func.func @transform_8(%arg0: i32) -> (i32, i32) {
    %c0_i32 = arith.constant 0 : i32
    %c0_i32_0 = arith.constant 0 : i32
    %c0_i32_1 = arith.constant 0 : i32
    return %c0_i32, %c0_i32_0 : i32, i32
  }
  func.func @transform_9(%arg0: i32) -> (i32, i32) {
    %c0_i32 = arith.constant 0 : i32
    %c0_i32_0 = arith.constant 0 : i32
    %c0_i32_1 = arith.constant 0 : i32
    return %c0_i32, %c0_i32_0 : i32, i32
  }
  func.func @transform_10(%arg0: i32) -> (i32, i32) {
    %c0_i32 = arith.constant 0 : i32
    %c0_i32_0 = arith.constant 0 : i32
    %c0_i32_1 = arith.constant 0 : i32
    return %c0_i32, %c0_i32_0 : i32, i32
  }
  func.func @transform_11(%arg0: i32) -> (i32, i32) {
    %c0_i32 = arith.constant 0 : i32
    %c0_i32_0 = arith.constant 0 : i32
    %c0_i32_1 = arith.constant 0 : i32
    return %c0_i32, %c0_i32_0 : i32, i32
  }
  func.func @transform_12(%arg0: i32) -> (i32, i32) {
    %c0_i32 = arith.constant 0 : i32
    %c0_i32_0 = arith.constant 0 : i32
    %c0_i32_1 = arith.constant 0 : i32
    return %c0_i32, %c0_i32_0 : i32, i32
  }
  func.func @transform_13(%arg0: i32) -> (i32, i32) {
    %c0_i32 = arith.constant 0 : i32
    %c0_i32_0 = arith.constant 0 : i32
    %c0_i32_1 = arith.constant 0 : i32
    return %c0_i32, %c0_i32_0 : i32, i32
  }
  func.func @transform_14(%arg0: i32) -> (i32, i32) {
    %c0_i32 = arith.constant 0 : i32
    %c0_i32_0 = arith.constant 0 : i32
    %c0_i32_1 = arith.constant 0 : i32
    return %c0_i32, %c0_i32_0 : i32, i32
  }
  func.func @transform_15(%arg0: i32) -> (i32, i32) {
    %c0_i32 = arith.constant 0 : i32
    %c0_i32_0 = arith.constant 0 : i32
    return %arg0, %c0_i32 : i32, i32
  }
}

</mosaic_0001>

<llo_original>
// kernel: multitask_autoencoder.1
$region0: #{multitask_autoencoder.1}
  #allocation0 [shape = 'u32[]', space=smem, size = 0x4, offset = 0x4, fixed_abs, tag = 'smem constant byte address 0x4 - core index']
  #allocation1 [shape = 'u32[144,128]{1,0:T(1,128)}', space=vmem, size = 0x12000, scoped, tag = 'internal scratch']
  %s0 = inlined_call_operand.vmem [shape: bf16[304,32], index: 0, kind: input, shape index: {}]
  %s1 = inlined_call_operand.vmem [shape: bf16[32,128], index: 1, kind: input, shape index: {}]
  %s2 = inlined_call_operand.vmem [shape: f32[1,128], index: 2, kind: input, shape index: {}]
  %s3 = inlined_call_operand.vmem [shape: bf16[128,64], index: 3, kind: input, shape index: {}]
  %s4 = inlined_call_operand.vmem [shape: f32[1,64], index: 4, kind: input, shape index: {}]
  %s5 = inlined_call_operand.vmem [shape: bf16[64,128], index: 5, kind: input, shape index: {}]
  %s6 = inlined_call_operand.vmem [shape: f32[1,128], index: 6, kind: input, shape index: {}]
  %s7 = inlined_call_operand.vmem [shape: bf16[128,64], index: 7, kind: input, shape index: {}]
  %s8 = inlined_call_operand.vmem [shape: f32[1,64], index: 8, kind: input, shape index: {}]
  %s9 = inlined_call_operand.vmem [shape: bf16[64,128], index: 9, kind: input, shape index: {}]
  %s10 = inlined_call_operand.vmem [shape: f32[1,128], index: 10, kind: input, shape index: {}]
  %s11 = inlined_call_operand.vmem [shape: bf16[128,128], index: 11, kind: input, shape index: {}]
  %s12 = inlined_call_operand.vmem [shape: f32[1,128], index: 12, kind: input, shape index: {}]
  %s13 = inlined_call_operand.vmem [shape: bf16[128,128], index: 13, kind: input, shape index: {}]
  %s14 = inlined_call_operand.vmem [shape: f32[1,128], index: 14, kind: input, shape index: {}]
  %s15 = inlined_call_operand.vmem [shape: f32[304,128], index: 15, kind: output, shape index: {}]
  %s16 = sld [smem:[#allocation0]]
  $region70: #{multitask_autoencoder.1} parent=0
    _
  %s18 = ssub.s32 1, %s16
  %s19 = scalar_select 0, %s18, %s16
  // Predicated region
  $region2: #{multitask_autoencoder.1} parent=0 // pred_check
    _
  $region3: #{multitask_autoencoder.1} parent=0 // pred_check_branch
    %21 = sbr.rel (0) target = $region5
  $region4: #{multitask_autoencoder.1} parent=0 // pred_region
    _
  $region5: #{multitask_autoencoder.1} parent=0 // pred_fallthru
    _
  // Predicated region
  $region6: #{multitask_autoencoder.1} parent=0 // pred_check
    _
  $region7: #{multitask_autoencoder.1} parent=0 // pred_check_branch
    %23 = sbr.rel (0) target = $region9
  $region8: #{multitask_autoencoder.1} parent=0 // pred_region
    _
  $region9: #{multitask_autoencoder.1} parent=0 // pred_fallthru
    _
  // Predicated region
  $region10: #{multitask_autoencoder.1} parent=0 // pred_check
    _
  $region11: #{multitask_autoencoder.1} parent=0 // pred_check_branch
    %25 = sbr.rel (0) target = $region13
  $region12: #{multitask_autoencoder.1} parent=0 // pred_region
    _
  $region13: #{multitask_autoencoder.1} parent=0 // pred_fallthru
    _
  // Predicated region
  $region14: #{multitask_autoencoder.1} parent=0 // pred_check
    _
  $region15: #{multitask_autoencoder.1} parent=0 // pred_check_branch
    %27 = sbr.rel (0) target = $region17
  $region16: #{multitask_autoencoder.1} parent=0 // pred_region
    _
  $region17: #{multitask_autoencoder.1} parent=0 // pred_fallthru
    _
  // Predicated region
  $region18: #{multitask_autoencoder.1} parent=0 // pred_check
    _
  $region19: #{multitask_autoencoder.1} parent=0 // pred_check_branch
    %29 = sbr.rel (0) target = $region21
  $region20: #{multitask_autoencoder.1} parent=0 // pred_region
    _
  $region21: #{multitask_autoencoder.1} parent=0 // pred_fallthru
    _
  // Predicated region
  $region22: #{multitask_autoencoder.1} parent=0 // pred_check
    _
  $region23: #{multitask_autoencoder.1} parent=0 // pred_check_branch
    %31 = sbr.rel (0) target = $region25
  $region24: #{multitask_autoencoder.1} parent=0 // pred_region
    _
  $region25: #{multitask_autoencoder.1} parent=0 // pred_fallthru
    _
  // Predicated region
  $region26: #{multitask_autoencoder.1} parent=0 // pred_check
    _
  $region27: #{multitask_autoencoder.1} parent=0 // pred_check_branch
    %33 = sbr.rel (0) target = $region29
  $region28: #{multitask_autoencoder.1} parent=0 // pred_region
    _
  $region29: #{multitask_autoencoder.1} parent=0 // pred_fallthru
    _
  // Predicated region
  $region30: #{multitask_autoencoder.1} parent=0 // pred_check
    _
  $region31: #{multitask_autoencoder.1} parent=0 // pred_check_branch
    %35 = sbr.rel (0) target = $region33
  $region32: #{multitask_autoencoder.1} parent=0 // pred_region
    _
  $region33: #{multitask_autoencoder.1} parent=0 // pred_fallthru
    _
  // Predicated region
  $region34: #{multitask_autoencoder.1} parent=0 // pred_check
    _
  $region35: #{multitask_autoencoder.1} parent=0 // pred_check_branch
    %37 = sbr.rel (0) target = $region37
  $region36: #{multitask_autoencoder.1} parent=0 // pred_region
    _
  $region37: #{multitask_autoencoder.1} parent=0 // pred_fallthru
    _
  // Predicated region
  $region38: #{multitask_autoencoder.1} parent=0 // pred_check
    _
  $region39: #{multitask_autoencoder.1} parent=0 // pred_check_branch
    %39 = sbr.rel (0) target = $region41
  $region40: #{multitask_autoencoder.1} parent=0 // pred_region
    _
  $region41: #{multitask_autoencoder.1} parent=0 // pred_fallthru
    _
  // Predicated region
  $region42: #{multitask_autoencoder.1} parent=0 // pred_check
    _
  $region43: #{multitask_autoencoder.1} parent=0 // pred_check_branch
    %41 = sbr.rel (0) target = $region45
  $region44: #{multitask_autoencoder.1} parent=0 // pred_region
    _
  $region45: #{multitask_autoencoder.1} parent=0 // pred_fallthru
    _
  // Predicated region
  $region46: #{multitask_autoencoder.1} parent=0 // pred_check
    _
  $region47: #{multitask_autoencoder.1} parent=0 // pred_check_branch
    %43 = sbr.rel (0) target = $region49
  $region48: #{multitask_autoencoder.1} parent=0 // pred_region
    _
  $region49: #{multitask_autoencoder.1} parent=0 // pred_fallthru
    _
  // Predicated region
  $region50: #{multitask_autoencoder.1} parent=0 // pred_check
    _
  $region51: #{multitask_autoencoder.1} parent=0 // pred_check_branch
    %45 = sbr.rel (0) target = $region53
  $region52: #{multitask_autoencoder.1} parent=0 // pred_region
    _
  $region53: #{multitask_autoencoder.1} parent=0 // pred_fallthru
    _
  // Predicated region
  $region54: #{multitask_autoencoder.1} parent=0 // pred_check
    _
  $region55: #{multitask_autoencoder.1} parent=0 // pred_check_branch
    %47 = sbr.rel (0) target = $region57
  $region56: #{multitask_autoencoder.1} parent=0 // pred_region
    _
  $region57: #{multitask_autoencoder.1} parent=0 // pred_fallthru
    _
  // Predicated region
  $region58: #{multitask_autoencoder.1} parent=0 // pred_check
    _
  $region59: #{multitask_autoencoder.1} parent=0 // pred_check_branch
    %49 = sbr.rel (0) target = $region61
  $region60: #{multitask_autoencoder.1} parent=0 // pred_region
    _
  $region61: #{multitask_autoencoder.1} parent=0 // pred_fallthru
    _
  %v51 = vld [vmem:[%s0] sm:$0xf]
  %v52 = vld [vmem:[%s0 + $0x4] sm:$0xf]
  %v53 = vld [vmem:[%s0 + $0x8] sm:$0xf]
  %v54 = vld [vmem:[%s0 + $0xc] sm:$0xf]
  %v55 = vld [vmem:[%s0 + $0x10] sm:$0xf]
  %v56 = vld [vmem:[%s0 + $0x14] sm:$0xf]
  %v57 = vld [vmem:[%s0 + $0x18] sm:$0xf]
  %v58 = vld [vmem:[%s0 + $0x1c] sm:$0xf]
  %v59 = vld [vmem:[%s0 + $0x20] sm:$0xf]
  %v60 = vld [vmem:[%s0 + $0x24] sm:$0xf]
  %v61 = vld [vmem:[%s0 + $0x28] sm:$0xf]
  %v62 = vld [vmem:[%s0 + $0x2c] sm:$0xf]
  %v63 = vld [vmem:[%s0 + $0x30] sm:$0xf]
  %v64 = vld [vmem:[%s0 + $0x34] sm:$0xf]
  %v65 = vld [vmem:[%s0 + $0x38] sm:$0xf]
  %v66 = vld [vmem:[%s0 + $0x3c] sm:$0xf]
  %v67 = vld [vmem:[%s0 + $0x40] sm:$0xf]
  %v68 = vld [vmem:[%s0 + $0x44] sm:$0xf]
  %v69 = vld [vmem:[%s0 + $0x48] sm:$0xf]
  %v70 = vld [vmem:[%s0 + $0x4c] sm:$0xf]
  %v71 = vld [vmem:[%s0 + $0x50] sm:$0xf]
  %v72 = vld [vmem:[%s0 + $0x54] sm:$0xf]
  %v73 = vld [vmem:[%s0 + $0x58] sm:$0xf]
  %v74 = vld [vmem:[%s0 + $0x5c] sm:$0xf]
  %v75 = vld [vmem:[%s0 + $0x60] sm:$0xf]
  %v76 = vld [vmem:[%s0 + $0x64] sm:$0xf]
  %v77 = vld [vmem:[%s0 + $0x68] sm:$0xf]
  %v78 = vld [vmem:[%s0 + $0x6c] sm:$0xf]
  %v79 = vld [vmem:[%s0 + $0x70] sm:$0xf]
  %v80 = vld [vmem:[%s0 + $0x74] sm:$0xf]
  %v81 = vld [vmem:[%s0 + $0x78] sm:$0xf]
  %v82 = vld [vmem:[%s0 + $0x7c] sm:$0xf]
  %v83 = vld [vmem:[%s0 + $0x80] sm:$0xf]
  %v84 = vld [vmem:[%s0 + $0x84] sm:$0xf]
  %v85 = vld [vmem:[%s0 + $0x88] sm:$0xf]
  %v86 = vld [vmem:[%s0 + $0x8c] sm:$0xf]
  %v87 = vld [vmem:[%s0 + $0x90] sm:$0xf]
  %v88 = vld [vmem:[%s0 + $0x94] sm:$0xf]
  %v89 = vld [vmem:[%s1] sm:$0xf]
  %v90 = vld [vmem:[%s1 + $0x4] sm:$0xf]
  %v91 = vld [vmem:[%s1 + $0x8] sm:$0xf]
  %v92 = vld [vmem:[%s1 + $0xc] sm:$0xf]
  %v93 = vld [vmem:[%s2] sm:$0x1]
  %v95 = vlaneseq
  %v96 = vshrl.u32 %v95, 7
  %v97 = vsub.s32 0, %v96
  %v98 = vrot.slane %v93, %v97
  %v138 = vunpack.c.l.b16 %v51
  %v139 = vunpack.c.l.b16 %v52
  %v140 = vunpack.c.l.b16 %v53
  %v141 = vunpack.c.l.b16 %v54
  %v142 = vunpack.c.l.b16 %v55
  %v143 = vunpack.c.l.b16 %v56
  %v144 = vunpack.c.l.b16 %v57
  %v145 = vunpack.c.l.b16 %v58
  %v146 = vunpack.c.l.b16 %v59
  %v147 = vunpack.c.l.b16 %v60
  %v148 = vunpack.c.l.b16 %v61
  %v149 = vunpack.c.l.b16 %v62
  %v150 = vunpack.c.l.b16 %v63
  %v151 = vunpack.c.l.b16 %v64
  %v152 = vunpack.c.l.b16 %v65
  %v153 = vunpack.c.l.b16 %v66
  %v154 = vunpack.c.l.b16 %v67
  %v155 = vunpack.c.l.b16 %v68
  %v156 = vunpack.c.l.b16 %v69
  %v157 = vunpack.c.l.b16 %v70
  %v158 = vunpack.c.l.b16 %v71
  %v159 = vunpack.c.l.b16 %v72
  %v160 = vunpack.c.l.b16 %v73
  %v161 = vunpack.c.l.b16 %v74
  %v162 = vunpack.c.l.b16 %v75
  %v163 = vunpack.c.l.b16 %v76
  %v164 = vunpack.c.l.b16 %v77
  %v165 = vunpack.c.l.b16 %v78
  %v166 = vunpack.c.l.b16 %v79
  %v167 = vunpack.c.l.b16 %v80
  %v168 = vunpack.c.l.b16 %v81
  %v169 = vunpack.c.l.b16 %v82
  %v170 = vunpack.c.l.b16 %v83
  %v171 = vunpack.c.l.b16 %v84
  %v172 = vunpack.c.l.b16 %v85
  %v173 = vunpack.c.l.b16 %v86
  %v174 = vunpack.c.l.b16 %v87
  %v175 = vunpack.c.l.b16 %v88
  %v176 = vpack.c.b16 %v139, %v138
  %v177 = vpack.c.b16 %v141, %v140
  %v178 = vpack.c.b16 %v143, %v142
  %v179 = vpack.c.b16 %v145, %v144
  %v180 = vpack.c.b16 %v147, %v146
  %v181 = vpack.c.b16 %v149, %v148
  %v182 = vpack.c.b16 %v151, %v150
  %v183 = vpack.c.b16 %v153, %v152
  %v184 = vpack.c.b16 %v155, %v154
  %v185 = vpack.c.b16 %v157, %v156
  %v186 = vpack.c.b16 %v159, %v158
  %v187 = vpack.c.b16 %v161, %v160
  %v188 = vpack.c.b16 %v163, %v162
  %v189 = vpack.c.b16 %v165, %v164
  %v190 = vpack.c.b16 %v167, %v166
  %v191 = vpack.c.b16 %v169, %v168
  %v192 = vpack.c.b16 %v171, %v170
  %v193 = vpack.c.b16 %v173, %v172
  %v194 = vpack.c.b16 %v175, %v174
  %v199 = vunpack.c.l.b16 %v89
  %v200 = vunpack.c.l.b16 %v90
  %v201 = vunpack.c.l.b16 %v91
  %v202 = vunpack.c.l.b16 %v92
  %v203 = vpack.c.b16 %v200, %v199
  %v204 = vpack.c.b16 %v202, %v201
  %vm207 = vcmask 261120
  %v209 = vsel %vm207, %v176, 0
  %v212 = vsel %vm207, %v177, 0
  %v215 = vsel %vm207, %v178, 0
  %v218 = vsel %vm207, %v179, 0
  %v221 = vsel %vm207, %v180, 0
  %v224 = vsel %vm207, %v181, 0
  %v227 = vsel %vm207, %v182, 0
  %v230 = vsel %vm207, %v183, 0
  %v233 = vsel %vm207, %v184, 0
  %v236 = vsel %vm207, %v185, 0
  %v239 = vsel %vm207, %v186, 0
  %v242 = vsel %vm207, %v187, 0
  %v245 = vsel %vm207, %v188, 0
  %v248 = vsel %vm207, %v189, 0
  %v251 = vsel %vm207, %v190, 0
  %v254 = vsel %vm207, %v191, 0
  %v257 = vsel %vm207, %v192, 0
  %v260 = vsel %vm207, %v193, 0
  %v263 = vsel %vm207, %v194, 0
  %265 = vmatprep.subr.bf16.mxu0 0
  %266 = vmatpush1.bf16.msra.mxu0 0
  %267 = vmatprep.subr.bf16.mxu0 0
  %268 = vmatpush1.bf16.msra.mxu0 0
  %269 = vmatprep.subr.bf16.mxu0 0
  %270 = vmatpush1.bf16.msra.mxu0 0
  %271 = vmatprep.subr.bf16.mxu0 0
  %272 = vmatpush1.bf16.msra.mxu0 0
  %273 = vmatprep.subr.bf16.mxu0 0
  %274 = vmatpush1.bf16.msra.mxu0 0
  %275 = vmatprep.subr.bf16.mxu0 0
  %276 = vmatpush1.bf16.msra.mxu0 0
  %277 = vmatprep.subr.bf16.mxu0 0
  %278 = vmatpush1.bf16.msra.mxu0 %v204
  %279 = vmatprep.subr.bf16.mxu0 0
  %280 = vmatpush1.bf16.msra.mxu0 %v203
  %281 = vmatprep.subr.bf16.mxu0 0
  %282 = vmatpush2.bf16.msra.mxu0 0
  %283 = vmatprep.subr.bf16.mxu0 0
  %284 = vmatpush2.bf16.msra.mxu0 0
  %285 = vmatprep.subr.bf16.mxu0 0
  %286 = vmatpush2.bf16.msra.mxu0 0
  %287 = vmatprep.subr.bf16.mxu0 0
  %288 = vmatpush2.bf16.msra.mxu0 0
  %289 = vmatprep.subr.bf16.mxu0 0
  %290 = vmatpush2.bf16.msra.mxu0 0
  %291 = vmatprep.subr.bf16.mxu0 0
  %292 = vmatpush2.bf16.msra.mxu0 0
  %293 = vmatprep.subr.bf16.mxu0 0
  %294 = vmatpush2.bf16.msra.mxu0 0
  %295 = vmatprep.subr.bf16.mxu0 0
  %296 = vmatpush2.bf16.msra.mxu0 0
  %297 = vmatprep.mubr.bf16.mxu0 0
  %298 = vmatmul.mubr.bf16.gmra.mxu0 %v209
  %v299 = vpop.f32.mrf.mxu0
  %v300 = vadd.f32 %v98, %v299
  %v301 = vpop.f32.mrf.mxu0
  %v302 = vpop.f32.mrf.mxu0
  %v303 = vadd.f32 %v98, %v302
  %v304 = vpop.f32.mrf.mxu0
  %305 = vmatprep.mubr.bf16.mxu0 0
  %306 = vmatmul.mubr.bf16.gmra.mxu0 %v212
  %v307 = vpop.f32.mrf.mxu0
  %v308 = vadd.f32 %v98, %v307
  %v309 = vpop.f32.mrf.mxu0
  %v310 = vpop.f32.mrf.mxu0
  %v311 = vadd.f32 %v98, %v310
  %v312 = vpop.f32.mrf.mxu0
  %313 = vmatprep.mubr.bf16.mxu0 0
  %314 = vmatmul.mubr.bf16.gmra.mxu0 %v215
  %v315 = vpop.f32.mrf.mxu0
  %v316 = vadd.f32 %v98, %v315
  %v317 = vpop.f32.mrf.mxu0
  %v318 = vpop.f32.mrf.mxu0
  %v319 = vadd.f32 %v98, %v318
  %v320 = vpop.f32.mrf.mxu0
  %321 = vmatprep.mubr.bf16.mxu0 0
  %322 = vmatmul.mubr.bf16.gmra.mxu0 %v218
  %v323 = vpop.f32.mrf.mxu0
  %v324 = vadd.f32 %v98, %v323
  %v325 = vpop.f32.mrf.mxu0
  %v326 = vpop.f32.mrf.mxu0
  %v327 = vadd.f32 %v98, %v326
  %v328 = vpop.f32.mrf.mxu0
  %329 = vmatprep.mubr.bf16.mxu0 0
  %330 = vmatmul.mubr.bf16.gmra.mxu0 %v221
  %v331 = vpop.f32.mrf.mxu0
  %v332 = vadd.f32 %v98, %v331
  %v333 = vpop.f32.mrf.mxu0
  %v334 = vpop.f32.mrf.mxu0
  %v335 = vadd.f32 %v98, %v334
  %v336 = vpop.f32.mrf.mxu0
  %337 = vmatprep.mubr.bf16.mxu0 0
  %338 = vmatmul.mubr.bf16.gmra.mxu0 %v224
  %v339 = vpop.f32.mrf.mxu0
  %v340 = vadd.f32 %v98, %v339
  %v341 = vpop.f32.mrf.mxu0
  %v342 = vpop.f32.mrf.mxu0
  %v343 = vadd.f32 %v98, %v342
  %v344 = vpop.f32.mrf.mxu0
  %345 = vmatprep.mubr.bf16.mxu0 0
  %346 = vmatmul.mubr.bf16.gmra.mxu0 %v227
  %v347 = vpop.f32.mrf.mxu0
  %v348 = vadd.f32 %v98, %v347
  %v349 = vpop.f32.mrf.mxu0
  %v350 = vpop.f32.mrf.mxu0
  %v351 = vadd.f32 %v98, %v350
  %v352 = vpop.f32.mrf.mxu0
  %353 = vmatprep.mubr.bf16.mxu0 0
  %354 = vmatmul.mubr.bf16.gmra.mxu0 %v230
  %v355 = vpop.f32.mrf.mxu0
  %v356 = vadd.f32 %v98, %v355
  %v357 = vpop.f32.mrf.mxu0
  %v358 = vpop.f32.mrf.mxu0
  %v359 = vadd.f32 %v98, %v358
  %v360 = vpop.f32.mrf.mxu0
  %361 = vmatprep.mubr.bf16.mxu0 0
  %362 = vmatmul.mubr.bf16.gmra.mxu0 %v233
  %v363 = vpop.f32.mrf.mxu0
  %v364 = vadd.f32 %v98, %v363
  %v365 = vpop.f32.mrf.mxu0
  %v366 = vpop.f32.mrf.mxu0
  %v367 = vadd.f32 %v98, %v366
  %v368 = vpop.f32.mrf.mxu0
  %369 = vmatprep.mubr.bf16.mxu0 0
  %370 = vmatmul.mubr.bf16.gmra.mxu0 %v236
  %v371 = vpop.f32.mrf.mxu0
  %v372 = vadd.f32 %v98, %v371
  %v373 = vpop.f32.mrf.mxu0
  %v374 = vpop.f32.mrf.mxu0
  %v375 = vadd.f32 %v98, %v374
  %v376 = vpop.f32.mrf.mxu0
  %377 = vmatprep.mubr.bf16.mxu0 0
  %378 = vmatmul.mubr.bf16.gmra.mxu0 %v239
  %v379 = vpop.f32.mrf.mxu0
  %v380 = vadd.f32 %v98, %v379
  %v381 = vpop.f32.mrf.mxu0
  %v382 = vpop.f32.mrf.mxu0
  %v383 = vadd.f32 %v98, %v382
  %v384 = vpop.f32.mrf.mxu0
  %385 = vmatprep.mubr.bf16.mxu0 0
  %386 = vmatmul.mubr.bf16.gmra.mxu0 %v242
  %v387 = vpop.f32.mrf.mxu0
  %v388 = vadd.f32 %v98, %v387
  %v389 = vpop.f32.mrf.mxu0
  %v390 = vpop.f32.mrf.mxu0
  %v391 = vadd.f32 %v98, %v390
  %v392 = vpop.f32.mrf.mxu0
  %393 = vmatprep.mubr.bf16.mxu0 0
  %394 = vmatmul.mubr.bf16.gmra.mxu0 %v245
  %v395 = vpop.f32.mrf.mxu0
  %v396 = vadd.f32 %v98, %v395
  %v397 = vpop.f32.mrf.mxu0
  %v398 = vpop.f32.mrf.mxu0
  %v399 = vadd.f32 %v98, %v398
  %v400 = vpop.f32.mrf.mxu0
  %401 = vmatprep.mubr.bf16.mxu0 0
  %402 = vmatmul.mubr.bf16.gmra.mxu0 %v248
  %v403 = vpop.f32.mrf.mxu0
  %v404 = vadd.f32 %v98, %v403
  %v405 = vpop.f32.mrf.mxu0
  %v406 = vpop.f32.mrf.mxu0
  %v407 = vadd.f32 %v98, %v406
  %v408 = vpop.f32.mrf.mxu0
  %409 = vmatprep.mubr.bf16.mxu0 0
  %410 = vmatmul.mubr.bf16.gmra.mxu0 %v251
  %v411 = vpop.f32.mrf.mxu0
  %v412 = vadd.f32 %v98, %v411
  %v413 = vpop.f32.mrf.mxu0
  %v414 = vpop.f32.mrf.mxu0
  %v415 = vadd.f32 %v98, %v414
  %v416 = vpop.f32.mrf.mxu0
  %417 = vmatprep.mubr.bf16.mxu0 0
  %418 = vmatmul.mubr.bf16.gmra.mxu0 %v254
  %v419 = vpop.f32.mrf.mxu0
  %v420 = vadd.f32 %v98, %v419
  %v421 = vpop.f32.mrf.mxu0
  %v422 = vpop.f32.mrf.mxu0
  %v423 = vadd.f32 %v98, %v422
  %v424 = vpop.f32.mrf.mxu0
  %425 = vmatprep.mubr.bf16.mxu0 0
  %426 = vmatmul.mubr.bf16.gmra.mxu0 %v257
  %v427 = vpop.f32.mrf.mxu0
  %v428 = vadd.f32 %v98, %v427
  %v429 = vpop.f32.mrf.mxu0
  %v430 = vpop.f32.mrf.mxu0
  %v431 = vadd.f32 %v98, %v430
  %v432 = vpop.f32.mrf.mxu0
  %433 = vmatprep.mubr.bf16.mxu0 0
  %434 = vmatmul.mubr.bf16.gmra.mxu0 %v260
  %v435 = vpop.f32.mrf.mxu0
  %v436 = vadd.f32 %v98, %v435
  %v437 = vpop.f32.mrf.mxu0
  %v438 = vpop.f32.mrf.mxu0
  %v439 = vadd.f32 %v98, %v438
  %v440 = vpop.f32.mrf.mxu0
  %441 = vmatprep.mubr.bf16.mxu0 0
  %442 = vmatmul.mubr.bf16.gmra.mxu0 %v263
  %v443 = vpop.f32.mrf.mxu0
  %v444 = vadd.f32 %v98, %v443
  %v445 = vpop.f32.mrf.mxu0
  %v446 = vpop.f32.mrf.mxu0
  %v447 = vadd.f32 %v98, %v446
  %v448 = vpop.f32.mrf.mxu0
  %449 = vdwg.mxu0
  %vm450 = vcmp.gt.f32.partialorder %v300, 0.0
  %vm451 = vcmp.gt.f32.partialorder %v303, 0.0
  %vm452 = vcmp.gt.f32.partialorder %v308, 0.0
  %vm453 = vcmp.gt.f32.partialorder %v311, 0.0
  %vm454 = vcmp.gt.f32.partialorder %v316, 0.0
  %vm455 = vcmp.gt.f32.partialorder %v319, 0.0
  %vm456 = vcmp.gt.f32.partialorder %v324, 0.0
  %vm457 = vcmp.gt.f32.partialorder %v327, 0.0
  %vm458 = vcmp.gt.f32.partialorder %v332, 0.0
  %vm459 = vcmp.gt.f32.partialorder %v335, 0.0
  %vm460 = vcmp.gt.f32.partialorder %v340, 0.0
  %vm461 = vcmp.gt.f32.partialorder %v343, 0.0
  %vm462 = vcmp.gt.f32.partialorder %v348, 0.0
  %vm463 = vcmp.gt.f32.partialorder %v351, 0.0
  %vm464 = vcmp.gt.f32.partialorder %v356, 0.0
  %vm465 = vcmp.gt.f32.partialorder %v359, 0.0
  %vm466 = vcmp.gt.f32.partialorder %v364, 0.0
  %vm467 = vcmp.gt.f32.partialorder %v367, 0.0
  %vm468 = vcmp.gt.f32.partialorder %v372, 0.0
  %vm469 = vcmp.gt.f32.partialorder %v375, 0.0
  %vm470 = vcmp.gt.f32.partialorder %v380, 0.0
  %vm471 = vcmp.gt.f32.partialorder %v383, 0.0
  %vm472 = vcmp.gt.f32.partialorder %v388, 0.0
  %vm473 = vcmp.gt.f32.partialorder %v391, 0.0
  %vm474 = vcmp.gt.f32.partialorder %v396, 0.0
  %vm475 = vcmp.gt.f32.partialorder %v399, 0.0
  %vm476 = vcmp.gt.f32.partialorder %v404, 0.0
  %vm477 = vcmp.gt.f32.partialorder %v407, 0.0
  %vm478 = vcmp.gt.f32.partialorder %v412, 0.0
  %vm479 = vcmp.gt.f32.partialorder %v415, 0.0
  %vm480 = vcmp.gt.f32.partialorder %v420, 0.0
  %vm481 = vcmp.gt.f32.partialorder %v423, 0.0
  %vm482 = vcmp.gt.f32.partialorder %v428, 0.0
  %vm483 = vcmp.gt.f32.partialorder %v431, 0.0
  %vm484 = vcmp.gt.f32.partialorder %v436, 0.0
  %vm485 = vcmp.gt.f32.partialorder %v439, 0.0
  %vm486 = vcmp.gt.f32.partialorder %v444, 0.0
  %vm487 = vcmp.gt.f32.partialorder %v447, 0.0
  %v488 = vmul.f32 %v300, 0.01
  %v489 = vmul.f32 %v303, 0.01
  %v490 = vmul.f32 %v308, 0.01
  %v491 = vmul.f32 %v311, 0.01
  %v492 = vmul.f32 %v316, 0.01
  %v493 = vmul.f32 %v319, 0.01
  %v494 = vmul.f32 %v324, 0.01
  %v495 = vmul.f32 %v327, 0.01
  %v496 = vmul.f32 %v332, 0.01
  %v497 = vmul.f32 %v335, 0.01
  %v498 = vmul.f32 %v340, 0.01
  %v499 = vmul.f32 %v343, 0.01
  %v500 = vmul.f32 %v348, 0.01
  %v501 = vmul.f32 %v351, 0.01
  %v502 = vmul.f32 %v356, 0.01
  %v503 = vmul.f32 %v359, 0.01
  %v504 = vmul.f32 %v364, 0.01
  %v505 = vmul.f32 %v367, 0.01
  %v506 = vmul.f32 %v372, 0.01
  %v507 = vmul.f32 %v375, 0.01
  %v508 = vmul.f32 %v380, 0.01
  %v509 = vmul.f32 %v383, 0.01
  %v510 = vmul.f32 %v388, 0.01
  %v511 = vmul.f32 %v391, 0.01
  %v512 = vmul.f32 %v396, 0.01
  %v513 = vmul.f32 %v399, 0.01
  %v514 = vmul.f32 %v404, 0.01
  %v515 = vmul.f32 %v407, 0.01
  %v516 = vmul.f32 %v412, 0.01
  %v517 = vmul.f32 %v415, 0.01
  %v518 = vmul.f32 %v420, 0.01
  %v519 = vmul.f32 %v423, 0.01
  %v520 = vmul.f32 %v428, 0.01
  %v521 = vmul.f32 %v431, 0.01
  %v522 = vmul.f32 %v436, 0.01
  %v523 = vmul.f32 %v439, 0.01
  %v524 = vmul.f32 %v444, 0.01
  %v525 = vmul.f32 %v447, 0.01
  %v526 = vsel %vm450, %v300, %v488
  %v527 = vsel %vm451, %v303, %v489
  %v528 = vsel %vm452, %v308, %v490
  %v529 = vsel %vm453, %v311, %v491
  %v530 = vsel %vm454, %v316, %v492
  %v531 = vsel %vm455, %v319, %v493
  %v532 = vsel %vm456, %v324, %v494
  %v533 = vsel %vm457, %v327, %v495
  %v534 = vsel %vm458, %v332, %v496
  %v535 = vsel %vm459, %v335, %v497
  %v536 = vsel %vm460, %v340, %v498
  %v537 = vsel %vm461, %v343, %v499
  %v538 = vsel %vm462, %v348, %v500
  %v539 = vsel %vm463, %v351, %v501
  %v540 = vsel %vm464, %v356, %v502
  %v541 = vsel %vm465, %v359, %v503
  %v542 = vsel %vm466, %v364, %v504
  %v543 = vsel %vm467, %v367, %v505
  %v544 = vsel %vm468, %v372, %v506
  %v545 = vsel %vm469, %v375, %v507
  %v546 = vsel %vm470, %v380, %v508
  %v547 = vsel %vm471, %v383, %v509
  %v548 = vsel %vm472, %v388, %v510
  %v549 = vsel %vm473, %v391, %v511
  %v550 = vsel %vm474, %v396, %v512
  %v551 = vsel %vm475, %v399, %v513
  %v552 = vsel %vm476, %v404, %v514
  %v553 = vsel %vm477, %v407, %v515
  %v554 = vsel %vm478, %v412, %v516
  %v555 = vsel %vm479, %v415, %v517
  %v556 = vsel %vm480, %v420, %v518
  %v557 = vsel %vm481, %v423, %v519
  %v558 = vsel %vm482, %v428, %v520
  %v559 = vsel %vm483, %v431, %v521
  %v560 = vsel %vm484, %v436, %v522
  %v561 = vsel %vm485, %v439, %v523
  %v562 = vsel %vm486, %v444, %v524
  %v563 = vsel %vm487, %v447, %v525
  %v564 = vpack.c.bf16 %v527, %v526
  %v565 = vpack.c.bf16 %v529, %v528
  %v566 = vpack.c.bf16 %v531, %v530
  %v567 = vpack.c.bf16 %v533, %v532
  %v568 = vpack.c.bf16 %v535, %v534
  %v569 = vpack.c.bf16 %v537, %v536
  %v570 = vpack.c.bf16 %v539, %v538
  %v571 = vpack.c.bf16 %v541, %v540
  %v572 = vpack.c.bf16 %v543, %v542
  %v573 = vpack.c.bf16 %v545, %v544
  %v574 = vpack.c.bf16 %v547, %v546
  %v575 = vpack.c.bf16 %v549, %v548
  %v576 = vpack.c.bf16 %v551, %v550
  %v577 = vpack.c.bf16 %v553, %v552
  %v578 = vpack.c.bf16 %v555, %v554
  %v579 = vpack.c.bf16 %v557, %v556
  %v580 = vpack.c.bf16 %v559, %v558
  %v581 = vpack.c.bf16 %v561, %v560
  %v582 = vpack.c.bf16 %v563, %v562
  %v583 = vld [vmem:[%s3] sm:$0xf]
  %v584 = vld [vmem:[%s3 + $0x4] sm:$0xf]
  %v585 = vld [vmem:[%s3 + $0x8] sm:$0xf]
  %v586 = vld [vmem:[%s3 + $0xc] sm:$0xf]
  %v587 = vld [vmem:[%s3 + $0x10] sm:$0xf]
  %v588 = vld [vmem:[%s3 + $0x14] sm:$0xf]
  %v589 = vld [vmem:[%s3 + $0x18] sm:$0xf]
  %v590 = vld [vmem:[%s3 + $0x1c] sm:$0xf]
  %v591 = vld [vmem:[%s3 + $0x20] sm:$0xf]
  %v592 = vld [vmem:[%s3 + $0x24] sm:$0xf]
  %v593 = vld [vmem:[%s3 + $0x28] sm:$0xf]
  %v594 = vld [vmem:[%s3 + $0x2c] sm:$0xf]
  %v595 = vld [vmem:[%s3 + $0x30] sm:$0xf]
  %v596 = vld [vmem:[%s3 + $0x34] sm:$0xf]
  %v597 = vld [vmem:[%s3 + $0x38] sm:$0xf]
  %v598 = vld [vmem:[%s3 + $0x3c] sm:$0xf]
  %v599 = vld [vmem:[%s4] sm:$0x1]
  %v601 = vlaneseq
  %v602 = vshrl.u32 %v601, 7
  %v603 = vsub.s32 0, %v602
  %v604 = vrot.slane %v599, %v603
  %v622 = vunpack.c.l.b16 %v583
  %v623 = vunpack.c.l.b16 %v584
  %v624 = vunpack.c.l.b16 %v585
  %v625 = vunpack.c.l.b16 %v586
  %v626 = vunpack.c.l.b16 %v587
  %v627 = vunpack.c.l.b16 %v588
  %v628 = vunpack.c.l.b16 %v589
  %v629 = vunpack.c.l.b16 %v590
  %v630 = vunpack.c.l.b16 %v591
  %v631 = vunpack.c.l.b16 %v592
  %v632 = vunpack.c.l.b16 %v593
  %v633 = vunpack.c.l.b16 %v594
  %v634 = vunpack.c.l.b16 %v595
  %v635 = vunpack.c.l.b16 %v596
  %v636 = vunpack.c.l.b16 %v597
  %v637 = vunpack.c.l.b16 %v598
  %v638 = vpack.c.b16 %v623, %v622
  %v639 = vpack.c.b16 %v625, %v624
  %v640 = vpack.c.b16 %v627, %v626
  %v641 = vpack.c.b16 %v629, %v628
  %v642 = vpack.c.b16 %v631, %v630
  %v643 = vpack.c.b16 %v633, %v632
  %v644 = vpack.c.b16 %v635, %v634
  %v645 = vpack.c.b16 %v637, %v636
  %654 = vmatprep.subr.bf16.mxu0 0
  %655 = vmatpush1.bf16.msra.mxu0 %v645
  %656 = vmatprep.subr.bf16.mxu0 0
  %657 = vmatpush1.bf16.msra.mxu0 %v644
  %658 = vmatprep.subr.bf16.mxu0 0
  %659 = vmatpush1.bf16.msra.mxu0 %v643
  %660 = vmatprep.subr.bf16.mxu0 0
  %661 = vmatpush1.bf16.msra.mxu0 %v642
  %662 = vmatprep.subr.bf16.mxu0 0
  %663 = vmatpush1.bf16.msra.mxu0 %v641
  %664 = vmatprep.subr.bf16.mxu0 0
  %665 = vmatpush1.bf16.msra.mxu0 %v640
  %666 = vmatprep.subr.bf16.mxu0 0
  %667 = vmatpush1.bf16.msra.mxu0 %v639
  %668 = vmatprep.subr.bf16.mxu0 0
  %669 = vmatpush1.bf16.msra.mxu0 %v638
  %670 = vmatprep.subr.bf16.mxu0 0
  %671 = vmatpush2.bf16.msra.mxu0 0
  %672 = vmatprep.subr.bf16.mxu0 0
  %673 = vmatpush2.bf16.msra.mxu0 0
  %674 = vmatprep.subr.bf16.mxu0 0
  %675 = vmatpush2.bf16.msra.mxu0 0
  %676 = vmatprep.subr.bf16.mxu0 0
  %677 = vmatpush2.bf16.msra.mxu0 0
  %678 = vmatprep.subr.bf16.mxu0 0
  %679 = vmatpush2.bf16.msra.mxu0 0
  %680 = vmatprep.subr.bf16.mxu0 0
  %681 = vmatpush2.bf16.msra.mxu0 0
  %682 = vmatprep.subr.bf16.mxu0 0
  %683 = vmatpush2.bf16.msra.mxu0 0
  %684 = vmatprep.subr.bf16.mxu0 0
  %685 = vmatpush2.bf16.msra.mxu0 0
  %686 = vmatprep.mubr.bf16.mxu0 0
  %687 = vmatmul.mubr.bf16.gmra.mxu0 %v564
  %v688 = vpop.f32.mrf.mxu0
  %v689 = vadd.f32 %v604, %v688
  %v690 = vpop.f32.mrf.mxu0
  %v691 = vpop.f32.mrf.mxu0
  %v692 = vadd.f32 %v604, %v691
  %v693 = vpop.f32.mrf.mxu0
  %694 = vmatprep.mubr.bf16.mxu0 0
  %695 = vmatmul.mubr.bf16.gmra.mxu0 %v565
  %v696 = vpop.f32.mrf.mxu0
  %v697 = vadd.f32 %v604, %v696
  %v698 = vpop.f32.mrf.mxu0
  %v699 = vpop.f32.mrf.mxu0
  %v700 = vadd.f32 %v604, %v699
  %v701 = vpop.f32.mrf.mxu0
  %702 = vmatprep.mubr.bf16.mxu0 0
  %703 = vmatmul.mubr.bf16.gmra.mxu0 %v566
  %v704 = vpop.f32.mrf.mxu0
  %v705 = vadd.f32 %v604, %v704
  %v706 = vpop.f32.mrf.mxu0
  %v707 = vpop.f32.mrf.mxu0
  %v708 = vadd.f32 %v604, %v707
  %v709 = vpop.f32.mrf.mxu0
  %710 = vmatprep.mubr.bf16.mxu0 0
  %711 = vmatmul.mubr.bf16.gmra.mxu0 %v567
  %v712 = vpop.f32.mrf.mxu0
  %v713 = vadd.f32 %v604, %v712
  %v714 = vpop.f32.mrf.mxu0
  %v715 = vpop.f32.mrf.mxu0
  %v716 = vadd.f32 %v604, %v715
  %v717 = vpop.f32.mrf.mxu0
  %718 = vmatprep.mubr.bf16.mxu0 0
  %719 = vmatmul.mubr.bf16.gmra.mxu0 %v568
  %v720 = vpop.f32.mrf.mxu0
  %v721 = vadd.f32 %v604, %v720
  %v722 = vpop.f32.mrf.mxu0
  %v723 = vpop.f32.mrf.mxu0
  %v724 = vadd.f32 %v604, %v723
  %v725 = vpop.f32.mrf.mxu0
  %726 = vmatprep.mubr.bf16.mxu0 0
  %727 = vmatmul.mubr.bf16.gmra.mxu0 %v569
  %v728 = vpop.f32.mrf.mxu0
  %v729 = vadd.f32 %v604, %v728
  %v730 = vpop.f32.mrf.mxu0
  %v731 = vpop.f32.mrf.mxu0
  %v732 = vadd.f32 %v604, %v731
  %v733 = vpop.f32.mrf.mxu0
  %734 = vmatprep.mubr.bf16.mxu0 0
  %735 = vmatmul.mubr.bf16.gmra.mxu0 %v570
  %v736 = vpop.f32.mrf.mxu0
  %v737 = vadd.f32 %v604, %v736
  %v738 = vpop.f32.mrf.mxu0
  %v739 = vpop.f32.mrf.mxu0
  %v740 = vadd.f32 %v604, %v739
  %v741 = vpop.f32.mrf.mxu0
  %742 = vmatprep.mubr.bf16.mxu0 0
  %743 = vmatmul.mubr.bf16.gmra.mxu0 %v571
  %v744 = vpop.f32.mrf.mxu0
  %v745 = vadd.f32 %v604, %v744
  %v746 = vpop.f32.mrf.mxu0
  %v747 = vpop.f32.mrf.mxu0
  %v748 = vadd.f32 %v604, %v747
  %v749 = vpop.f32.mrf.mxu0
  %750 = vmatprep.mubr.bf16.mxu0 0
  %751 = vmatmul.mubr.bf16.gmra.mxu0 %v572
  %v752 = vpop.f32.mrf.mxu0
  %v753 = vadd.f32 %v604, %v752
  %v754 = vpop.f32.mrf.mxu0
  %v755 = vpop.f32.mrf.mxu0
  %v756 = vadd.f32 %v604, %v755
  %v757 = vpop.f32.mrf.mxu0
  %758 = vmatprep.mubr.bf16.mxu0 0
  %759 = vmatmul.mubr.bf16.gmra.mxu0 %v573
  %v760 = vpop.f32.mrf.mxu0
  %v761 = vadd.f32 %v604, %v760
  %v762 = vpop.f32.mrf.mxu0
  %v763 = vpop.f32.mrf.mxu0
  %v764 = vadd.f32 %v604, %v763
  %v765 = vpop.f32.mrf.mxu0
  %766 = vmatprep.mubr.bf16.mxu0 0
  %767 = vmatmul.mubr.bf16.gmra.mxu0 %v574
  %v768 = vpop.f32.mrf.mxu0
  %v769 = vadd.f32 %v604, %v768
  %v770 = vpop.f32.mrf.mxu0
  %v771 = vpop.f32.mrf.mxu0
  %v772 = vadd.f32 %v604, %v771
  %v773 = vpop.f32.mrf.mxu0
  %774 = vmatprep.mubr.bf16.mxu0 0
  %775 = vmatmul.mubr.bf16.gmra.mxu0 %v575
  %v776 = vpop.f32.mrf.mxu0
  %v777 = vadd.f32 %v604, %v776
  %v778 = vpop.f32.mrf.mxu0
  %v779 = vpop.f32.mrf.mxu0
  %v780 = vadd.f32 %v604, %v779
  %v781 = vpop.f32.mrf.mxu0
  %782 = vmatprep.mubr.bf16.mxu0 0
  %783 = vmatmul.mubr.bf16.gmra.mxu0 %v576
  %v784 = vpop.f32.mrf.mxu0
  %v785 = vadd.f32 %v604, %v784
  %v786 = vpop.f32.mrf.mxu0
  %v787 = vpop.f32.mrf.mxu0
  %v788 = vadd.f32 %v604, %v787
  %v789 = vpop.f32.mrf.mxu0
  %790 = vmatprep.mubr.bf16.mxu0 0
  %791 = vmatmul.mubr.bf16.gmra.mxu0 %v577
  %v792 = vpop.f32.mrf.mxu0
  %v793 = vadd.f32 %v604, %v792
  %v794 = vpop.f32.mrf.mxu0
  %v795 = vpop.f32.mrf.mxu0
  %v796 = vadd.f32 %v604, %v795
  %v797 = vpop.f32.mrf.mxu0
  %798 = vmatprep.mubr.bf16.mxu0 0
  %799 = vmatmul.mubr.bf16.gmra.mxu0 %v578
  %v800 = vpop.f32.mrf.mxu0
  %v801 = vadd.f32 %v604, %v800
  %v802 = vpop.f32.mrf.mxu0
  %v803 = vpop.f32.mrf.mxu0
  %v804 = vadd.f32 %v604, %v803
  %v805 = vpop.f32.mrf.mxu0
  %806 = vmatprep.mubr.bf16.mxu0 0
  %807 = vmatmul.mubr.bf16.gmra.mxu0 %v579
  %v808 = vpop.f32.mrf.mxu0
  %v809 = vadd.f32 %v604, %v808
  %v810 = vpop.f32.mrf.mxu0
  %v811 = vpop.f32.mrf.mxu0
  %v812 = vadd.f32 %v604, %v811
  %v813 = vpop.f32.mrf.mxu0
  %814 = vmatprep.mubr.bf16.mxu0 0
  %815 = vmatmul.mubr.bf16.gmra.mxu0 %v580
  %v816 = vpop.f32.mrf.mxu0
  %v817 = vadd.f32 %v604, %v816
  %v818 = vpop.f32.mrf.mxu0
  %v819 = vpop.f32.mrf.mxu0
  %v820 = vadd.f32 %v604, %v819
  %v821 = vpop.f32.mrf.mxu0
  %822 = vmatprep.mubr.bf16.mxu0 0
  %823 = vmatmul.mubr.bf16.gmra.mxu0 %v581
  %v824 = vpop.f32.mrf.mxu0
  %v825 = vadd.f32 %v604, %v824
  %v826 = vpop.f32.mrf.mxu0
  %v827 = vpop.f32.mrf.mxu0
  %v828 = vadd.f32 %v604, %v827
  %v829 = vpop.f32.mrf.mxu0
  %830 = vmatprep.mubr.bf16.mxu0 0
  %831 = vmatmul.mubr.bf16.gmra.mxu0 %v582
  %v832 = vpop.f32.mrf.mxu0
  %v833 = vadd.f32 %v604, %v832
  %v834 = vpop.f32.mrf.mxu0
  %v835 = vpop.f32.mrf.mxu0
  %v836 = vadd.f32 %v604, %v835
  %v837 = vpop.f32.mrf.mxu0
  %838 = vdwg.mxu0
  %vm839 = vcmp.gt.f32.partialorder %v689, 0.0
  %vm840 = vcmp.gt.f32.partialorder %v692, 0.0
  %vm841 = vcmp.gt.f32.partialorder %v697, 0.0
  %vm842 = vcmp.gt.f32.partialorder %v700, 0.0
  %vm843 = vcmp.gt.f32.partialorder %v705, 0.0
  %vm844 = vcmp.gt.f32.partialorder %v708, 0.0
  %vm845 = vcmp.gt.f32.partialorder %v713, 0.0
  %vm846 = vcmp.gt.f32.partialorder %v716, 0.0
  %vm847 = vcmp.gt.f32.partialorder %v721, 0.0
  %vm848 = vcmp.gt.f32.partialorder %v724, 0.0
  %vm849 = vcmp.gt.f32.partialorder %v729, 0.0
  %vm850 = vcmp.gt.f32.partialorder %v732, 0.0
  %vm851 = vcmp.gt.f32.partialorder %v737, 0.0
  %vm852 = vcmp.gt.f32.partialorder %v740, 0.0
  %vm853 = vcmp.gt.f32.partialorder %v745, 0.0
  %vm854 = vcmp.gt.f32.partialorder %v748, 0.0
  %vm855 = vcmp.gt.f32.partialorder %v753, 0.0
  %vm856 = vcmp.gt.f32.partialorder %v756, 0.0
  %vm857 = vcmp.gt.f32.partialorder %v761, 0.0
  %vm858 = vcmp.gt.f32.partialorder %v764, 0.0
  %vm859 = vcmp.gt.f32.partialorder %v769, 0.0
  %vm860 = vcmp.gt.f32.partialorder %v772, 0.0
  %vm861 = vcmp.gt.f32.partialorder %v777, 0.0
  %vm862 = vcmp.gt.f32.partialorder %v780, 0.0
  %vm863 = vcmp.gt.f32.partialorder %v785, 0.0
  %vm864 = vcmp.gt.f32.partialorder %v788, 0.0
  %vm865 = vcmp.gt.f32.partialorder %v793, 0.0
  %vm866 = vcmp.gt.f32.partialorder %v796, 0.0
  %vm867 = vcmp.gt.f32.partialorder %v801, 0.0
  %vm868 = vcmp.gt.f32.partialorder %v804, 0.0
  %vm869 = vcmp.gt.f32.partialorder %v809, 0.0
  %vm870 = vcmp.gt.f32.partialorder %v812, 0.0
  %vm871 = vcmp.gt.f32.partialorder %v817, 0.0
  %vm872 = vcmp.gt.f32.partialorder %v820, 0.0
  %vm873 = vcmp.gt.f32.partialorder %v825, 0.0
  %vm874 = vcmp.gt.f32.partialorder %v828, 0.0
  %vm875 = vcmp.gt.f32.partialorder %v833, 0.0
  %vm876 = vcmp.gt.f32.partialorder %v836, 0.0
  %v877 = vmul.f32 %v689, 0.01
  %v878 = vmul.f32 %v692, 0.01
  %v879 = vmul.f32 %v697, 0.01
  %v880 = vmul.f32 %v700, 0.01
  %v881 = vmul.f32 %v705, 0.01
  %v882 = vmul.f32 %v708, 0.01
  %v883 = vmul.f32 %v713, 0.01
  %v884 = vmul.f32 %v716, 0.01
  %v885 = vmul.f32 %v721, 0.01
  %v886 = vmul.f32 %v724, 0.01
  %v887 = vmul.f32 %v729, 0.01
  %v888 = vmul.f32 %v732, 0.01
  %v889 = vmul.f32 %v737, 0.01
  %v890 = vmul.f32 %v740, 0.01
  %v891 = vmul.f32 %v745, 0.01
  %v892 = vmul.f32 %v748, 0.01
  %v893 = vmul.f32 %v753, 0.01
  %v894 = vmul.f32 %v756, 0.01
  %v895 = vmul.f32 %v761, 0.01
  %v896 = vmul.f32 %v764, 0.01
  %v897 = vmul.f32 %v769, 0.01
  %v898 = vmul.f32 %v772, 0.01
  %v899 = vmul.f32 %v777, 0.01
  %v900 = vmul.f32 %v780, 0.01
  %v901 = vmul.f32 %v785, 0.01
  %v902 = vmul.f32 %v788, 0.01
  %v903 = vmul.f32 %v793, 0.01
  %v904 = vmul.f32 %v796, 0.01
  %v905 = vmul.f32 %v801, 0.01
  %v906 = vmul.f32 %v804, 0.01
  %v907 = vmul.f32 %v809, 0.01
  %v908 = vmul.f32 %v812, 0.01
  %v909 = vmul.f32 %v817, 0.01
  %v910 = vmul.f32 %v820, 0.01
  %v911 = vmul.f32 %v825, 0.01
  %v912 = vmul.f32 %v828, 0.01
  %v913 = vmul.f32 %v833, 0.01
  %v914 = vmul.f32 %v836, 0.01
  %v915 = vsel %vm839, %v689, %v877
  %v916 = vsel %vm840, %v692, %v878
  %v917 = vsel %vm841, %v697, %v879
  %v918 = vsel %vm842, %v700, %v880
  %v919 = vsel %vm843, %v705, %v881
  %v920 = vsel %vm844, %v708, %v882
  %v921 = vsel %vm845, %v713, %v883
  %v922 = vsel %vm846, %v716, %v884
  %v923 = vsel %vm847, %v721, %v885
  %v924 = vsel %vm848, %v724, %v886
  %v925 = vsel %vm849, %v729, %v887
  %v926 = vsel %vm850, %v732, %v888
  %v927 = vsel %vm851, %v737, %v889
  %v928 = vsel %vm852, %v740, %v890
  %v929 = vsel %vm853, %v745, %v891
  %v930 = vsel %vm854, %v748, %v892
  %v931 = vsel %vm855, %v753, %v893
  %v932 = vsel %vm856, %v756, %v894
  %v933 = vsel %vm857, %v761, %v895
  %v934 = vsel %vm858, %v764, %v896
  %v935 = vsel %vm859, %v769, %v897
  %v936 = vsel %vm860, %v772, %v898
  %v937 = vsel %vm861, %v777, %v899
  %v938 = vsel %vm862, %v780, %v900
  %v939 = vsel %vm863, %v785, %v901
  %v940 = vsel %vm864, %v788, %v902
  %v941 = vsel %vm865, %v793, %v903
  %v942 = vsel %vm866, %v796, %v904
  %v943 = vsel %vm867, %v801, %v905
  %v944 = vsel %vm868, %v804, %v906
  %v945 = vsel %vm869, %v809, %v907
  %v946 = vsel %vm870, %v812, %v908
  %v947 = vsel %vm871, %v817, %v909
  %v948 = vsel %vm872, %v820, %v910
  %v949 = vsel %vm873, %v825, %v911
  %v950 = vsel %vm874, %v828, %v912
  %v951 = vsel %vm875, %v833, %v913
  %v952 = vsel %vm876, %v836, %v914
  %v953 = vpack.c.bf16 %v916, %v915
  %v954 = vpack.c.bf16 %v918, %v917
  %v955 = vpack.c.bf16 %v920, %v919
  %v956 = vpack.c.bf16 %v922, %v921
  %v957 = vpack.c.bf16 %v924, %v923
  %v958 = vpack.c.bf16 %v926, %v925
  %v959 = vpack.c.bf16 %v928, %v927
  %v960 = vpack.c.bf16 %v930, %v929
  %v961 = vpack.c.bf16 %v932, %v931
  %v962 = vpack.c.bf16 %v934, %v933
  %v963 = vpack.c.bf16 %v936, %v935
  %v964 = vpack.c.bf16 %v938, %v937
  %v965 = vpack.c.bf16 %v940, %v939
  %v966 = vpack.c.bf16 %v942, %v941
  %v967 = vpack.c.bf16 %v944, %v943
  %v968 = vpack.c.bf16 %v946, %v945
  %v969 = vpack.c.bf16 %v948, %v947
  %v970 = vpack.c.bf16 %v950, %v949
  %v971 = vpack.c.bf16 %v952, %v951
  %v972 = vld [vmem:[%s5] sm:$0xf]
  %v973 = vld [vmem:[%s5 + $0x4] sm:$0xf]
  %v974 = vld [vmem:[%s5 + $0x8] sm:$0xf]
  %v975 = vld [vmem:[%s5 + $0xc] sm:$0xf]
  %v976 = vld [vmem:[%s5 + $0x10] sm:$0xf]
  %v977 = vld [vmem:[%s5 + $0x14] sm:$0xf]
  %v978 = vld [vmem:[%s5 + $0x18] sm:$0xf]
  %v979 = vld [vmem:[%s5 + $0x1c] sm:$0xf]
  %v980 = vld [vmem:[%s6] sm:$0x1]
  %v982 = vlaneseq
  %v983 = vshrl.u32 %v982, 7
  %v984 = vsub.s32 0, %v983
  %v985 = vrot.slane %v980, %v984
  %v995 = vunpack.c.l.b16 %v972
  %v996 = vunpack.c.l.b16 %v973
  %v997 = vunpack.c.l.b16 %v974
  %v998 = vunpack.c.l.b16 %v975
  %v999 = vunpack.c.l.b16 %v976
  %v1000 = vunpack.c.l.b16 %v977
  %v1001 = vunpack.c.l.b16 %v978
  %v1002 = vunpack.c.l.b16 %v979
  %v1003 = vpack.c.b16 %v996, %v995
  %v1004 = vpack.c.b16 %v998, %v997
  %v1005 = vpack.c.b16 %v1000, %v999
  %v1006 = vpack.c.b16 %v1002, %v1001
  %vm1011 = vcmask 523264
  %v1013 = vsel %vm1011, %v953, 0
  %v1016 = vsel %vm1011, %v954, 0
  %v1019 = vsel %vm1011, %v955, 0
  %v1022 = vsel %vm1011, %v956, 0
  %v1025 = vsel %vm1011, %v957, 0
  %v1028 = vsel %vm1011, %v958, 0
  %v1031 = vsel %vm1011, %v959, 0
  %v1034 = vsel %vm1011, %v960, 0
  %v1037 = vsel %vm1011, %v961, 0
  %v1040 = vsel %vm1011, %v962, 0
  %v1043 = vsel %vm1011, %v963, 0
  %v1046 = vsel %vm1011, %v964, 0
  %v1049 = vsel %vm1011, %v965, 0
  %v1052 = vsel %vm1011, %v966, 0
  %v1055 = vsel %vm1011, %v967, 0
  %v1058 = vsel %vm1011, %v968, 0
  %v1061 = vsel %vm1011, %v969, 0
  %v1064 = vsel %vm1011, %v970, 0
  %v1067 = vsel %vm1011, %v971, 0
  %1069 = vmatprep.subr.bf16.mxu0 0
  %1070 = vmatpush1.bf16.msra.mxu0 0
  %1071 = vmatprep.subr.bf16.mxu0 0
  %1072 = vmatpush1.bf16.msra.mxu0 0
  %1073 = vmatprep.subr.bf16.mxu0 0
  %1074 = vmatpush1.bf16.msra.mxu0 0
  %1075 = vmatprep.subr.bf16.mxu0 0
  %1076 = vmatpush1.bf16.msra.mxu0 0
  %1077 = vmatprep.subr.bf16.mxu0 0
  %1078 = vmatpush1.bf16.msra.mxu0 %v1006
  %1079 = vmatprep.subr.bf16.mxu0 0
  %1080 = vmatpush1.bf16.msra.mxu0 %v1005
  %1081 = vmatprep.subr.bf16.mxu0 0
  %1082 = vmatpush1.bf16.msra.mxu0 %v1004
  %1083 = vmatprep.subr.bf16.mxu0 0
  %1084 = vmatpush1.bf16.msra.mxu0 %v1003
  %1085 = vmatprep.subr.bf16.mxu0 0
  %1086 = vmatpush2.bf16.msra.mxu0 0
  %1087 = vmatprep.subr.bf16.mxu0 0
  %1088 = vmatpush2.bf16.msra.mxu0 0
  %1089 = vmatprep.subr.bf16.mxu0 0
  %1090 = vmatpush2.bf16.msra.mxu0 0
  %1091 = vmatprep.subr.bf16.mxu0 0
  %1092 = vmatpush2.bf16.msra.mxu0 0
  %1093 = vmatprep.subr.bf16.mxu0 0
  %1094 = vmatpush2.bf16.msra.mxu0 0
  %1095 = vmatprep.subr.bf16.mxu0 0
  %1096 = vmatpush2.bf16.msra.mxu0 0
  %1097 = vmatprep.subr.bf16.mxu0 0
  %1098 = vmatpush2.bf16.msra.mxu0 0
  %1099 = vmatprep.subr.bf16.mxu0 0
  %1100 = vmatpush2.bf16.msra.mxu0 0
  %1101 = vmatprep.mubr.bf16.mxu0 0
  %1102 = vmatmul.mubr.bf16.gmra.mxu0 %v1013
  %v1103 = vpop.f32.mrf.mxu0
  %v1104 = vadd.f32 %v985, %v1103
  %v1105 = vpop.f32.mrf.mxu0
  %v1106 = vpop.f32.mrf.mxu0
  %v1107 = vadd.f32 %v985, %v1106
  %v1108 = vpop.f32.mrf.mxu0
  %1109 = vmatprep.mubr.bf16.mxu0 0
  %1110 = vmatmul.mubr.bf16.gmra.mxu0 %v1016
  %v1111 = vpop.f32.mrf.mxu0
  %v1112 = vadd.f32 %v985, %v1111
  %v1113 = vpop.f32.mrf.mxu0
  %v1114 = vpop.f32.mrf.mxu0
  %v1115 = vadd.f32 %v985, %v1114
  %v1116 = vpop.f32.mrf.mxu0
  %1117 = vmatprep.mubr.bf16.mxu0 0
  %1118 = vmatmul.mubr.bf16.gmra.mxu0 %v1019
  %v1119 = vpop.f32.mrf.mxu0
  %v1120 = vadd.f32 %v985, %v1119
  %v1121 = vpop.f32.mrf.mxu0
  %v1122 = vpop.f32.mrf.mxu0
  %v1123 = vadd.f32 %v985, %v1122
  %v1124 = vpop.f32.mrf.mxu0
  %1125 = vmatprep.mubr.bf16.mxu0 0
  %1126 = vmatmul.mubr.bf16.gmra.mxu0 %v1022
  %v1127 = vpop.f32.mrf.mxu0
  %v1128 = vadd.f32 %v985, %v1127
  %v1129 = vpop.f32.mrf.mxu0
  %v1130 = vpop.f32.mrf.mxu0
  %v1131 = vadd.f32 %v985, %v1130
  %v1132 = vpop.f32.mrf.mxu0
  %1133 = vmatprep.mubr.bf16.mxu0 0
  %1134 = vmatmul.mubr.bf16.gmra.mxu0 %v1025
  %v1135 = vpop.f32.mrf.mxu0
  %v1136 = vadd.f32 %v985, %v1135
  %v1137 = vpop.f32.mrf.mxu0
  %v1138 = vpop.f32.mrf.mxu0
  %v1139 = vadd.f32 %v985, %v1138
  %v1140 = vpop.f32.mrf.mxu0
  %1141 = vmatprep.mubr.bf16.mxu0 0
  %1142 = vmatmul.mubr.bf16.gmra.mxu0 %v1028
  %v1143 = vpop.f32.mrf.mxu0
  %v1144 = vadd.f32 %v985, %v1143
  %v1145 = vpop.f32.mrf.mxu0
  %v1146 = vpop.f32.mrf.mxu0
  %v1147 = vadd.f32 %v985, %v1146
  %v1148 = vpop.f32.mrf.mxu0
  %1149 = vmatprep.mubr.bf16.mxu0 0
  %1150 = vmatmul.mubr.bf16.gmra.mxu0 %v1031
  %v1151 = vpop.f32.mrf.mxu0
  %v1152 = vadd.f32 %v985, %v1151
  %v1153 = vpop.f32.mrf.mxu0
  %v1154 = vpop.f32.mrf.mxu0
  %v1155 = vadd.f32 %v985, %v1154
  %v1156 = vpop.f32.mrf.mxu0
  %1157 = vmatprep.mubr.bf16.mxu0 0
  %1158 = vmatmul.mubr.bf16.gmra.mxu0 %v1034
  %v1159 = vpop.f32.mrf.mxu0
  %v1160 = vadd.f32 %v985, %v1159
  %v1161 = vpop.f32.mrf.mxu0
  %v1162 = vpop.f32.mrf.mxu0
  %v1163 = vadd.f32 %v985, %v1162
  %v1164 = vpop.f32.mrf.mxu0
  %1165 = vmatprep.mubr.bf16.mxu0 0
  %1166 = vmatmul.mubr.bf16.gmra.mxu0 %v1037
  %v1167 = vpop.f32.mrf.mxu0
  %v1168 = vadd.f32 %v985, %v1167
  %v1169 = vpop.f32.mrf.mxu0
  %v1170 = vpop.f32.mrf.mxu0
  %v1171 = vadd.f32 %v985, %v1170
  %v1172 = vpop.f32.mrf.mxu0
  %1173 = vmatprep.mubr.bf16.mxu0 0
  %1174 = vmatmul.mubr.bf16.gmra.mxu0 %v1040
  %v1175 = vpop.f32.mrf.mxu0
  %v1176 = vadd.f32 %v985, %v1175
  %v1177 = vpop.f32.mrf.mxu0
  %v1178 = vpop.f32.mrf.mxu0
  %v1179 = vadd.f32 %v985, %v1178
  %v1180 = vpop.f32.mrf.mxu0
  %1181 = vmatprep.mubr.bf16.mxu0 0
  %1182 = vmatmul.mubr.bf16.gmra.mxu0 %v1043
  %v1183 = vpop.f32.mrf.mxu0
  %v1184 = vadd.f32 %v985, %v1183
  %v1185 = vpop.f32.mrf.mxu0
  %v1186 = vpop.f32.mrf.mxu0
  %v1187 = vadd.f32 %v985, %v1186
  %v1188 = vpop.f32.mrf.mxu0
  %1189 = vmatprep.mubr.bf16.mxu0 0
  %1190 = vmatmul.mubr.bf16.gmra.mxu0 %v1046
  %v1191 = vpop.f32.mrf.mxu0
  %v1192 = vadd.f32 %v985, %v1191
  %v1193 = vpop.f32.mrf.mxu0
  %v1194 = vpop.f32.mrf.mxu0
  %v1195 = vadd.f32 %v985, %v1194
  %v1196 = vpop.f32.mrf.mxu0
  %1197 = vmatprep.mubr.bf16.mxu0 0
  %1198 = vmatmul.mubr.bf16.gmra.mxu0 %v1049
  %v1199 = vpop.f32.mrf.mxu0
  %v1200 = vadd.f32 %v985, %v1199
  %v1201 = vpop.f32.mrf.mxu0
  %v1202 = vpop.f32.mrf.mxu0
  %v1203 = vadd.f32 %v985, %v1202
  %v1204 = vpop.f32.mrf.mxu0
  %1205 = vmatprep.mubr.bf16.mxu0 0
  %1206 = vmatmul.mubr.bf16.gmra.mxu0 %v1052
  %v1207 = vpop.f32.mrf.mxu0
  %v1208 = vadd.f32 %v985, %v1207
  %v1209 = vpop.f32.mrf.mxu0
  %v1210 = vpop.f32.mrf.mxu0
  %v1211 = vadd.f32 %v985, %v1210
  %v1212 = vpop.f32.mrf.mxu0
  %1213 = vmatprep.mubr.bf16.mxu0 0
  %1214 = vmatmul.mubr.bf16.gmra.mxu0 %v1055
  %v1215 = vpop.f32.mrf.mxu0
  %v1216 = vadd.f32 %v985, %v1215
  %v1217 = vpop.f32.mrf.mxu0
  %v1218 = vpop.f32.mrf.mxu0
  %v1219 = vadd.f32 %v985, %v1218
  %v1220 = vpop.f32.mrf.mxu0
  %1221 = vmatprep.mubr.bf16.mxu0 0
  %1222 = vmatmul.mubr.bf16.gmra.mxu0 %v1058
  %v1223 = vpop.f32.mrf.mxu0
  %v1224 = vadd.f32 %v985, %v1223
  %v1225 = vpop.f32.mrf.mxu0
  %v1226 = vpop.f32.mrf.mxu0
  %v1227 = vadd.f32 %v985, %v1226
  %v1228 = vpop.f32.mrf.mxu0
  %1229 = vmatprep.mubr.bf16.mxu0 0
  %1230 = vmatmul.mubr.bf16.gmra.mxu0 %v1061
  %v1231 = vpop.f32.mrf.mxu0
  %v1232 = vadd.f32 %v985, %v1231
  %v1233 = vpop.f32.mrf.mxu0
  %v1234 = vpop.f32.mrf.mxu0
  %v1235 = vadd.f32 %v985, %v1234
  %v1236 = vpop.f32.mrf.mxu0
  %1237 = vmatprep.mubr.bf16.mxu0 0
  %1238 = vmatmul.mubr.bf16.gmra.mxu0 %v1064
  %v1239 = vpop.f32.mrf.mxu0
  %v1240 = vadd.f32 %v985, %v1239
  %v1241 = vpop.f32.mrf.mxu0
  %v1242 = vpop.f32.mrf.mxu0
  %v1243 = vadd.f32 %v985, %v1242
  %v1244 = vpop.f32.mrf.mxu0
  %1245 = vmatprep.mubr.bf16.mxu0 0
  %1246 = vmatmul.mubr.bf16.gmra.mxu0 %v1067
  %v1247 = vpop.f32.mrf.mxu0
  %v1248 = vadd.f32 %v985, %v1247
  %v1249 = vpop.f32.mrf.mxu0
  %v1250 = vpop.f32.mrf.mxu0
  %v1251 = vadd.f32 %v985, %v1250
  %v1252 = vpop.f32.mrf.mxu0
  %1253 = vdwg.mxu0
  %vm1254 = vcmp.gt.f32.partialorder %v1104, 0.0
  %vm1255 = vcmp.gt.f32.partialorder %v1107, 0.0
  %vm1256 = vcmp.gt.f32.partialorder %v1112, 0.0
  %vm1257 = vcmp.gt.f32.partialorder %v1115, 0.0
  %vm1258 = vcmp.gt.f32.partialorder %v1120, 0.0
  %vm1259 = vcmp.gt.f32.partialorder %v1123, 0.0
  %vm1260 = vcmp.gt.f32.partialorder %v1128, 0.0
  %vm1261 = vcmp.gt.f32.partialorder %v1131, 0.0
  %vm1262 = vcmp.gt.f32.partialorder %v1136, 0.0
  %vm1263 = vcmp.gt.f32.partialorder %v1139, 0.0
  %vm1264 = vcmp.gt.f32.partialorder %v1144, 0.0
  %vm1265 = vcmp.gt.f32.partialorder %v1147, 0.0
  %vm1266 = vcmp.gt.f32.partialorder %v1152, 0.0
  %vm1267 = vcmp.gt.f32.partialorder %v1155, 0.0
  %vm1268 = vcmp.gt.f32.partialorder %v1160, 0.0
  %vm1269 = vcmp.gt.f32.partialorder %v1163, 0.0
  %vm1270 = vcmp.gt.f32.partialorder %v1168, 0.0
  %vm1271 = vcmp.gt.f32.partialorder %v1171, 0.0
  %vm1272 = vcmp.gt.f32.partialorder %v1176, 0.0
  %vm1273 = vcmp.gt.f32.partialorder %v1179, 0.0
  %vm1274 = vcmp.gt.f32.partialorder %v1184, 0.0
  %vm1275 = vcmp.gt.f32.partialorder %v1187, 0.0
  %vm1276 = vcmp.gt.f32.partialorder %v1192, 0.0
  %vm1277 = vcmp.gt.f32.partialorder %v1195, 0.0
  %vm1278 = vcmp.gt.f32.partialorder %v1200, 0.0
  %vm1279 = vcmp.gt.f32.partialorder %v1203, 0.0
  %vm1280 = vcmp.gt.f32.partialorder %v1208, 0.0
  %vm1281 = vcmp.gt.f32.partialorder %v1211, 0.0
  %vm1282 = vcmp.gt.f32.partialorder %v1216, 0.0
  %vm1283 = vcmp.gt.f32.partialorder %v1219, 0.0
  %vm1284 = vcmp.gt.f32.partialorder %v1224, 0.0
  %vm1285 = vcmp.gt.f32.partialorder %v1227, 0.0
  %vm1286 = vcmp.gt.f32.partialorder %v1232, 0.0
  %vm1287 = vcmp.gt.f32.partialorder %v1235, 0.0
  %vm1288 = vcmp.gt.f32.partialorder %v1240, 0.0
  %vm1289 = vcmp.gt.f32.partialorder %v1243, 0.0
  %vm1290 = vcmp.gt.f32.partialorder %v1248, 0.0
  %vm1291 = vcmp.gt.f32.partialorder %v1251, 0.0
  %v1292 = vmul.f32 %v1104, 0.01
  %v1293 = vmul.f32 %v1107, 0.01
  %v1294 = vmul.f32 %v1112, 0.01
  %v1295 = vmul.f32 %v1115, 0.01
  %v1296 = vmul.f32 %v1120, 0.01
  %v1297 = vmul.f32 %v1123, 0.01
  %v1298 = vmul.f32 %v1128, 0.01
  %v1299 = vmul.f32 %v1131, 0.01
  %v1300 = vmul.f32 %v1136, 0.01
  %v1301 = vmul.f32 %v1139, 0.01
  %v1302 = vmul.f32 %v1144, 0.01
  %v1303 = vmul.f32 %v1147, 0.01
  %v1304 = vmul.f32 %v1152, 0.01
  %v1305 = vmul.f32 %v1155, 0.01
  %v1306 = vmul.f32 %v1160, 0.01
  %v1307 = vmul.f32 %v1163, 0.01
  %v1308 = vmul.f32 %v1168, 0.01
  %v1309 = vmul.f32 %v1171, 0.01
  %v1310 = vmul.f32 %v1176, 0.01
  %v1311 = vmul.f32 %v1179, 0.01
  %v1312 = vmul.f32 %v1184, 0.01
  %v1313 = vmul.f32 %v1187, 0.01
  %v1314 = vmul.f32 %v1192, 0.01
  %v1315 = vmul.f32 %v1195, 0.01
  %v1316 = vmul.f32 %v1200, 0.01
  %v1317 = vmul.f32 %v1203, 0.01
  %v1318 = vmul.f32 %v1208, 0.01
  %v1319 = vmul.f32 %v1211, 0.01
  %v1320 = vmul.f32 %v1216, 0.01
  %v1321 = vmul.f32 %v1219, 0.01
  %v1322 = vmul.f32 %v1224, 0.01
  %v1323 = vmul.f32 %v1227, 0.01
  %v1324 = vmul.f32 %v1232, 0.01
  %v1325 = vmul.f32 %v1235, 0.01
  %v1326 = vmul.f32 %v1240, 0.01
  %v1327 = vmul.f32 %v1243, 0.01
  %v1328 = vmul.f32 %v1248, 0.01
  %v1329 = vmul.f32 %v1251, 0.01
  %v1330 = vsel %vm1254, %v1104, %v1292
  %v1331 = vsel %vm1255, %v1107, %v1293
  %v1332 = vsel %vm1256, %v1112, %v1294
  %v1333 = vsel %vm1257, %v1115, %v1295
  %v1334 = vsel %vm1258, %v1120, %v1296
  %v1335 = vsel %vm1259, %v1123, %v1297
  %v1336 = vsel %vm1260, %v1128, %v1298
  %v1337 = vsel %vm1261, %v1131, %v1299
  %v1338 = vsel %vm1262, %v1136, %v1300
  %v1339 = vsel %vm1263, %v1139, %v1301
  %v1340 = vsel %vm1264, %v1144, %v1302
  %v1341 = vsel %vm1265, %v1147, %v1303
  %v1342 = vsel %vm1266, %v1152, %v1304
  %v1343 = vsel %vm1267, %v1155, %v1305
  %v1344 = vsel %vm1268, %v1160, %v1306
  %v1345 = vsel %vm1269, %v1163, %v1307
  %v1346 = vsel %vm1270, %v1168, %v1308
  %v1347 = vsel %vm1271, %v1171, %v1309
  %v1348 = vsel %vm1272, %v1176, %v1310
  %v1349 = vsel %vm1273, %v1179, %v1311
  %v1350 = vsel %vm1274, %v1184, %v1312
  %v1351 = vsel %vm1275, %v1187, %v1313
  %v1352 = vsel %vm1276, %v1192, %v1314
  %v1353 = vsel %vm1277, %v1195, %v1315
  %v1354 = vsel %vm1278, %v1200, %v1316
  %v1355 = vsel %vm1279, %v1203, %v1317
  %v1356 = vsel %vm1280, %v1208, %v1318
  %v1357 = vsel %vm1281, %v1211, %v1319
  %v1358 = vsel %vm1282, %v1216, %v1320
  %v1359 = vsel %vm1283, %v1219, %v1321
  %v1360 = vsel %vm1284, %v1224, %v1322
  %v1361 = vsel %vm1285, %v1227, %v1323
  %v1362 = vsel %vm1286, %v1232, %v1324
  %v1363 = vsel %vm1287, %v1235, %v1325
  %v1364 = vsel %vm1288, %v1240, %v1326
  %v1365 = vsel %vm1289, %v1243, %v1327
  %v1366 = vsel %vm1290, %v1248, %v1328
  %v1367 = vsel %vm1291, %v1251, %v1329
  %v1368 = vpack.c.bf16 %v1331, %v1330
  %v1369 = vpack.c.bf16 %v1333, %v1332
  %v1370 = vpack.c.bf16 %v1335, %v1334
  %v1371 = vpack.c.bf16 %v1337, %v1336
  %v1372 = vpack.c.bf16 %v1339, %v1338
  %v1373 = vpack.c.bf16 %v1341, %v1340
  %v1374 = vpack.c.bf16 %v1343, %v1342
  %v1375 = vpack.c.bf16 %v1345, %v1344
  %v1376 = vpack.c.bf16 %v1347, %v1346
  %v1377 = vpack.c.bf16 %v1349, %v1348
  %v1378 = vpack.c.bf16 %v1351, %v1350
  %v1379 = vpack.c.bf16 %v1353, %v1352
  %v1380 = vpack.c.bf16 %v1355, %v1354
  %v1381 = vpack.c.bf16 %v1357, %v1356
  %v1382 = vpack.c.bf16 %v1359, %v1358
  %v1383 = vpack.c.bf16 %v1361, %v1360
  %v1384 = vpack.c.bf16 %v1363, %v1362
  %v1385 = vpack.c.bf16 %v1365, %v1364
  %v1386 = vpack.c.bf16 %v1367, %v1366
  %v1387 = vld [vmem:[%s13] sm:$0xf]
  %v1388 = vld [vmem:[%s13 + $0x4] sm:$0xf]
  %v1389 = vld [vmem:[%s13 + $0x8] sm:$0xf]
  %v1390 = vld [vmem:[%s13 + $0xc] sm:$0xf]
  %v1391 = vld [vmem:[%s13 + $0x10] sm:$0xf]
  %v1392 = vld [vmem:[%s13 + $0x14] sm:$0xf]
  %v1393 = vld [vmem:[%s13 + $0x18] sm:$0xf]
  %v1394 = vld [vmem:[%s13 + $0x1c] sm:$0xf]
  %v1395 = vld [vmem:[%s13 + $0x20] sm:$0xf]
  %v1396 = vld [vmem:[%s13 + $0x24] sm:$0xf]
  %v1397 = vld [vmem:[%s13 + $0x28] sm:$0xf]
  %v1398 = vld [vmem:[%s13 + $0x2c] sm:$0xf]
  %v1399 = vld [vmem:[%s13 + $0x30] sm:$0xf]
  %v1400 = vld [vmem:[%s13 + $0x34] sm:$0xf]
  %v1401 = vld [vmem:[%s13 + $0x38] sm:$0xf]
  %v1402 = vld [vmem:[%s13 + $0x3c] sm:$0xf]
  %v1403 = vld [vmem:[%s14] sm:$0x1]
  %v1405 = vlaneseq
  %v1406 = vshrl.u32 %v1405, 7
  %v1407 = vsub.s32 0, %v1406
  %v1408 = vrot.slane %v1403, %v1407
  %v1426 = vunpack.c.l.b16 %v1387
  %v1427 = vunpack.c.l.b16 %v1388
  %v1428 = vunpack.c.l.b16 %v1389
  %v1429 = vunpack.c.l.b16 %v1390
  %v1430 = vunpack.c.l.b16 %v1391
  %v1431 = vunpack.c.l.b16 %v1392
  %v1432 = vunpack.c.l.b16 %v1393
  %v1433 = vunpack.c.l.b16 %v1394
  %v1434 = vunpack.c.l.b16 %v1395
  %v1435 = vunpack.c.l.b16 %v1396
  %v1436 = vunpack.c.l.b16 %v1397
  %v1437 = vunpack.c.l.b16 %v1398
  %v1438 = vunpack.c.l.b16 %v1399
  %v1439 = vunpack.c.l.b16 %v1400
  %v1440 = vunpack.c.l.b16 %v1401
  %v1441 = vunpack.c.l.b16 %v1402
  %v1442 = vpack.c.b16 %v1427, %v1426
  %v1443 = vpack.c.b16 %v1429, %v1428
  %v1444 = vpack.c.b16 %v1431, %v1430
  %v1445 = vpack.c.b16 %v1433, %v1432
  %v1446 = vpack.c.b16 %v1435, %v1434
  %v1447 = vpack.c.b16 %v1437, %v1436
  %v1448 = vpack.c.b16 %v1439, %v1438
  %v1449 = vpack.c.b16 %v1441, %v1440
  %1458 = vmatprep.subr.bf16.mxu0 0
  %1459 = vmatpush1.bf16.msra.mxu0 %v1449
  %1460 = vmatprep.subr.bf16.mxu0 0
  %1461 = vmatpush1.bf16.msra.mxu0 %v1448
  %1462 = vmatprep.subr.bf16.mxu0 0
  %1463 = vmatpush1.bf16.msra.mxu0 %v1447
  %1464 = vmatprep.subr.bf16.mxu0 0
  %1465 = vmatpush1.bf16.msra.mxu0 %v1446
  %1466 = vmatprep.subr.bf16.mxu0 0
  %1467 = vmatpush1.bf16.msra.mxu0 %v1445
  %1468 = vmatprep.subr.bf16.mxu0 0
  %1469 = vmatpush1.bf16.msra.mxu0 %v1444
  %1470 = vmatprep.subr.bf16.mxu0 0
  %1471 = vmatpush1.bf16.msra.mxu0 %v1443
  %1472 = vmatprep.subr.bf16.mxu0 0
  %1473 = vmatpush1.bf16.msra.mxu0 %v1442
  %1474 = vmatprep.subr.bf16.mxu0 0
  %1475 = vmatpush2.bf16.msra.mxu0 0
  %1476 = vmatprep.subr.bf16.mxu0 0
  %1477 = vmatpush2.bf16.msra.mxu0 0
  %1478 = vmatprep.subr.bf16.mxu0 0
  %1479 = vmatpush2.bf16.msra.mxu0 0
  %1480 = vmatprep.subr.bf16.mxu0 0
  %1481 = vmatpush2.bf16.msra.mxu0 0
  %1482 = vmatprep.subr.bf16.mxu0 0
  %1483 = vmatpush2.bf16.msra.mxu0 0
  %1484 = vmatprep.subr.bf16.mxu0 0
  %1485 = vmatpush2.bf16.msra.mxu0 0
  %1486 = vmatprep.subr.bf16.mxu0 0
  %1487 = vmatpush2.bf16.msra.mxu0 0
  %1488 = vmatprep.subr.bf16.mxu0 0
  %1489 = vmatpush2.bf16.msra.mxu0 0
  %1490 = vmatprep.mubr.bf16.mxu0 0
  %1491 = vmatmul.mubr.bf16.gmra.mxu0 %v1368
  %v1492 = vpop.f32.mrf.mxu0
  %v1493 = vadd.f32 %v1408, %v1492
  %v1494 = vpop.f32.mrf.mxu0
  %v1495 = vpop.f32.mrf.mxu0
  %v1496 = vadd.f32 %v1408, %v1495
  %v1497 = vpop.f32.mrf.mxu0
  %1498 = vmatprep.mubr.bf16.mxu0 0
  %1499 = vmatmul.mubr.bf16.gmra.mxu0 %v1369
  %v1500 = vpop.f32.mrf.mxu0
  %v1501 = vadd.f32 %v1408, %v1500
  %v1502 = vpop.f32.mrf.mxu0
  %v1503 = vpop.f32.mrf.mxu0
  %v1504 = vadd.f32 %v1408, %v1503
  %v1505 = vpop.f32.mrf.mxu0
  %1506 = vmatprep.mubr.bf16.mxu0 0
  %1507 = vmatmul.mubr.bf16.gmra.mxu0 %v1370
  %v1508 = vpop.f32.mrf.mxu0
  %v1509 = vadd.f32 %v1408, %v1508
  %v1510 = vpop.f32.mrf.mxu0
  %v1511 = vpop.f32.mrf.mxu0
  %v1512 = vadd.f32 %v1408, %v1511
  %v1513 = vpop.f32.mrf.mxu0
  %1514 = vmatprep.mubr.bf16.mxu0 0
  %1515 = vmatmul.mubr.bf16.gmra.mxu0 %v1371
  %v1516 = vpop.f32.mrf.mxu0
  %v1517 = vadd.f32 %v1408, %v1516
  %v1518 = vpop.f32.mrf.mxu0
  %v1519 = vpop.f32.mrf.mxu0
  %v1520 = vadd.f32 %v1408, %v1519
  %v1521 = vpop.f32.mrf.mxu0
  %1522 = vmatprep.mubr.bf16.mxu0 0
  %1523 = vmatmul.mubr.bf16.gmra.mxu0 %v1372
  %v1524 = vpop.f32.mrf.mxu0
  %v1525 = vadd.f32 %v1408, %v1524
  %v1526 = vpop.f32.mrf.mxu0
  %v1527 = vpop.f32.mrf.mxu0
  %v1528 = vadd.f32 %v1408, %v1527
  %v1529 = vpop.f32.mrf.mxu0
  %1530 = vmatprep.mubr.bf16.mxu0 0
  %1531 = vmatmul.mubr.bf16.gmra.mxu0 %v1373
  %v1532 = vpop.f32.mrf.mxu0
  %v1533 = vadd.f32 %v1408, %v1532
  %v1534 = vpop.f32.mrf.mxu0
  %v1535 = vpop.f32.mrf.mxu0
  %v1536 = vadd.f32 %v1408, %v1535
  %v1537 = vpop.f32.mrf.mxu0
  %1538 = vmatprep.mubr.bf16.mxu0 0
  %1539 = vmatmul.mubr.bf16.gmra.mxu0 %v1374
  %v1540 = vpop.f32.mrf.mxu0
  %v1541 = vadd.f32 %v1408, %v1540
  %v1542 = vpop.f32.mrf.mxu0
  %v1543 = vpop.f32.mrf.mxu0
  %v1544 = vadd.f32 %v1408, %v1543
  %v1545 = vpop.f32.mrf.mxu0
  %1546 = vmatprep.mubr.bf16.mxu0 0
  %1547 = vmatmul.mubr.bf16.gmra.mxu0 %v1375
  %v1548 = vpop.f32.mrf.mxu0
  %v1549 = vadd.f32 %v1408, %v1548
  %v1550 = vpop.f32.mrf.mxu0
  %v1551 = vpop.f32.mrf.mxu0
  %v1552 = vadd.f32 %v1408, %v1551
  %v1553 = vpop.f32.mrf.mxu0
  %1554 = vmatprep.mubr.bf16.mxu0 0
  %1555 = vmatmul.mubr.bf16.gmra.mxu0 %v1376
  %v1556 = vpop.f32.mrf.mxu0
  %v1557 = vadd.f32 %v1408, %v1556
  %v1558 = vpop.f32.mrf.mxu0
  %v1559 = vpop.f32.mrf.mxu0
  %v1560 = vadd.f32 %v1408, %v1559
  %v1561 = vpop.f32.mrf.mxu0
  %1562 = vmatprep.mubr.bf16.mxu0 0
  %1563 = vmatmul.mubr.bf16.gmra.mxu0 %v1377
  %v1564 = vpop.f32.mrf.mxu0
  %v1565 = vadd.f32 %v1408, %v1564
  %v1566 = vpop.f32.mrf.mxu0
  %v1567 = vpop.f32.mrf.mxu0
  %v1568 = vadd.f32 %v1408, %v1567
  %v1569 = vpop.f32.mrf.mxu0
  %1570 = vmatprep.mubr.bf16.mxu0 0
  %1571 = vmatmul.mubr.bf16.gmra.mxu0 %v1378
  %v1572 = vpop.f32.mrf.mxu0
  %v1573 = vadd.f32 %v1408, %v1572
  %v1574 = vpop.f32.mrf.mxu0
  %v1575 = vpop.f32.mrf.mxu0
  %v1576 = vadd.f32 %v1408, %v1575
  %v1577 = vpop.f32.mrf.mxu0
  %1578 = vmatprep.mubr.bf16.mxu0 0
  %1579 = vmatmul.mubr.bf16.gmra.mxu0 %v1379
  %v1580 = vpop.f32.mrf.mxu0
  %v1581 = vadd.f32 %v1408, %v1580
  %v1582 = vpop.f32.mrf.mxu0
  %v1583 = vpop.f32.mrf.mxu0
  %v1584 = vadd.f32 %v1408, %v1583
  %v1585 = vpop.f32.mrf.mxu0
  %1586 = vmatprep.mubr.bf16.mxu0 0
  %1587 = vmatmul.mubr.bf16.gmra.mxu0 %v1380
  %v1588 = vpop.f32.mrf.mxu0
  %v1589 = vadd.f32 %v1408, %v1588
  %v1590 = vpop.f32.mrf.mxu0
  %v1591 = vpop.f32.mrf.mxu0
  %v1592 = vadd.f32 %v1408, %v1591
  %v1593 = vpop.f32.mrf.mxu0
  %1594 = vmatprep.mubr.bf16.mxu0 0
  %1595 = vmatmul.mubr.bf16.gmra.mxu0 %v1381
  %v1596 = vpop.f32.mrf.mxu0
  %v1597 = vadd.f32 %v1408, %v1596
  %v1598 = vpop.f32.mrf.mxu0
  %v1599 = vpop.f32.mrf.mxu0
  %v1600 = vadd.f32 %v1408, %v1599
  %v1601 = vpop.f32.mrf.mxu0
  %1602 = vmatprep.mubr.bf16.mxu0 0
  %1603 = vmatmul.mubr.bf16.gmra.mxu0 %v1382
  %v1604 = vpop.f32.mrf.mxu0
  %v1605 = vadd.f32 %v1408, %v1604
  %v1606 = vpop.f32.mrf.mxu0
  %v1607 = vpop.f32.mrf.mxu0
  %v1608 = vadd.f32 %v1408, %v1607
  %v1609 = vpop.f32.mrf.mxu0
  %1610 = vmatprep.mubr.bf16.mxu0 0
  %1611 = vmatmul.mubr.bf16.gmra.mxu0 %v1383
  %v1612 = vpop.f32.mrf.mxu0
  %v1613 = vadd.f32 %v1408, %v1612
  %v1614 = vpop.f32.mrf.mxu0
  %v1615 = vpop.f32.mrf.mxu0
  %v1616 = vadd.f32 %v1408, %v1615
  %v1617 = vpop.f32.mrf.mxu0
  %1618 = vmatprep.mubr.bf16.mxu0 0
  %1619 = vmatmul.mubr.bf16.gmra.mxu0 %v1384
  %v1620 = vpop.f32.mrf.mxu0
  %v1621 = vadd.f32 %v1408, %v1620
  %v1622 = vpop.f32.mrf.mxu0
  %v1623 = vpop.f32.mrf.mxu0
  %v1624 = vadd.f32 %v1408, %v1623
  %v1625 = vpop.f32.mrf.mxu0
  %1626 = vmatprep.mubr.bf16.mxu0 0
  %1627 = vmatmul.mubr.bf16.gmra.mxu0 %v1385
  %v1628 = vpop.f32.mrf.mxu0
  %v1629 = vadd.f32 %v1408, %v1628
  %v1630 = vpop.f32.mrf.mxu0
  %v1631 = vpop.f32.mrf.mxu0
  %v1632 = vadd.f32 %v1408, %v1631
  %v1633 = vpop.f32.mrf.mxu0
  %1634 = vmatprep.mubr.bf16.mxu0 0
  %1635 = vmatmul.mubr.bf16.gmra.mxu0 %v1386
  %v1636 = vpop.f32.mrf.mxu0
  %v1637 = vadd.f32 %v1408, %v1636
  %v1638 = vpop.f32.mrf.mxu0
  %v1639 = vpop.f32.mrf.mxu0
  %v1640 = vadd.f32 %v1408, %v1639
  %v1641 = vpop.f32.mrf.mxu0
  %1642 = vdwg.mxu0
  %v1643 = vld [vmem:[%s7] sm:$0xf]
  %v1644 = vld [vmem:[%s7 + $0x4] sm:$0xf]
  %v1645 = vld [vmem:[%s7 + $0x8] sm:$0xf]
  %v1646 = vld [vmem:[%s7 + $0xc] sm:$0xf]
  %v1647 = vld [vmem:[%s7 + $0x10] sm:$0xf]
  %v1648 = vld [vmem:[%s7 + $0x14] sm:$0xf]
  %v1649 = vld [vmem:[%s7 + $0x18] sm:$0xf]
  %v1650 = vld [vmem:[%s7 + $0x1c] sm:$0xf]
  %v1651 = vld [vmem:[%s7 + $0x20] sm:$0xf]
  %v1652 = vld [vmem:[%s7 + $0x24] sm:$0xf]
  %v1653 = vld [vmem:[%s7 + $0x28] sm:$0xf]
  %v1654 = vld [vmem:[%s7 + $0x2c] sm:$0xf]
  %v1655 = vld [vmem:[%s7 + $0x30] sm:$0xf]
  %v1656 = vld [vmem:[%s7 + $0x34] sm:$0xf]
  %v1657 = vld [vmem:[%s7 + $0x38] sm:$0xf]
  %v1658 = vld [vmem:[%s7 + $0x3c] sm:$0xf]
  %v1659 = vld [vmem:[%s8] sm:$0x1]
  %v1661 = vlaneseq
  %v1662 = vshrl.u32 %v1661, 7
  %v1663 = vsub.s32 0, %v1662
  %v1664 = vrot.slane %v1659, %v1663
  %v1682 = vunpack.c.l.b16 %v1643
  %v1683 = vunpack.c.l.b16 %v1644
  %v1684 = vunpack.c.l.b16 %v1645
  %v1685 = vunpack.c.l.b16 %v1646
  %v1686 = vunpack.c.l.b16 %v1647
  %v1687 = vunpack.c.l.b16 %v1648
  %v1688 = vunpack.c.l.b16 %v1649
  %v1689 = vunpack.c.l.b16 %v1650
  %v1690 = vunpack.c.l.b16 %v1651
  %v1691 = vunpack.c.l.b16 %v1652
  %v1692 = vunpack.c.l.b16 %v1653
  %v1693 = vunpack.c.l.b16 %v1654
  %v1694 = vunpack.c.l.b16 %v1655
  %v1695 = vunpack.c.l.b16 %v1656
  %v1696 = vunpack.c.l.b16 %v1657
  %v1697 = vunpack.c.l.b16 %v1658
  %v1698 = vpack.c.b16 %v1683, %v1682
  %v1699 = vpack.c.b16 %v1685, %v1684
  %v1700 = vpack.c.b16 %v1687, %v1686
  %v1701 = vpack.c.b16 %v1689, %v1688
  %v1702 = vpack.c.b16 %v1691, %v1690
  %v1703 = vpack.c.b16 %v1693, %v1692
  %v1704 = vpack.c.b16 %v1695, %v1694
  %v1705 = vpack.c.b16 %v1697, %v1696
  %1714 = vmatprep.subr.bf16.mxu0 0
  %1715 = vmatpush1.bf16.msra.mxu0 %v1705
  %1716 = vmatprep.subr.bf16.mxu0 0
  %1717 = vmatpush1.bf16.msra.mxu0 %v1704
  %1718 = vmatprep.subr.bf16.mxu0 0
  %1719 = vmatpush1.bf16.msra.mxu0 %v1703
  %1720 = vmatprep.subr.bf16.mxu0 0
  %1721 = vmatpush1.bf16.msra.mxu0 %v1702
  %1722 = vmatprep.subr.bf16.mxu0 0
  %1723 = vmatpush1.bf16.msra.mxu0 %v1701
  %1724 = vmatprep.subr.bf16.mxu0 0
  %1725 = vmatpush1.bf16.msra.mxu0 %v1700
  %1726 = vmatprep.subr.bf16.mxu0 0
  %1727 = vmatpush1.bf16.msra.mxu0 %v1699
  %1728 = vmatprep.subr.bf16.mxu0 0
  %1729 = vmatpush1.bf16.msra.mxu0 %v1698
  %1730 = vmatprep.subr.bf16.mxu0 0
  %1731 = vmatpush2.bf16.msra.mxu0 0
  %1732 = vmatprep.subr.bf16.mxu0 0
  %1733 = vmatpush2.bf16.msra.mxu0 0
  %1734 = vmatprep.subr.bf16.mxu0 0
  %1735 = vmatpush2.bf16.msra.mxu0 0
  %1736 = vmatprep.subr.bf16.mxu0 0
  %1737 = vmatpush2.bf16.msra.mxu0 0
  %1738 = vmatprep.subr.bf16.mxu0 0
  %1739 = vmatpush2.bf16.msra.mxu0 0
  %1740 = vmatprep.subr.bf16.mxu0 0
  %1741 = vmatpush2.bf16.msra.mxu0 0
  %1742 = vmatprep.subr.bf16.mxu0 0
  %1743 = vmatpush2.bf16.msra.mxu0 0
  %1744 = vmatprep.subr.bf16.mxu0 0
  %1745 = vmatpush2.bf16.msra.mxu0 0
  %1746 = vmatprep.mubr.bf16.mxu0 0
  %1747 = vmatmul.mubr.bf16.gmra.mxu0 %v1368
  %v1748 = vpop.f32.mrf.mxu0
  %v1749 = vadd.f32 %v1664, %v1748
  %v1750 = vpop.f32.mrf.mxu0
  %v1751 = vpop.f32.mrf.mxu0
  %v1752 = vadd.f32 %v1664, %v1751
  %v1753 = vpop.f32.mrf.mxu0
  %1754 = vmatprep.mubr.bf16.mxu0 0
  %1755 = vmatmul.mubr.bf16.gmra.mxu0 %v1369
  %v1756 = vpop.f32.mrf.mxu0
  %v1757 = vadd.f32 %v1664, %v1756
  %v1758 = vpop.f32.mrf.mxu0
  %v1759 = vpop.f32.mrf.mxu0
  %v1760 = vadd.f32 %v1664, %v1759
  %v1761 = vpop.f32.mrf.mxu0
  %1762 = vmatprep.mubr.bf16.mxu0 0
  %1763 = vmatmul.mubr.bf16.gmra.mxu0 %v1370
  %v1764 = vpop.f32.mrf.mxu0
  %v1765 = vadd.f32 %v1664, %v1764
  %v1766 = vpop.f32.mrf.mxu0
  %v1767 = vpop.f32.mrf.mxu0
  %v1768 = vadd.f32 %v1664, %v1767
  %v1769 = vpop.f32.mrf.mxu0
  %1770 = vmatprep.mubr.bf16.mxu0 0
  %1771 = vmatmul.mubr.bf16.gmra.mxu0 %v1371
  %v1772 = vpop.f32.mrf.mxu0
  %v1773 = vadd.f32 %v1664, %v1772
  %v1774 = vpop.f32.mrf.mxu0
  %v1775 = vpop.f32.mrf.mxu0
  %v1776 = vadd.f32 %v1664, %v1775
  %v1777 = vpop.f32.mrf.mxu0
  %1778 = vmatprep.mubr.bf16.mxu0 0
  %1779 = vmatmul.mubr.bf16.gmra.mxu0 %v1372
  %v1780 = vpop.f32.mrf.mxu0
  %v1781 = vadd.f32 %v1664, %v1780
  %v1782 = vpop.f32.mrf.mxu0
  %v1783 = vpop.f32.mrf.mxu0
  %v1784 = vadd.f32 %v1664, %v1783
  %v1785 = vpop.f32.mrf.mxu0
  %1786 = vmatprep.mubr.bf16.mxu0 0
  %1787 = vmatmul.mubr.bf16.gmra.mxu0 %v1373
  %v1788 = vpop.f32.mrf.mxu0
  %v1789 = vadd.f32 %v1664, %v1788
  %v1790 = vpop.f32.mrf.mxu0
  %v1791 = vpop.f32.mrf.mxu0
  %v1792 = vadd.f32 %v1664, %v1791
  %v1793 = vpop.f32.mrf.mxu0
  %1794 = vmatprep.mubr.bf16.mxu0 0
  %1795 = vmatmul.mubr.bf16.gmra.mxu0 %v1374
  %v1796 = vpop.f32.mrf.mxu0
  %v1797 = vadd.f32 %v1664, %v1796
  %v1798 = vpop.f32.mrf.mxu0
  %v1799 = vpop.f32.mrf.mxu0
  %v1800 = vadd.f32 %v1664, %v1799
  %v1801 = vpop.f32.mrf.mxu0
  %1802 = vmatprep.mubr.bf16.mxu0 0
  %1803 = vmatmul.mubr.bf16.gmra.mxu0 %v1375
  %v1804 = vpop.f32.mrf.mxu0
  %v1805 = vadd.f32 %v1664, %v1804
  %v1806 = vpop.f32.mrf.mxu0
  %v1807 = vpop.f32.mrf.mxu0
  %v1808 = vadd.f32 %v1664, %v1807
  %v1809 = vpop.f32.mrf.mxu0
  %1810 = vmatprep.mubr.bf16.mxu0 0
  %1811 = vmatmul.mubr.bf16.gmra.mxu0 %v1376
  %v1812 = vpop.f32.mrf.mxu0
  %v1813 = vadd.f32 %v1664, %v1812
  %v1814 = vpop.f32.mrf.mxu0
  %v1815 = vpop.f32.mrf.mxu0
  %v1816 = vadd.f32 %v1664, %v1815
  %v1817 = vpop.f32.mrf.mxu0
  %1818 = vmatprep.mubr.bf16.mxu0 0
  %1819 = vmatmul.mubr.bf16.gmra.mxu0 %v1377
  %v1820 = vpop.f32.mrf.mxu0
  %v1821 = vadd.f32 %v1664, %v1820
  %v1822 = vpop.f32.mrf.mxu0
  %v1823 = vpop.f32.mrf.mxu0
  %v1824 = vadd.f32 %v1664, %v1823
  %v1825 = vpop.f32.mrf.mxu0
  %1826 = vmatprep.mubr.bf16.mxu0 0
  %1827 = vmatmul.mubr.bf16.gmra.mxu0 %v1378
  %v1828 = vpop.f32.mrf.mxu0
  %v1829 = vadd.f32 %v1664, %v1828
  %v1830 = vpop.f32.mrf.mxu0
  %v1831 = vpop.f32.mrf.mxu0
  %v1832 = vadd.f32 %v1664, %v1831
  %v1833 = vpop.f32.mrf.mxu0
  %1834 = vmatprep.mubr.bf16.mxu0 0
  %1835 = vmatmul.mubr.bf16.gmra.mxu0 %v1379
  %v1836 = vpop.f32.mrf.mxu0
  %v1837 = vadd.f32 %v1664, %v1836
  %v1838 = vpop.f32.mrf.mxu0
  %v1839 = vpop.f32.mrf.mxu0
  %v1840 = vadd.f32 %v1664, %v1839
  %v1841 = vpop.f32.mrf.mxu0
  %1842 = vmatprep.mubr.bf16.mxu0 0
  %1843 = vmatmul.mubr.bf16.gmra.mxu0 %v1380
  %v1844 = vpop.f32.mrf.mxu0
  %v1845 = vadd.f32 %v1664, %v1844
  %v1846 = vpop.f32.mrf.mxu0
  %v1847 = vpop.f32.mrf.mxu0
  %v1848 = vadd.f32 %v1664, %v1847
  %v1849 = vpop.f32.mrf.mxu0
  %1850 = vmatprep.mubr.bf16.mxu0 0
  %1851 = vmatmul.mubr.bf16.gmra.mxu0 %v1381
  %v1852 = vpop.f32.mrf.mxu0
  %v1853 = vadd.f32 %v1664, %v1852
  %v1854 = vpop.f32.mrf.mxu0
  %v1855 = vpop.f32.mrf.mxu0
  %v1856 = vadd.f32 %v1664, %v1855
  %v1857 = vpop.f32.mrf.mxu0
  %1858 = vmatprep.mubr.bf16.mxu0 0
  %1859 = vmatmul.mubr.bf16.gmra.mxu0 %v1382
  %v1860 = vpop.f32.mrf.mxu0
  %v1861 = vadd.f32 %v1664, %v1860
  %v1862 = vpop.f32.mrf.mxu0
  %v1863 = vpop.f32.mrf.mxu0
  %v1864 = vadd.f32 %v1664, %v1863
  %v1865 = vpop.f32.mrf.mxu0
  %1866 = vmatprep.mubr.bf16.mxu0 0
  %1867 = vmatmul.mubr.bf16.gmra.mxu0 %v1383
  %v1868 = vpop.f32.mrf.mxu0
  %v1869 = vadd.f32 %v1664, %v1868
  %v1870 = vpop.f32.mrf.mxu0
  %v1871 = vpop.f32.mrf.mxu0
  %v1872 = vadd.f32 %v1664, %v1871
  %v1873 = vpop.f32.mrf.mxu0
  %1874 = vmatprep.mubr.bf16.mxu0 0
  %1875 = vmatmul.mubr.bf16.gmra.mxu0 %v1384
  %v1876 = vpop.f32.mrf.mxu0
  %v1877 = vadd.f32 %v1664, %v1876
  %v1878 = vpop.f32.mrf.mxu0
  %v1879 = vpop.f32.mrf.mxu0
  %v1880 = vadd.f32 %v1664, %v1879
  %v1881 = vpop.f32.mrf.mxu0
  %1882 = vmatprep.mubr.bf16.mxu0 0
  %1883 = vmatmul.mubr.bf16.gmra.mxu0 %v1385
  %v1884 = vpop.f32.mrf.mxu0
  %v1885 = vadd.f32 %v1664, %v1884
  %v1886 = vpop.f32.mrf.mxu0
  %v1887 = vpop.f32.mrf.mxu0
  %v1888 = vadd.f32 %v1664, %v1887
  %v1889 = vpop.f32.mrf.mxu0
  %1890 = vmatprep.mubr.bf16.mxu0 0
  %1891 = vmatmul.mubr.bf16.gmra.mxu0 %v1386
  %v1892 = vpop.f32.mrf.mxu0
  %v1893 = vadd.f32 %v1664, %v1892
  %v1894 = vpop.f32.mrf.mxu0
  %v1895 = vpop.f32.mrf.mxu0
  %v1896 = vadd.f32 %v1664, %v1895
  %v1897 = vpop.f32.mrf.mxu0
  %1898 = vdwg.mxu0
  %vm1899 = vcmp.gt.f32.partialorder %v1749, 0.0
  %vm1900 = vcmp.gt.f32.partialorder %v1752, 0.0
  %vm1901 = vcmp.gt.f32.partialorder %v1757, 0.0
  %vm1902 = vcmp.gt.f32.partialorder %v1760, 0.0
  %vm1903 = vcmp.gt.f32.partialorder %v1765, 0.0
  %vm1904 = vcmp.gt.f32.partialorder %v1768, 0.0
  %vm1905 = vcmp.gt.f32.partialorder %v1773, 0.0
  %vm1906 = vcmp.gt.f32.partialorder %v1776, 0.0
  %vm1907 = vcmp.gt.f32.partialorder %v1781, 0.0
  %vm1908 = vcmp.gt.f32.partialorder %v1784, 0.0
  %vm1909 = vcmp.gt.f32.partialorder %v1789, 0.0
  %vm1910 = vcmp.gt.f32.partialorder %v1792, 0.0
  %vm1911 = vcmp.gt.f32.partialorder %v1797, 0.0
  %vm1912 = vcmp.gt.f32.partialorder %v1800, 0.0
  %vm1913 = vcmp.gt.f32.partialorder %v1805, 0.0
  %vm1914 = vcmp.gt.f32.partialorder %v1808, 0.0
  %vm1915 = vcmp.gt.f32.partialorder %v1813, 0.0
  %vm1916 = vcmp.gt.f32.partialorder %v1816, 0.0
  %vm1917 = vcmp.gt.f32.partialorder %v1821, 0.0
  %vm1918 = vcmp.gt.f32.partialorder %v1824, 0.0
  %vm1919 = vcmp.gt.f32.partialorder %v1829, 0.0
  %vm1920 = vcmp.gt.f32.partialorder %v1832, 0.0
  %vm1921 = vcmp.gt.f32.partialorder %v1837, 0.0
  %vm1922 = vcmp.gt.f32.partialorder %v1840, 0.0
  %vm1923 = vcmp.gt.f32.partialorder %v1845, 0.0
  %vm1924 = vcmp.gt.f32.partialorder %v1848, 0.0
  %vm1925 = vcmp.gt.f32.partialorder %v1853, 0.0
  %vm1926 = vcmp.gt.f32.partialorder %v1856, 0.0
  %vm1927 = vcmp.gt.f32.partialorder %v1861, 0.0
  %vm1928 = vcmp.gt.f32.partialorder %v1864, 0.0
  %vm1929 = vcmp.gt.f32.partialorder %v1869, 0.0
  %vm1930 = vcmp.gt.f32.partialorder %v1872, 0.0
  %vm1931 = vcmp.gt.f32.partialorder %v1877, 0.0
  %vm1932 = vcmp.gt.f32.partialorder %v1880, 0.0
  %vm1933 = vcmp.gt.f32.partialorder %v1885, 0.0
  %vm1934 = vcmp.gt.f32.partialorder %v1888, 0.0
  %vm1935 = vcmp.gt.f32.partialorder %v1893, 0.0
  %vm1936 = vcmp.gt.f32.partialorder %v1896, 0.0
  %v1937 = vmul.f32 %v1749, 0.01
  %v1938 = vmul.f32 %v1752, 0.01
  %v1939 = vmul.f32 %v1757, 0.01
  %v1940 = vmul.f32 %v1760, 0.01
  %v1941 = vmul.f32 %v1765, 0.01
  %v1942 = vmul.f32 %v1768, 0.01
  %v1943 = vmul.f32 %v1773, 0.01
  %v1944 = vmul.f32 %v1776, 0.01
  %v1945 = vmul.f32 %v1781, 0.01
  %v1946 = vmul.f32 %v1784, 0.01
  %v1947 = vmul.f32 %v1789, 0.01
  %v1948 = vmul.f32 %v1792, 0.01
  %v1949 = vmul.f32 %v1797, 0.01
  %v1950 = vmul.f32 %v1800, 0.01
  %v1951 = vmul.f32 %v1805, 0.01
  %v1952 = vmul.f32 %v1808, 0.01
  %v1953 = vmul.f32 %v1813, 0.01
  %v1954 = vmul.f32 %v1816, 0.01
  %v1955 = vmul.f32 %v1821, 0.01
  %v1956 = vmul.f32 %v1824, 0.01
  %v1957 = vmul.f32 %v1829, 0.01
  %v1958 = vmul.f32 %v1832, 0.01
  %v1959 = vmul.f32 %v1837, 0.01
  %v1960 = vmul.f32 %v1840, 0.01
  %v1961 = vmul.f32 %v1845, 0.01
  %v1962 = vmul.f32 %v1848, 0.01
  %v1963 = vmul.f32 %v1853, 0.01
  %v1964 = vmul.f32 %v1856, 0.01
  %v1965 = vmul.f32 %v1861, 0.01
  %v1966 = vmul.f32 %v1864, 0.01
  %v1967 = vmul.f32 %v1869, 0.01
  %v1968 = vmul.f32 %v1872, 0.01
  %v1969 = vmul.f32 %v1877, 0.01
  %v1970 = vmul.f32 %v1880, 0.01
  %v1971 = vmul.f32 %v1885, 0.01
  %v1972 = vmul.f32 %v1888, 0.01
  %v1973 = vmul.f32 %v1893, 0.01
  %v1974 = vmul.f32 %v1896, 0.01
  %v1975 = vsel %vm1899, %v1749, %v1937
  %v1976 = vsel %vm1900, %v1752, %v1938
  %v1977 = vsel %vm1901, %v1757, %v1939
  %v1978 = vsel %vm1902, %v1760, %v1940
  %v1979 = vsel %vm1903, %v1765, %v1941
  %v1980 = vsel %vm1904, %v1768, %v1942
  %v1981 = vsel %vm1905, %v1773, %v1943
  %v1982 = vsel %vm1906, %v1776, %v1944
  %v1983 = vsel %vm1907, %v1781, %v1945
  %v1984 = vsel %vm1908, %v1784, %v1946
  %v1985 = vsel %vm1909, %v1789, %v1947
  %v1986 = vsel %vm1910, %v1792, %v1948
  %v1987 = vsel %vm1911, %v1797, %v1949
  %v1988 = vsel %vm1912, %v1800, %v1950
  %v1989 = vsel %vm1913, %v1805, %v1951
  %v1990 = vsel %vm1914, %v1808, %v1952
  %v1991 = vsel %vm1915, %v1813, %v1953
  %v1992 = vsel %vm1916, %v1816, %v1954
  %v1993 = vsel %vm1917, %v1821, %v1955
  %v1994 = vsel %vm1918, %v1824, %v1956
  %v1995 = vsel %vm1919, %v1829, %v1957
  %v1996 = vsel %vm1920, %v1832, %v1958
  %v1997 = vsel %vm1921, %v1837, %v1959
  %v1998 = vsel %vm1922, %v1840, %v1960
  %v1999 = vsel %vm1923, %v1845, %v1961
  %v2000 = vsel %vm1924, %v1848, %v1962
  %v2001 = vsel %vm1925, %v1853, %v1963
  %v2002 = vsel %vm1926, %v1856, %v1964
  %v2003 = vsel %vm1927, %v1861, %v1965
  %v2004 = vsel %vm1928, %v1864, %v1966
  %v2005 = vsel %vm1929, %v1869, %v1967
  %v2006 = vsel %vm1930, %v1872, %v1968
  %v2007 = vsel %vm1931, %v1877, %v1969
  %v2008 = vsel %vm1932, %v1880, %v1970
  %v2009 = vsel %vm1933, %v1885, %v1971
  %v2010 = vsel %vm1934, %v1888, %v1972
  %v2011 = vsel %vm1935, %v1893, %v1973
  %v2012 = vsel %vm1936, %v1896, %v1974
  %v2013 = vpack.c.bf16 %v1976, %v1975
  %v2014 = vpack.c.bf16 %v1978, %v1977
  %v2015 = vpack.c.bf16 %v1980, %v1979
  %v2016 = vpack.c.bf16 %v1982, %v1981
  %v2017 = vpack.c.bf16 %v1984, %v1983
  %v2018 = vpack.c.bf16 %v1986, %v1985
  %v2019 = vpack.c.bf16 %v1988, %v1987
  %v2020 = vpack.c.bf16 %v1990, %v1989
  %v2021 = vpack.c.bf16 %v1992, %v1991
  %v2022 = vpack.c.bf16 %v1994, %v1993
  %v2023 = vpack.c.bf16 %v1996, %v1995
  %v2024 = vpack.c.bf16 %v1998, %v1997
  %v2025 = vpack.c.bf16 %v2000, %v1999
  %v2026 = vpack.c.bf16 %v2002, %v2001
  %v2027 = vpack.c.bf16 %v2004, %v2003
  %v2028 = vpack.c.bf16 %v2006, %v2005
  %v2029 = vpack.c.bf16 %v2008, %v2007
  %v2030 = vpack.c.bf16 %v2010, %v2009
  %v2031 = vpack.c.bf16 %v2012, %v2011
  %v2032 = vld [vmem:[%s9] sm:$0xf]
  %v2033 = vld [vmem:[%s9 + $0x4] sm:$0xf]
  %v2034 = vld [vmem:[%s9 + $0x8] sm:$0xf]
  %v2035 = vld [vmem:[%s9 + $0xc] sm:$0xf]
  %v2036 = vld [vmem:[%s9 + $0x10] sm:$0xf]
  %v2037 = vld [vmem:[%s9 + $0x14] sm:$0xf]
  %v2038 = vld [vmem:[%s9 + $0x18] sm:$0xf]
  %v2039 = vld [vmem:[%s9 + $0x1c] sm:$0xf]
  %v2040 = vld [vmem:[%s10] sm:$0x1]
  %v2042 = vlaneseq
  %v2043 = vshrl.u32 %v2042, 7
  %v2044 = vsub.s32 0, %v2043
  %v2045 = vrot.slane %v2040, %v2044
  %v2055 = vunpack.c.l.b16 %v2032
  %v2056 = vunpack.c.l.b16 %v2033
  %v2057 = vunpack.c.l.b16 %v2034
  %v2058 = vunpack.c.l.b16 %v2035
  %v2059 = vunpack.c.l.b16 %v2036
  %v2060 = vunpack.c.l.b16 %v2037
  %v2061 = vunpack.c.l.b16 %v2038
  %v2062 = vunpack.c.l.b16 %v2039
  %v2063 = vpack.c.b16 %v2056, %v2055
  %v2064 = vpack.c.b16 %v2058, %v2057
  %v2065 = vpack.c.b16 %v2060, %v2059
  %v2066 = vpack.c.b16 %v2062, %v2061
  %v2072 = vsel %vm1011, %v2013, 0
  %v2075 = vsel %vm1011, %v2014, 0
  %v2078 = vsel %vm1011, %v2015, 0
  %v2081 = vsel %vm1011, %v2016, 0
  %v2084 = vsel %vm1011, %v2017, 0
  %v2087 = vsel %vm1011, %v2018, 0
  %v2090 = vsel %vm1011, %v2019, 0
  %v2093 = vsel %vm1011, %v2020, 0
  %v2096 = vsel %vm1011, %v2021, 0
  %v2099 = vsel %vm1011, %v2022, 0
  %v2102 = vsel %vm1011, %v2023, 0
  %v2105 = vsel %vm1011, %v2024, 0
  %v2108 = vsel %vm1011, %v2025, 0
  %v2111 = vsel %vm1011, %v2026, 0
  %v2114 = vsel %vm1011, %v2027, 0
  %v2117 = vsel %vm1011, %v2028, 0
  %v2120 = vsel %vm1011, %v2029, 0
  %v2123 = vsel %vm1011, %v2030, 0
  %v2126 = vsel %vm1011, %v2031, 0
  %2128 = vmatprep.subr.bf16.mxu0 0
  %2129 = vmatpush1.bf16.msra.mxu0 0
  %2130 = vmatprep.subr.bf16.mxu0 0
  %2131 = vmatpush1.bf16.msra.mxu0 0
  %2132 = vmatprep.subr.bf16.mxu0 0
  %2133 = vmatpush1.bf16.msra.mxu0 0
  %2134 = vmatprep.subr.bf16.mxu0 0
  %2135 = vmatpush1.bf16.msra.mxu0 0
  %2136 = vmatprep.subr.bf16.mxu0 0
  %2137 = vmatpush1.bf16.msra.mxu0 %v2066
  %2138 = vmatprep.subr.bf16.mxu0 0
  %2139 = vmatpush1.bf16.msra.mxu0 %v2065
  %2140 = vmatprep.subr.bf16.mxu0 0
  %2141 = vmatpush1.bf16.msra.mxu0 %v2064
  %2142 = vmatprep.subr.bf16.mxu0 0
  %2143 = vmatpush1.bf16.msra.mxu0 %v2063
  %2144 = vmatprep.subr.bf16.mxu0 0
  %2145 = vmatpush2.bf16.msra.mxu0 0
  %2146 = vmatprep.subr.bf16.mxu0 0
  %2147 = vmatpush2.bf16.msra.mxu0 0
  %2148 = vmatprep.subr.bf16.mxu0 0
  %2149 = vmatpush2.bf16.msra.mxu0 0
  %2150 = vmatprep.subr.bf16.mxu0 0
  %2151 = vmatpush2.bf16.msra.mxu0 0
  %2152 = vmatprep.subr.bf16.mxu0 0
  %2153 = vmatpush2.bf16.msra.mxu0 0
  %2154 = vmatprep.subr.bf16.mxu0 0
  %2155 = vmatpush2.bf16.msra.mxu0 0
  %2156 = vmatprep.subr.bf16.mxu0 0
  %2157 = vmatpush2.bf16.msra.mxu0 0
  %2158 = vmatprep.subr.bf16.mxu0 0
  %2159 = vmatpush2.bf16.msra.mxu0 0
  %2160 = vmatprep.mubr.bf16.mxu0 0
  %2161 = vmatmul.mubr.bf16.gmra.mxu0 %v2072
  %v2162 = vpop.f32.mrf.mxu0
  %v2163 = vadd.f32 %v2045, %v2162
  %v2164 = vpop.f32.mrf.mxu0
  %v2165 = vpop.f32.mrf.mxu0
  %v2166 = vadd.f32 %v2045, %v2165
  %v2167 = vpop.f32.mrf.mxu0
  %2168 = vmatprep.mubr.bf16.mxu0 0
  %2169 = vmatmul.mubr.bf16.gmra.mxu0 %v2075
  %v2170 = vpop.f32.mrf.mxu0
  %v2171 = vadd.f32 %v2045, %v2170
  %v2172 = vpop.f32.mrf.mxu0
  %v2173 = vpop.f32.mrf.mxu0
  %v2174 = vadd.f32 %v2045, %v2173
  %v2175 = vpop.f32.mrf.mxu0
  %2176 = vmatprep.mubr.bf16.mxu0 0
  %2177 = vmatmul.mubr.bf16.gmra.mxu0 %v2078
  %v2178 = vpop.f32.mrf.mxu0
  %v2179 = vadd.f32 %v2045, %v2178
  %v2180 = vpop.f32.mrf.mxu0
  %v2181 = vpop.f32.mrf.mxu0
  %v2182 = vadd.f32 %v2045, %v2181
  %v2183 = vpop.f32.mrf.mxu0
  %2184 = vmatprep.mubr.bf16.mxu0 0
  %2185 = vmatmul.mubr.bf16.gmra.mxu0 %v2081
  %v2186 = vpop.f32.mrf.mxu0
  %v2187 = vadd.f32 %v2045, %v2186
  %v2188 = vpop.f32.mrf.mxu0
  %v2189 = vpop.f32.mrf.mxu0
  %v2190 = vadd.f32 %v2045, %v2189
  %v2191 = vpop.f32.mrf.mxu0
  %2192 = vmatprep.mubr.bf16.mxu0 0
  %2193 = vmatmul.mubr.bf16.gmra.mxu0 %v2084
  %v2194 = vpop.f32.mrf.mxu0
  %v2195 = vadd.f32 %v2045, %v2194
  %v2196 = vpop.f32.mrf.mxu0
  %v2197 = vpop.f32.mrf.mxu0
  %v2198 = vadd.f32 %v2045, %v2197
  %v2199 = vpop.f32.mrf.mxu0
  %2200 = vmatprep.mubr.bf16.mxu0 0
  %2201 = vmatmul.mubr.bf16.gmra.mxu0 %v2087
  %v2202 = vpop.f32.mrf.mxu0
  %v2203 = vadd.f32 %v2045, %v2202
  %v2204 = vpop.f32.mrf.mxu0
  %v2205 = vpop.f32.mrf.mxu0
  %v2206 = vadd.f32 %v2045, %v2205
  %v2207 = vpop.f32.mrf.mxu0
  %2208 = vmatprep.mubr.bf16.mxu0 0
  %2209 = vmatmul.mubr.bf16.gmra.mxu0 %v2090
  %v2210 = vpop.f32.mrf.mxu0
  %v2211 = vadd.f32 %v2045, %v2210
  %v2212 = vpop.f32.mrf.mxu0
  %v2213 = vpop.f32.mrf.mxu0
  %v2214 = vadd.f32 %v2045, %v2213
  %v2215 = vpop.f32.mrf.mxu0
  %2216 = vmatprep.mubr.bf16.mxu0 0
  %2217 = vmatmul.mubr.bf16.gmra.mxu0 %v2093
  %v2218 = vpop.f32.mrf.mxu0
  %v2219 = vadd.f32 %v2045, %v2218
  %v2220 = vpop.f32.mrf.mxu0
  %v2221 = vpop.f32.mrf.mxu0
  %v2222 = vadd.f32 %v2045, %v2221
  %v2223 = vpop.f32.mrf.mxu0
  %2224 = vmatprep.mubr.bf16.mxu0 0
  %2225 = vmatmul.mubr.bf16.gmra.mxu0 %v2096
  %v2226 = vpop.f32.mrf.mxu0
  %v2227 = vadd.f32 %v2045, %v2226
  %v2228 = vpop.f32.mrf.mxu0
  %v2229 = vpop.f32.mrf.mxu0
  %v2230 = vadd.f32 %v2045, %v2229
  %v2231 = vpop.f32.mrf.mxu0
  %2232 = vmatprep.mubr.bf16.mxu0 0
  %2233 = vmatmul.mubr.bf16.gmra.mxu0 %v2099
  %v2234 = vpop.f32.mrf.mxu0
  %v2235 = vadd.f32 %v2045, %v2234
  %v2236 = vpop.f32.mrf.mxu0
  %v2237 = vpop.f32.mrf.mxu0
  %v2238 = vadd.f32 %v2045, %v2237
  %v2239 = vpop.f32.mrf.mxu0
  %2240 = vmatprep.mubr.bf16.mxu0 0
  %2241 = vmatmul.mubr.bf16.gmra.mxu0 %v2102
  %v2242 = vpop.f32.mrf.mxu0
  %v2243 = vadd.f32 %v2045, %v2242
  %v2244 = vpop.f32.mrf.mxu0
  %v2245 = vpop.f32.mrf.mxu0
  %v2246 = vadd.f32 %v2045, %v2245
  %v2247 = vpop.f32.mrf.mxu0
  %2248 = vmatprep.mubr.bf16.mxu0 0
  %2249 = vmatmul.mubr.bf16.gmra.mxu0 %v2105
  %v2250 = vpop.f32.mrf.mxu0
  %v2251 = vadd.f32 %v2045, %v2250
  %v2252 = vpop.f32.mrf.mxu0
  %v2253 = vpop.f32.mrf.mxu0
  %v2254 = vadd.f32 %v2045, %v2253
  %v2255 = vpop.f32.mrf.mxu0
  %2256 = vmatprep.mubr.bf16.mxu0 0
  %2257 = vmatmul.mubr.bf16.gmra.mxu0 %v2108
  %v2258 = vpop.f32.mrf.mxu0
  %v2259 = vadd.f32 %v2045, %v2258
  %v2260 = vpop.f32.mrf.mxu0
  %v2261 = vpop.f32.mrf.mxu0
  %v2262 = vadd.f32 %v2045, %v2261
  %v2263 = vpop.f32.mrf.mxu0
  %2264 = vmatprep.mubr.bf16.mxu0 0
  %2265 = vmatmul.mubr.bf16.gmra.mxu0 %v2111
  %v2266 = vpop.f32.mrf.mxu0
  %v2267 = vadd.f32 %v2045, %v2266
  %v2268 = vpop.f32.mrf.mxu0
  %v2269 = vpop.f32.mrf.mxu0
  %v2270 = vadd.f32 %v2045, %v2269
  %v2271 = vpop.f32.mrf.mxu0
  %2272 = vmatprep.mubr.bf16.mxu0 0
  %2273 = vmatmul.mubr.bf16.gmra.mxu0 %v2114
  %v2274 = vpop.f32.mrf.mxu0
  %v2275 = vadd.f32 %v2045, %v2274
  %v2276 = vpop.f32.mrf.mxu0
  %v2277 = vpop.f32.mrf.mxu0
  %v2278 = vadd.f32 %v2045, %v2277
  %v2279 = vpop.f32.mrf.mxu0
  %2280 = vmatprep.mubr.bf16.mxu0 0
  %2281 = vmatmul.mubr.bf16.gmra.mxu0 %v2117
  %v2282 = vpop.f32.mrf.mxu0
  %v2283 = vadd.f32 %v2045, %v2282
  %v2284 = vpop.f32.mrf.mxu0
  %v2285 = vpop.f32.mrf.mxu0
  %v2286 = vadd.f32 %v2045, %v2285
  %v2287 = vpop.f32.mrf.mxu0
  %2288 = vmatprep.mubr.bf16.mxu0 0
  %2289 = vmatmul.mubr.bf16.gmra.mxu0 %v2120
  %v2290 = vpop.f32.mrf.mxu0
  %v2291 = vadd.f32 %v2045, %v2290
  %v2292 = vpop.f32.mrf.mxu0
  %v2293 = vpop.f32.mrf.mxu0
  %v2294 = vadd.f32 %v2045, %v2293
  %v2295 = vpop.f32.mrf.mxu0
  %2296 = vmatprep.mubr.bf16.mxu0 0
  %2297 = vmatmul.mubr.bf16.gmra.mxu0 %v2123
  %v2298 = vpop.f32.mrf.mxu0
  %v2299 = vadd.f32 %v2045, %v2298
  %v2300 = vpop.f32.mrf.mxu0
  %v2301 = vpop.f32.mrf.mxu0
  %v2302 = vadd.f32 %v2045, %v2301
  %v2303 = vpop.f32.mrf.mxu0
  %2304 = vmatprep.mubr.bf16.mxu0 0
  %2305 = vmatmul.mubr.bf16.gmra.mxu0 %v2126
  %v2306 = vpop.f32.mrf.mxu0
  %v2307 = vadd.f32 %v2045, %v2306
  %v2308 = vpop.f32.mrf.mxu0
  %v2309 = vpop.f32.mrf.mxu0
  %v2310 = vadd.f32 %v2045, %v2309
  %v2311 = vpop.f32.mrf.mxu0
  %2312 = vdwg.mxu0
  %vm2313 = vcmp.gt.f32.partialorder %v2163, 0.0
  %vm2314 = vcmp.gt.f32.partialorder %v2166, 0.0
  %vm2315 = vcmp.gt.f32.partialorder %v2171, 0.0
  %vm2316 = vcmp.gt.f32.partialorder %v2174, 0.0
  %vm2317 = vcmp.gt.f32.partialorder %v2179, 0.0
  %vm2318 = vcmp.gt.f32.partialorder %v2182, 0.0
  %vm2319 = vcmp.gt.f32.partialorder %v2187, 0.0
  %vm2320 = vcmp.gt.f32.partialorder %v2190, 0.0
  %vm2321 = vcmp.gt.f32.partialorder %v2195, 0.0
  %vm2322 = vcmp.gt.f32.partialorder %v2198, 0.0
  %vm2323 = vcmp.gt.f32.partialorder %v2203, 0.0
  %vm2324 = vcmp.gt.f32.partialorder %v2206, 0.0
  %vm2325 = vcmp.gt.f32.partialorder %v2211, 0.0
  %vm2326 = vcmp.gt.f32.partialorder %v2214, 0.0
  %vm2327 = vcmp.gt.f32.partialorder %v2219, 0.0
  %vm2328 = vcmp.gt.f32.partialorder %v2222, 0.0
  %vm2329 = vcmp.gt.f32.partialorder %v2227, 0.0
  %vm2330 = vcmp.gt.f32.partialorder %v2230, 0.0
  %vm2331 = vcmp.gt.f32.partialorder %v2235, 0.0
  %vm2332 = vcmp.gt.f32.partialorder %v2238, 0.0
  %vm2333 = vcmp.gt.f32.partialorder %v2243, 0.0
  %vm2334 = vcmp.gt.f32.partialorder %v2246, 0.0
  %vm2335 = vcmp.gt.f32.partialorder %v2251, 0.0
  %vm2336 = vcmp.gt.f32.partialorder %v2254, 0.0
  %vm2337 = vcmp.gt.f32.partialorder %v2259, 0.0
  %vm2338 = vcmp.gt.f32.partialorder %v2262, 0.0
  %vm2339 = vcmp.gt.f32.partialorder %v2267, 0.0
  %vm2340 = vcmp.gt.f32.partialorder %v2270, 0.0
  %vm2341 = vcmp.gt.f32.partialorder %v2275, 0.0
  %vm2342 = vcmp.gt.f32.partialorder %v2278, 0.0
  %vm2343 = vcmp.gt.f32.partialorder %v2283, 0.0
  %vm2344 = vcmp.gt.f32.partialorder %v2286, 0.0
  %vm2345 = vcmp.gt.f32.partialorder %v2291, 0.0
  %vm2346 = vcmp.gt.f32.partialorder %v2294, 0.0
  %vm2347 = vcmp.gt.f32.partialorder %v2299, 0.0
  %vm2348 = vcmp.gt.f32.partialorder %v2302, 0.0
  %vm2349 = vcmp.gt.f32.partialorder %v2307, 0.0
  %vm2350 = vcmp.gt.f32.partialorder %v2310, 0.0
  %v2351 = vmul.f32 %v2163, 0.01
  %v2352 = vmul.f32 %v2166, 0.01
  %v2353 = vmul.f32 %v2171, 0.01
  %v2354 = vmul.f32 %v2174, 0.01
  %v2355 = vmul.f32 %v2179, 0.01
  %v2356 = vmul.f32 %v2182, 0.01
  %v2357 = vmul.f32 %v2187, 0.01
  %v2358 = vmul.f32 %v2190, 0.01
  %v2359 = vmul.f32 %v2195, 0.01
  %v2360 = vmul.f32 %v2198, 0.01
  %v2361 = vmul.f32 %v2203, 0.01
  %v2362 = vmul.f32 %v2206, 0.01
  %v2363 = vmul.f32 %v2211, 0.01
  %v2364 = vmul.f32 %v2214, 0.01
  %v2365 = vmul.f32 %v2219, 0.01
  %v2366 = vmul.f32 %v2222, 0.01
  %v2367 = vmul.f32 %v2227, 0.01
  %v2368 = vmul.f32 %v2230, 0.01
  %v2369 = vmul.f32 %v2235, 0.01
  %v2370 = vmul.f32 %v2238, 0.01
  %v2371 = vmul.f32 %v2243, 0.01
  %v2372 = vmul.f32 %v2246, 0.01
  %v2373 = vmul.f32 %v2251, 0.01
  %v2374 = vmul.f32 %v2254, 0.01
  %v2375 = vmul.f32 %v2259, 0.01
  %v2376 = vmul.f32 %v2262, 0.01
  %v2377 = vmul.f32 %v2267, 0.01
  %v2378 = vmul.f32 %v2270, 0.01
  %v2379 = vmul.f32 %v2275, 0.01
  %v2380 = vmul.f32 %v2278, 0.01
  %v2381 = vmul.f32 %v2283, 0.01
  %v2382 = vmul.f32 %v2286, 0.01
  %v2383 = vmul.f32 %v2291, 0.01
  %v2384 = vmul.f32 %v2294, 0.01
  %v2385 = vmul.f32 %v2299, 0.01
  %v2386 = vmul.f32 %v2302, 0.01
  %v2387 = vmul.f32 %v2307, 0.01
  %v2388 = vmul.f32 %v2310, 0.01
  %v2389 = vsel %vm2313, %v2163, %v2351
  %v2390 = vsel %vm2314, %v2166, %v2352
  %v2391 = vsel %vm2315, %v2171, %v2353
  %v2392 = vsel %vm2316, %v2174, %v2354
  %v2393 = vsel %vm2317, %v2179, %v2355
  %v2394 = vsel %vm2318, %v2182, %v2356
  %v2395 = vsel %vm2319, %v2187, %v2357
  %v2396 = vsel %vm2320, %v2190, %v2358
  %v2397 = vsel %vm2321, %v2195, %v2359
  %v2398 = vsel %vm2322, %v2198, %v2360
  %v2399 = vsel %vm2323, %v2203, %v2361
  %v2400 = vsel %vm2324, %v2206, %v2362
  %v2401 = vsel %vm2325, %v2211, %v2363
  %v2402 = vsel %vm2326, %v2214, %v2364
  %v2403 = vsel %vm2327, %v2219, %v2365
  %v2404 = vsel %vm2328, %v2222, %v2366
  %v2405 = vsel %vm2329, %v2227, %v2367
  %v2406 = vsel %vm2330, %v2230, %v2368
  %v2407 = vsel %vm2331, %v2235, %v2369
  %v2408 = vsel %vm2332, %v2238, %v2370
  %v2409 = vsel %vm2333, %v2243, %v2371
  %v2410 = vsel %vm2334, %v2246, %v2372
  %v2411 = vsel %vm2335, %v2251, %v2373
  %v2412 = vsel %vm2336, %v2254, %v2374
  %v2413 = vsel %vm2337, %v2259, %v2375
  %v2414 = vsel %vm2338, %v2262, %v2376
  %v2415 = vsel %vm2339, %v2267, %v2377
  %v2416 = vsel %vm2340, %v2270, %v2378
  %v2417 = vsel %vm2341, %v2275, %v2379
  %v2418 = vsel %vm2342, %v2278, %v2380
  %v2419 = vsel %vm2343, %v2283, %v2381
  %v2420 = vsel %vm2344, %v2286, %v2382
  %v2421 = vsel %vm2345, %v2291, %v2383
  %v2422 = vsel %vm2346, %v2294, %v2384
  %v2423 = vsel %vm2347, %v2299, %v2385
  %v2424 = vsel %vm2348, %v2302, %v2386
  %v2425 = vsel %vm2349, %v2307, %v2387
  %v2426 = vsel %vm2350, %v2310, %v2388
  %v2427 = vpack.c.bf16 %v2390, %v2389
  %v2428 = vpack.c.bf16 %v2392, %v2391
  %v2429 = vpack.c.bf16 %v2394, %v2393
  %v2430 = vpack.c.bf16 %v2396, %v2395
  %v2431 = vpack.c.bf16 %v2398, %v2397
  %v2432 = vpack.c.bf16 %v2400, %v2399
  %v2433 = vpack.c.bf16 %v2402, %v2401
  %v2434 = vpack.c.bf16 %v2404, %v2403
  %v2435 = vpack.c.bf16 %v2406, %v2405
  %v2436 = vpack.c.bf16 %v2408, %v2407
  %v2437 = vpack.c.bf16 %v2410, %v2409
  %v2438 = vpack.c.bf16 %v2412, %v2411
  %v2439 = vpack.c.bf16 %v2414, %v2413
  %v2440 = vpack.c.bf16 %v2416, %v2415
  %v2441 = vpack.c.bf16 %v2418, %v2417
  %v2442 = vpack.c.bf16 %v2420, %v2419
  %v2443 = vpack.c.bf16 %v2422, %v2421
  %v2444 = vpack.c.bf16 %v2424, %v2423
  %v2445 = vpack.c.bf16 %v2426, %v2425
  %v2446 = vld [vmem:[%s11] sm:$0xf]
  %v2447 = vld [vmem:[%s11 + $0x4] sm:$0xf]
  %v2448 = vld [vmem:[%s11 + $0x8] sm:$0xf]
  %v2449 = vld [vmem:[%s11 + $0xc] sm:$0xf]
  %v2450 = vld [vmem:[%s11 + $0x10] sm:$0xf]
  %v2451 = vld [vmem:[%s11 + $0x14] sm:$0xf]
  %v2452 = vld [vmem:[%s11 + $0x18] sm:$0xf]
  %v2453 = vld [vmem:[%s11 + $0x1c] sm:$0xf]
  %v2454 = vld [vmem:[%s11 + $0x20] sm:$0xf]
  %v2455 = vld [vmem:[%s11 + $0x24] sm:$0xf]
  %v2456 = vld [vmem:[%s11 + $0x28] sm:$0xf]
  %v2457 = vld [vmem:[%s11 + $0x2c] sm:$0xf]
  %v2458 = vld [vmem:[%s11 + $0x30] sm:$0xf]
  %v2459 = vld [vmem:[%s11 + $0x34] sm:$0xf]
  %v2460 = vld [vmem:[%s11 + $0x38] sm:$0xf]
  %v2461 = vld [vmem:[%s11 + $0x3c] sm:$0xf]
  %v2462 = vld [vmem:[%s12] sm:$0x1]
  %v2464 = vlaneseq
  %v2465 = vshrl.u32 %v2464, 7
  %v2466 = vsub.s32 0, %v2465
  %v2467 = vrot.slane %v2462, %v2466
  %v2485 = vunpack.c.l.b16 %v2446
  %v2486 = vunpack.c.l.b16 %v2447
  %v2487 = vunpack.c.l.b16 %v2448
  %v2488 = vunpack.c.l.b16 %v2449
  %v2489 = vunpack.c.l.b16 %v2450
  %v2490 = vunpack.c.l.b16 %v2451
  %v2491 = vunpack.c.l.b16 %v2452
  %v2492 = vunpack.c.l.b16 %v2453
  %v2493 = vunpack.c.l.b16 %v2454
  %v2494 = vunpack.c.l.b16 %v2455
  %v2495 = vunpack.c.l.b16 %v2456
  %v2496 = vunpack.c.l.b16 %v2457
  %v2497 = vunpack.c.l.b16 %v2458
  %v2498 = vunpack.c.l.b16 %v2459
  %v2499 = vunpack.c.l.b16 %v2460
  %v2500 = vunpack.c.l.b16 %v2461
  %v2501 = vpack.c.b16 %v2486, %v2485
  %v2502 = vpack.c.b16 %v2488, %v2487
  %v2503 = vpack.c.b16 %v2490, %v2489
  %v2504 = vpack.c.b16 %v2492, %v2491
  %v2505 = vpack.c.b16 %v2494, %v2493
  %v2506 = vpack.c.b16 %v2496, %v2495
  %v2507 = vpack.c.b16 %v2498, %v2497
  %v2508 = vpack.c.b16 %v2500, %v2499
  %2517 = vmatprep.subr.bf16.mxu0 0
  %2518 = vmatpush1.bf16.msra.mxu0 %v2508
  %2519 = vmatprep.subr.bf16.mxu0 0
  %2520 = vmatpush1.bf16.msra.mxu0 %v2507
  %2521 = vmatprep.subr.bf16.mxu0 0
  %2522 = vmatpush1.bf16.msra.mxu0 %v2506
  %2523 = vmatprep.subr.bf16.mxu0 0
  %2524 = vmatpush1.bf16.msra.mxu0 %v2505
  %2525 = vmatprep.subr.bf16.mxu0 0
  %2526 = vmatpush1.bf16.msra.mxu0 %v2504
  %2527 = vmatprep.subr.bf16.mxu0 0
  %2528 = vmatpush1.bf16.msra.mxu0 %v2503
  %2529 = vmatprep.subr.bf16.mxu0 0
  %2530 = vmatpush1.bf16.msra.mxu0 %v2502
  %2531 = vmatprep.subr.bf16.mxu0 0
  %2532 = vmatpush1.bf16.msra.mxu0 %v2501
  %2533 = vmatprep.subr.bf16.mxu0 0
  %2534 = vmatpush2.bf16.msra.mxu0 0
  %2535 = vmatprep.subr.bf16.mxu0 0
  %2536 = vmatpush2.bf16.msra.mxu0 0
  %2537 = vmatprep.subr.bf16.mxu0 0
  %2538 = vmatpush2.bf16.msra.mxu0 0
  %2539 = vmatprep.subr.bf16.mxu0 0
  %2540 = vmatpush2.bf16.msra.mxu0 0
  %2541 = vmatprep.subr.bf16.mxu0 0
  %2542 = vmatpush2.bf16.msra.mxu0 0
  %2543 = vmatprep.subr.bf16.mxu0 0
  %2544 = vmatpush2.bf16.msra.mxu0 0
  %2545 = vmatprep.subr.bf16.mxu0 0
  %2546 = vmatpush2.bf16.msra.mxu0 0
  %2547 = vmatprep.subr.bf16.mxu0 0
  %2548 = vmatpush2.bf16.msra.mxu0 0
  %2549 = vmatprep.mubr.bf16.mxu0 0
  %2550 = vmatmul.mubr.bf16.gmra.mxu0 %v2427
  %v2551 = vpop.f32.mrf.mxu0
  %v2552 = vadd.f32 %v2467, %v2551
  %v2553 = vpop.f32.mrf.mxu0
  %v2554 = vpop.f32.mrf.mxu0
  %v2555 = vadd.f32 %v2467, %v2554
  %v2556 = vpop.f32.mrf.mxu0
  %2557 = vmatprep.mubr.bf16.mxu0 0
  %2558 = vmatmul.mubr.bf16.gmra.mxu0 %v2428
  %v2559 = vpop.f32.mrf.mxu0
  %v2560 = vadd.f32 %v2467, %v2559
  %v2561 = vpop.f32.mrf.mxu0
  %v2562 = vpop.f32.mrf.mxu0
  %v2563 = vadd.f32 %v2467, %v2562
  %v2564 = vpop.f32.mrf.mxu0
  %2565 = vmatprep.mubr.bf16.mxu0 0
  %2566 = vmatmul.mubr.bf16.gmra.mxu0 %v2429
  %v2567 = vpop.f32.mrf.mxu0
  %v2568 = vadd.f32 %v2467, %v2567
  %v2569 = vpop.f32.mrf.mxu0
  %v2570 = vpop.f32.mrf.mxu0
  %v2571 = vadd.f32 %v2467, %v2570
  %v2572 = vpop.f32.mrf.mxu0
  %2573 = vmatprep.mubr.bf16.mxu0 0
  %2574 = vmatmul.mubr.bf16.gmra.mxu0 %v2430
  %v2575 = vpop.f32.mrf.mxu0
  %v2576 = vadd.f32 %v2467, %v2575
  %v2577 = vpop.f32.mrf.mxu0
  %v2578 = vpop.f32.mrf.mxu0
  %v2579 = vadd.f32 %v2467, %v2578
  %v2580 = vpop.f32.mrf.mxu0
  %2581 = vmatprep.mubr.bf16.mxu0 0
  %2582 = vmatmul.mubr.bf16.gmra.mxu0 %v2431
  %v2583 = vpop.f32.mrf.mxu0
  %v2584 = vadd.f32 %v2467, %v2583
  %v2585 = vpop.f32.mrf.mxu0
  %v2586 = vpop.f32.mrf.mxu0
  %v2587 = vadd.f32 %v2467, %v2586
  %v2588 = vpop.f32.mrf.mxu0
  %2589 = vmatprep.mubr.bf16.mxu0 0
  %2590 = vmatmul.mubr.bf16.gmra.mxu0 %v2432
  %v2591 = vpop.f32.mrf.mxu0
  %v2592 = vadd.f32 %v2467, %v2591
  %v2593 = vpop.f32.mrf.mxu0
  %v2594 = vpop.f32.mrf.mxu0
  %v2595 = vadd.f32 %v2467, %v2594
  %v2596 = vpop.f32.mrf.mxu0
  %2597 = vmatprep.mubr.bf16.mxu0 0
  %2598 = vmatmul.mubr.bf16.gmra.mxu0 %v2433
  %v2599 = vpop.f32.mrf.mxu0
  %v2600 = vadd.f32 %v2467, %v2599
  %v2601 = vpop.f32.mrf.mxu0
  %v2602 = vpop.f32.mrf.mxu0
  %v2603 = vadd.f32 %v2467, %v2602
  %v2604 = vpop.f32.mrf.mxu0
  %2605 = vmatprep.mubr.bf16.mxu0 0
  %2606 = vmatmul.mubr.bf16.gmra.mxu0 %v2434
  %v2607 = vpop.f32.mrf.mxu0
  %v2608 = vadd.f32 %v2467, %v2607
  %v2609 = vpop.f32.mrf.mxu0
  %v2610 = vpop.f32.mrf.mxu0
  %v2611 = vadd.f32 %v2467, %v2610
  %v2612 = vpop.f32.mrf.mxu0
  %2613 = vmatprep.mubr.bf16.mxu0 0
  %2614 = vmatmul.mubr.bf16.gmra.mxu0 %v2435
  %v2615 = vpop.f32.mrf.mxu0
  %v2616 = vadd.f32 %v2467, %v2615
  %v2617 = vpop.f32.mrf.mxu0
  %v2618 = vpop.f32.mrf.mxu0
  %v2619 = vadd.f32 %v2467, %v2618
  %v2620 = vpop.f32.mrf.mxu0
  %2621 = vmatprep.mubr.bf16.mxu0 0
  %2622 = vmatmul.mubr.bf16.gmra.mxu0 %v2436
  %v2623 = vpop.f32.mrf.mxu0
  %v2624 = vadd.f32 %v2467, %v2623
  %v2625 = vpop.f32.mrf.mxu0
  %v2626 = vpop.f32.mrf.mxu0
  %v2627 = vadd.f32 %v2467, %v2626
  %v2628 = vpop.f32.mrf.mxu0
  %2629 = vmatprep.mubr.bf16.mxu0 0
  %2630 = vmatmul.mubr.bf16.gmra.mxu0 %v2437
  %v2631 = vpop.f32.mrf.mxu0
  %v2632 = vadd.f32 %v2467, %v2631
  %v2633 = vpop.f32.mrf.mxu0
  %v2634 = vpop.f32.mrf.mxu0
  %v2635 = vadd.f32 %v2467, %v2634
  %v2636 = vpop.f32.mrf.mxu0
  %2637 = vmatprep.mubr.bf16.mxu0 0
  %2638 = vmatmul.mubr.bf16.gmra.mxu0 %v2438
  %v2639 = vpop.f32.mrf.mxu0
  %v2640 = vadd.f32 %v2467, %v2639
  %v2641 = vpop.f32.mrf.mxu0
  %v2642 = vpop.f32.mrf.mxu0
  %v2643 = vadd.f32 %v2467, %v2642
  %v2644 = vpop.f32.mrf.mxu0
  %2645 = vmatprep.mubr.bf16.mxu0 0
  %2646 = vmatmul.mubr.bf16.gmra.mxu0 %v2439
  %v2647 = vpop.f32.mrf.mxu0
  %v2648 = vadd.f32 %v2467, %v2647
  %v2649 = vpop.f32.mrf.mxu0
  %v2650 = vpop.f32.mrf.mxu0
  %v2651 = vadd.f32 %v2467, %v2650
  %v2652 = vpop.f32.mrf.mxu0
  %2653 = vmatprep.mubr.bf16.mxu0 0
  %2654 = vmatmul.mubr.bf16.gmra.mxu0 %v2440
  %v2655 = vpop.f32.mrf.mxu0
  %v2656 = vadd.f32 %v2467, %v2655
  %v2657 = vpop.f32.mrf.mxu0
  %v2658 = vpop.f32.mrf.mxu0
  %v2659 = vadd.f32 %v2467, %v2658
  %v2660 = vpop.f32.mrf.mxu0
  %2661 = vmatprep.mubr.bf16.mxu0 0
  %2662 = vmatmul.mubr.bf16.gmra.mxu0 %v2441
  %v2663 = vpop.f32.mrf.mxu0
  %v2664 = vadd.f32 %v2467, %v2663
  %v2665 = vpop.f32.mrf.mxu0
  %v2666 = vpop.f32.mrf.mxu0
  %v2667 = vadd.f32 %v2467, %v2666
  %v2668 = vpop.f32.mrf.mxu0
  %2669 = vmatprep.mubr.bf16.mxu0 0
  %2670 = vmatmul.mubr.bf16.gmra.mxu0 %v2442
  %v2671 = vpop.f32.mrf.mxu0
  %v2672 = vadd.f32 %v2467, %v2671
  %v2673 = vpop.f32.mrf.mxu0
  %v2674 = vpop.f32.mrf.mxu0
  %v2675 = vadd.f32 %v2467, %v2674
  %v2676 = vpop.f32.mrf.mxu0
  %2677 = vmatprep.mubr.bf16.mxu0 0
  %2678 = vmatmul.mubr.bf16.gmra.mxu0 %v2443
  %v2679 = vpop.f32.mrf.mxu0
  %v2680 = vadd.f32 %v2467, %v2679
  %v2681 = vpop.f32.mrf.mxu0
  %v2682 = vpop.f32.mrf.mxu0
  %v2683 = vadd.f32 %v2467, %v2682
  %v2684 = vpop.f32.mrf.mxu0
  %2685 = vmatprep.mubr.bf16.mxu0 0
  %2686 = vmatmul.mubr.bf16.gmra.mxu0 %v2444
  %v2687 = vpop.f32.mrf.mxu0
  %v2688 = vadd.f32 %v2467, %v2687
  %v2689 = vpop.f32.mrf.mxu0
  %v2690 = vpop.f32.mrf.mxu0
  %v2691 = vadd.f32 %v2467, %v2690
  %v2692 = vpop.f32.mrf.mxu0
  %2693 = vmatprep.mubr.bf16.mxu0 0
  %2694 = vmatmul.mubr.bf16.gmra.mxu0 %v2445
  %v2695 = vpop.f32.mrf.mxu0
  %v2696 = vadd.f32 %v2467, %v2695
  %v2697 = vpop.f32.mrf.mxu0
  %v2698 = vpop.f32.mrf.mxu0
  %v2699 = vadd.f32 %v2467, %v2698
  %v2700 = vpop.f32.mrf.mxu0
  %2701 = vdwg.mxu0
  %v2702 = vxor.u32 %v2552, 2147483648
  %v2703 = vxor.u32 %v2555, 2147483648
  %v2704 = vxor.u32 %v2560, 2147483648
  %v2705 = vxor.u32 %v2563, 2147483648
  %v2706 = vxor.u32 %v2568, 2147483648
  %v2707 = vxor.u32 %v2571, 2147483648
  %v2708 = vxor.u32 %v2576, 2147483648
  %v2709 = vxor.u32 %v2579, 2147483648
  %v2710 = vxor.u32 %v2584, 2147483648
  %v2711 = vxor.u32 %v2587, 2147483648
  %v2712 = vxor.u32 %v2592, 2147483648
  %v2713 = vxor.u32 %v2595, 2147483648
  %v2714 = vxor.u32 %v2600, 2147483648
  %v2715 = vxor.u32 %v2603, 2147483648
  %v2716 = vxor.u32 %v2608, 2147483648
  %v2717 = vxor.u32 %v2611, 2147483648
  %v2718 = vxor.u32 %v2616, 2147483648
  %v2719 = vxor.u32 %v2619, 2147483648
  %v2720 = vxor.u32 %v2624, 2147483648
  %v2721 = vxor.u32 %v2627, 2147483648
  %v2722 = vxor.u32 %v2632, 2147483648
  %v2723 = vxor.u32 %v2635, 2147483648
  %v2724 = vxor.u32 %v2640, 2147483648
  %v2725 = vxor.u32 %v2643, 2147483648
  %v2726 = vxor.u32 %v2648, 2147483648
  %v2727 = vxor.u32 %v2651, 2147483648
  %v2728 = vxor.u32 %v2656, 2147483648
  %v2729 = vxor.u32 %v2659, 2147483648
  %v2730 = vxor.u32 %v2664, 2147483648
  %v2731 = vxor.u32 %v2667, 2147483648
  %v2732 = vxor.u32 %v2672, 2147483648
  %v2733 = vxor.u32 %v2675, 2147483648
  %v2734 = vxor.u32 %v2680, 2147483648
  %v2735 = vxor.u32 %v2683, 2147483648
  %v2736 = vxor.u32 %v2688, 2147483648
  %v2737 = vxor.u32 %v2691, 2147483648
  %v2738 = vxor.u32 %v2696, 2147483648
  %v2739 = vxor.u32 %v2699, 2147483648
  %v2740 = vmul.f32 %v2702, 1.442695
  %v2741 = vpow.pop %v2740
  %v2742 = vmul.f32 %v2703, 1.442695
  %v2743 = vpow.pop %v2742
  %v2744 = vmul.f32 %v2704, 1.442695
  %v2745 = vpow.pop %v2744
  %v2746 = vmul.f32 %v2705, 1.442695
  %v2747 = vpow.pop %v2746
  %v2748 = vmul.f32 %v2706, 1.442695
  %v2749 = vpow.pop %v2748
  %v2750 = vmul.f32 %v2707, 1.442695
  %v2751 = vpow.pop %v2750
  %v2752 = vmul.f32 %v2708, 1.442695
  %v2753 = vpow.pop %v2752
  %v2754 = vmul.f32 %v2709, 1.442695
  %v2755 = vpow.pop %v2754
  %v2756 = vmul.f32 %v2710, 1.442695
  %v2757 = vpow.pop %v2756
  %v2758 = vmul.f32 %v2711, 1.442695
  %v2759 = vpow.pop %v2758
  %v2760 = vmul.f32 %v2712, 1.442695
  %v2761 = vpow.pop %v2760
  %v2762 = vmul.f32 %v2713, 1.442695
  %v2763 = vpow.pop %v2762
  %v2764 = vmul.f32 %v2714, 1.442695
  %v2765 = vpow.pop %v2764
  %v2766 = vmul.f32 %v2715, 1.442695
  %v2767 = vpow.pop %v2766
  %v2768 = vmul.f32 %v2716, 1.442695
  %v2769 = vpow.pop %v2768
  %v2770 = vmul.f32 %v2717, 1.442695
  %v2771 = vpow.pop %v2770
  %v2772 = vmul.f32 %v2718, 1.442695
  %v2773 = vpow.pop %v2772
  %v2774 = vmul.f32 %v2719, 1.442695
  %v2775 = vpow.pop %v2774
  %v2776 = vmul.f32 %v2720, 1.442695
  %v2777 = vpow.pop %v2776
  %v2778 = vmul.f32 %v2721, 1.442695
  %v2779 = vpow.pop %v2778
  %v2780 = vmul.f32 %v2722, 1.442695
  %v2781 = vpow.pop %v2780
  %v2782 = vmul.f32 %v2723, 1.442695
  %v2783 = vpow.pop %v2782
  %v2784 = vmul.f32 %v2724, 1.442695
  %v2785 = vpow.pop %v2784
  %v2786 = vmul.f32 %v2725, 1.442695
  %v2787 = vpow.pop %v2786
  %v2788 = vmul.f32 %v2726, 1.442695
  %v2789 = vpow.pop %v2788
  %v2790 = vmul.f32 %v2727, 1.442695
  %v2791 = vpow.pop %v2790
  %v2792 = vmul.f32 %v2728, 1.442695
  %v2793 = vpow.pop %v2792
  %v2794 = vmul.f32 %v2729, 1.442695
  %v2795 = vpow.pop %v2794
  %v2796 = vmul.f32 %v2730, 1.442695
  %v2797 = vpow.pop %v2796
  %v2798 = vmul.f32 %v2731, 1.442695
  %v2799 = vpow.pop %v2798
  %v2800 = vmul.f32 %v2732, 1.442695
  %v2801 = vpow.pop %v2800
  %v2802 = vmul.f32 %v2733, 1.442695
  %v2803 = vpow.pop %v2802
  %v2804 = vmul.f32 %v2734, 1.442695
  %v2805 = vpow.pop %v2804
  %v2806 = vmul.f32 %v2735, 1.442695
  %v2807 = vpow.pop %v2806
  %v2808 = vmul.f32 %v2736, 1.442695
  %v2809 = vpow.pop %v2808
  %v2810 = vmul.f32 %v2737, 1.442695
  %v2811 = vpow.pop %v2810
  %v2812 = vmul.f32 %v2738, 1.442695
  %v2813 = vpow.pop %v2812
  %v2814 = vmul.f32 %v2739, 1.442695
  %v2815 = vpow.pop %v2814
  %v2816 = vadd.f32 %v2741, 1.0
  %v2817 = vadd.f32 %v2743, 1.0
  %v2818 = vadd.f32 %v2745, 1.0
  %v2819 = vadd.f32 %v2747, 1.0
  %v2820 = vadd.f32 %v2749, 1.0
  %v2821 = vadd.f32 %v2751, 1.0
  %v2822 = vadd.f32 %v2753, 1.0
  %v2823 = vadd.f32 %v2755, 1.0
  %v2824 = vadd.f32 %v2757, 1.0
  %v2825 = vadd.f32 %v2759, 1.0
  %v2826 = vadd.f32 %v2761, 1.0
  %v2827 = vadd.f32 %v2763, 1.0
  %v2828 = vadd.f32 %v2765, 1.0
  %v2829 = vadd.f32 %v2767, 1.0
  %v2830 = vadd.f32 %v2769, 1.0
  %v2831 = vadd.f32 %v2771, 1.0
  %v2832 = vadd.f32 %v2773, 1.0
  %v2833 = vadd.f32 %v2775, 1.0
  %v2834 = vadd.f32 %v2777, 1.0
  %v2835 = vadd.f32 %v2779, 1.0
  %v2836 = vadd.f32 %v2781, 1.0
  %v2837 = vadd.f32 %v2783, 1.0
  %v2838 = vadd.f32 %v2785, 1.0
  %v2839 = vadd.f32 %v2787, 1.0
  %v2840 = vadd.f32 %v2789, 1.0
  %v2841 = vadd.f32 %v2791, 1.0
  %v2842 = vadd.f32 %v2793, 1.0
  %v2843 = vadd.f32 %v2795, 1.0
  %v2844 = vadd.f32 %v2797, 1.0
  %v2845 = vadd.f32 %v2799, 1.0
  %v2846 = vadd.f32 %v2801, 1.0
  %v2847 = vadd.f32 %v2803, 1.0
  %v2848 = vadd.f32 %v2805, 1.0
  %v2849 = vadd.f32 %v2807, 1.0
  %v2850 = vadd.f32 %v2809, 1.0
  %v2851 = vadd.f32 %v2811, 1.0
  %v2852 = vadd.f32 %v2813, 1.0
  %v2853 = vadd.f32 %v2815, 1.0
  %v2854 = vrcp.pop %v2816
  %v2855 = vmul.f32 1.0, %v2854
  %v2856 = vrcp.pop %v2817
  %v2857 = vmul.f32 1.0, %v2856
  %v2858 = vrcp.pop %v2818
  %v2859 = vmul.f32 1.0, %v2858
  %v2860 = vrcp.pop %v2819
  %v2861 = vmul.f32 1.0, %v2860
  %v2862 = vrcp.pop %v2820
  %v2863 = vmul.f32 1.0, %v2862
  %v2864 = vrcp.pop %v2821
  %v2865 = vmul.f32 1.0, %v2864
  %v2866 = vrcp.pop %v2822
  %v2867 = vmul.f32 1.0, %v2866
  %v2868 = vrcp.pop %v2823
  %v2869 = vmul.f32 1.0, %v2868
  %v2870 = vrcp.pop %v2824
  %v2871 = vmul.f32 1.0, %v2870
  %v2872 = vrcp.pop %v2825
  %v2873 = vmul.f32 1.0, %v2872
  %v2874 = vrcp.pop %v2826
  %v2875 = vmul.f32 1.0, %v2874
  %v2876 = vrcp.pop %v2827
  %v2877 = vmul.f32 1.0, %v2876
  %v2878 = vrcp.pop %v2828
  %v2879 = vmul.f32 1.0, %v2878
  %v2880 = vrcp.pop %v2829
  %v2881 = vmul.f32 1.0, %v2880
  %v2882 = vrcp.pop %v2830
  %v2883 = vmul.f32 1.0, %v2882
  %v2884 = vrcp.pop %v2831
  %v2885 = vmul.f32 1.0, %v2884
  %v2886 = vrcp.pop %v2832
  %v2887 = vmul.f32 1.0, %v2886
  %v2888 = vrcp.pop %v2833
  %v2889 = vmul.f32 1.0, %v2888
  %v2890 = vrcp.pop %v2834
  %v2891 = vmul.f32 1.0, %v2890
  %v2892 = vrcp.pop %v2835
  %v2893 = vmul.f32 1.0, %v2892
  %v2894 = vrcp.pop %v2836
  %v2895 = vmul.f32 1.0, %v2894
  %v2896 = vrcp.pop %v2837
  %v2897 = vmul.f32 1.0, %v2896
  %v2898 = vrcp.pop %v2838
  %v2899 = vmul.f32 1.0, %v2898
  %v2900 = vrcp.pop %v2839
  %v2901 = vmul.f32 1.0, %v2900
  %v2902 = vrcp.pop %v2840
  %v2903 = vmul.f32 1.0, %v2902
  %v2904 = vrcp.pop %v2841
  %v2905 = vmul.f32 1.0, %v2904
  %v2906 = vrcp.pop %v2842
  %v2907 = vmul.f32 1.0, %v2906
  %v2908 = vrcp.pop %v2843
  %v2909 = vmul.f32 1.0, %v2908
  %v2910 = vrcp.pop %v2844
  %v2911 = vmul.f32 1.0, %v2910
  %v2912 = vrcp.pop %v2845
  %v2913 = vmul.f32 1.0, %v2912
  %v2914 = vrcp.pop %v2846
  %v2915 = vmul.f32 1.0, %v2914
  %v2916 = vrcp.pop %v2847
  %v2917 = vmul.f32 1.0, %v2916
  %v2918 = vrcp.pop %v2848
  %v2919 = vmul.f32 1.0, %v2918
  %v2920 = vrcp.pop %v2849
  %v2921 = vmul.f32 1.0, %v2920
  %v2922 = vrcp.pop %v2850
  %v2923 = vmul.f32 1.0, %v2922
  %v2924 = vrcp.pop %v2851
  %v2925 = vmul.f32 1.0, %v2924
  %v2926 = vrcp.pop %v2852
  %v2927 = vmul.f32 1.0, %v2926
  %v2928 = vrcp.pop %v2853
  %v2929 = vmul.f32 1.0, %v2928
  %v2930 = vlaneseq
  %v2931 = vand.u32 %v2930, 127
  %vm2932 = vcmp.lt.s32.totalorder %v2931, 32
  %v2933 = vsel %vm2932, %v2855, %v1493
  %v2934 = vsel %vm2932, %v2857, %v1496
  %v2935 = vsel %vm2932, %v2859, %v1501
  %v2936 = vsel %vm2932, %v2861, %v1504
  %v2937 = vsel %vm2932, %v2863, %v1509
  %v2938 = vsel %vm2932, %v2865, %v1512
  %v2939 = vsel %vm2932, %v2867, %v1517
  %v2940 = vsel %vm2932, %v2869, %v1520
  %v2941 = vsel %vm2932, %v2871, %v1525
  %v2942 = vsel %vm2932, %v2873, %v1528
  %v2943 = vsel %vm2932, %v2875, %v1533
  %v2944 = vsel %vm2932, %v2877, %v1536
  %v2945 = vsel %vm2932, %v2879, %v1541
  %v2946 = vsel %vm2932, %v2881, %v1544
  %v2947 = vsel %vm2932, %v2883, %v1549
  %v2948 = vsel %vm2932, %v2885, %v1552
  %v2949 = vsel %vm2932, %v2887, %v1557
  %v2950 = vsel %vm2932, %v2889, %v1560
  %v2951 = vsel %vm2932, %v2891, %v1565
  %v2952 = vsel %vm2932, %v2893, %v1568
  %v2953 = vsel %vm2932, %v2895, %v1573
  %v2954 = vsel %vm2932, %v2897, %v1576
  %v2955 = vsel %vm2932, %v2899, %v1581
  %v2956 = vsel %vm2932, %v2901, %v1584
  %v2957 = vsel %vm2932, %v2903, %v1589
  %v2958 = vsel %vm2932, %v2905, %v1592
  %v2959 = vsel %vm2932, %v2907, %v1597
  %v2960 = vsel %vm2932, %v2909, %v1600
  %v2961 = vsel %vm2932, %v2911, %v1605
  %v2962 = vsel %vm2932, %v2913, %v1608
  %v2963 = vsel %vm2932, %v2915, %v1613
  %v2964 = vsel %vm2932, %v2917, %v1616
  %v2965 = vsel %vm2932, %v2919, %v1621
  %v2966 = vsel %vm2932, %v2921, %v1624
  %v2967 = vsel %vm2932, %v2923, %v1629
  %v2968 = vsel %vm2932, %v2925, %v1632
  %v2969 = vsel %vm2932, %v2927, %v1637
  %v2970 = vsel %vm2932, %v2929, %v1640
  %2971 = vst [vmem:[%s15] sm:$0xff] %v2933
  %2972 = vst [vmem:[%s15 + $0x8] sm:$0xff] %v2934
  %2973 = vst [vmem:[%s15 + $0x10] sm:$0xff] %v2935
  %2974 = vst [vmem:[%s15 + $0x18] sm:$0xff] %v2936
  %2975 = vst [vmem:[%s15 + $0x20] sm:$0xff] %v2937
  %2976 = vst [vmem:[%s15 + $0x28] sm:$0xff] %v2938
  %2977 = vst [vmem:[%s15 + $0x30] sm:$0xff] %v2939
  %2978 = vst [vmem:[%s15 + $0x38] sm:$0xff] %v2940
  %2979 = vst [vmem:[%s15 + $0x40] sm:$0xff] %v2941
  %2980 = vst [vmem:[%s15 + $0x48] sm:$0xff] %v2942
  %2981 = vst [vmem:[%s15 + $0x50] sm:$0xff] %v2943
  %2982 = vst [vmem:[%s15 + $0x58] sm:$0xff] %v2944
  %2983 = vst [vmem:[%s15 + $0x60] sm:$0xff] %v2945
  %2984 = vst [vmem:[%s15 + $0x68] sm:$0xff] %v2946
  %2985 = vst [vmem:[%s15 + $0x70] sm:$0xff] %v2947
  %2986 = vst [vmem:[%s15 + $0x78] sm:$0xff] %v2948
  %2987 = vst [vmem:[%s15 + $0x80] sm:$0xff] %v2949
  %2988 = vst [vmem:[%s15 + $0x88] sm:$0xff] %v2950
  %2989 = vst [vmem:[%s15 + $0x90] sm:$0xff] %v2951
  %2990 = vst [vmem:[%s15 + $0x98] sm:$0xff] %v2952
  %2991 = vst [vmem:[%s15 + $0xa0] sm:$0xff] %v2953
  %2992 = vst [vmem:[%s15 + $0xa8] sm:$0xff] %v2954
  %2993 = vst [vmem:[%s15 + $0xb0] sm:$0xff] %v2955
  %2994 = vst [vmem:[%s15 + $0xb8] sm:$0xff] %v2956
  %2995 = vst [vmem:[%s15 + $0xc0] sm:$0xff] %v2957
  %2996 = vst [vmem:[%s15 + $0xc8] sm:$0xff] %v2958
  %2997 = vst [vmem:[%s15 + $0xd0] sm:$0xff] %v2959
  %2998 = vst [vmem:[%s15 + $0xd8] sm:$0xff] %v2960
  %2999 = vst [vmem:[%s15 + $0xe0] sm:$0xff] %v2961
  %3000 = vst [vmem:[%s15 + $0xe8] sm:$0xff] %v2962
  %3001 = vst [vmem:[%s15 + $0xf0] sm:$0xff] %v2963
  %3002 = vst [vmem:[%s15 + $0xf8] sm:$0xff] %v2964
  %3003 = vst [vmem:[%s15 + $0x100] sm:$0xff] %v2965
  %3004 = vst [vmem:[%s15 + $0x108] sm:$0xff] %v2966
  %3005 = vst [vmem:[%s15 + $0x110] sm:$0xff] %v2967
  %3006 = vst [vmem:[%s15 + $0x118] sm:$0xff] %v2968
  %3007 = vst [vmem:[%s15 + $0x120] sm:$0xff] %v2969
  %3008 = vst [vmem:[%s15 + $0x128] sm:$0xff] %v2970
  // Predicated region
  $region62: #{multitask_autoencoder.1} parent=0 // pred_check
    _
  $region63: #{multitask_autoencoder.1} parent=0 // pred_check_branch
    %3010 = sbr.rel (0) target = $region65
  $region64: #{multitask_autoencoder.1} parent=0 // pred_region
    _
  $region65: #{multitask_autoencoder.1} parent=0 // pred_fallthru
    _
  // Predicated region
  $region66: #{multitask_autoencoder.1} parent=0 // pred_check
    _
  $region67: #{multitask_autoencoder.1} parent=0 // pred_check_branch
    %3012 = sbr.rel (0) target = $region69
  $region68: #{multitask_autoencoder.1} parent=0 // pred_region
    _
  $region69: #{multitask_autoencoder.1} parent=0 // pred_fallthru
    _

</llo_original>
